<compile_context>
chip_gen: v7x
topology: tpu7x:2x2x1
jax: 0.10.0
libtpu: 0.0.40
codegen_flags: <defaults>
</compile_context>

<pallas_src>
import functools

import jax
import jax.numpy as jnp
import numpy as np
from jax import lax
from jax.experimental import pallas as pl
from jax.experimental.pallas import tpu as pltpu


def _pconv_norm_act_kernel(x_ref, msk_ref, B_ref, Bm_ref, Sel_ref,
                           out_ref, mout_ref, *, D, H, W, C, Co, K):
    # x_ref   : (D*H, K*K*Wp*C)   im2col'd (image*mask), zero-padded, per sample
    # msk_ref : (1, Dp, Hp, Wp*C) zero-padded mask, (W,C) folded to lanes
    # B_ref   : (K*K*Wp*C, W*Co)  Toeplitz-packed conv weights ((dz,dy) major)
    # Bm_ref  : (Wp*C, W*Co)      ones pattern for the mask-count conv
    # Sel_ref : (W*Co, W*Co)      Sel[l,l'] = (l % Co == l' % Co)  (channel stats)
    # out_ref / mout_ref : (D*H, W*Co)  lane-dense output slabs for this sample
    WpC = (W + K - 1) * C
    L = W * Co
    DH = D * H

    # ---- image conv: one structured MXU matmul over the im2col'd input --------
    raw = jnp.dot(x_ref[...], B_ref[...], preferred_element_type=jnp.float32)

    # ---- mask-count conv: the ones-kernel is identical for all (dz,dy) taps, so
    #      pre-sum the 9 shifted planes on the VPU, then do ONE matmul ----------
    mp = msk_ref[0]                                  # (Dp, Hp, WpC)
    msum = mp[0:D, 0:H, :]
    for dz in range(K):
        for dy in range(K):
            if dz == 0 and dy == 0:
                continue
            msum = msum + mp[dz:dz + D, dy:dy + H, :]
    um = jnp.dot(msum.reshape(DH, WpC), Bm_ref[...],
                 preferred_element_type=jnp.float32)          # (DH, L)

    # ---- PartialConv renormalization (bias=False branch) -----------------------
    slide_winsize = float(C * K * K * K)
    um_clamped = jnp.clip(um, 0.0, 1.0)
    denom = um + 1e-8
    inv = pl.reciprocal(denom, approx=True)          # EUP slot
    inv = inv * (2.0 - denom * inv)                  # 1 Newton step (VPU) -> ~f32 exact
    y = raw * (slide_winsize * inv * um_clamped)

    # ---- InstanceNorm3d (affine=False, eps=1e-5), single-pass stats ------------
    # Channel of lane l is l % Co; the Sel matmul folds the W lane-groups per
    # channel.  Rows are pre-reduced to an (8, L) tile so the Sel matmuls are tiny.
    inv_n = 1.0 / float(D * H * W)
    Sel = Sel_ref[...]
    y2 = y * y
    if DH % 8 == 0:
        s1 = jnp.sum(y.reshape(DH // 8, 8, L), axis=0)        # (8, L)
        s2 = jnp.sum(y2.reshape(DH // 8, 8, L), axis=0)
    else:
        s1, s2 = y, y2
    mean = jnp.sum(jnp.dot(s1, Sel, preferred_element_type=jnp.float32),
                   axis=0, keepdims=True) * inv_n             # (1, L)  E[y]
    ey2 = jnp.sum(jnp.dot(s2, Sel, preferred_element_type=jnp.float32),
                  axis=0, keepdims=True) * inv_n              # (1, L)  E[y^2]
    var = ey2 - mean * mean
    z = (y - mean) * lax.rsqrt(var + 1e-5)

    # ---- Mish: z * tanh(softplus(z)) = z * (t^2 + 2t) / (t^2 + 2t + 2), t = e^z.
    #      exp clamped at 20: for z > 20 the ratio is exactly 1.0 in f32. ---------
    t = jnp.exp(jnp.minimum(z, 20.0))
    q = t * t + 2.0 * t
    out_ref[...] = (z * (q / (q + 2.0))).astype(out_ref.dtype)
    mout_ref[...] = um_clamped.astype(mout_ref.dtype)


def _pack_conv_weights(weight, W):
    """Toeplitz-pack the conv weights so the whole 3x3x3 conv ((dz,dy) taps im2col'd
    in the wrapper, W/dx taps folded here) is a single
    (D*H, K*K*Wp*C) @ (K*K*Wp*C, W*Co) matmul.  Also builds the (Wp*C, W*Co) ones
    pattern for the partial-conv mask-count conv (Co-replicated)."""
    wnp = np.asarray(weight, np.float32)
    Co, C, Kd, Kh, Kw = wnp.shape
    Wp = W + Kw - 1
    WpC = Wp * C
    B = np.zeros((Kd * Kh * WpC, W * Co), np.float32)
    Bm = np.zeros((WpC, W * Co), np.float32)
    for dx in range(Kw):
        for w in range(W):
            wx = w + dx
            Bm[wx * C:(wx + 1) * C, w * Co:(w + 1) * Co] = 1.0
            for dz in range(Kd):
                for dy in range(Kh):
                    base = (dz * Kh + dy) * WpC
                    B[base + wx * C: base + (wx + 1) * C, w * Co:(w + 1) * Co] = \
                        wnp[:, :, dz, dy, dx].T
    return jnp.asarray(B), jnp.asarray(Bm)


def _channel_selector(Co, W):
    l = np.arange(W * Co)
    return jnp.asarray((l[:, None] % Co == l[None, :] % Co).astype(np.float32))


def pconv_norm_activation(image_ndhwc, mask_ndhwc, weight):
    """image/mask: (N, D, H, W, C) f32 channels-last; weight: (Co, C, 3, 3, 3).
    Returns (image_out, mask_out), both (N, D, H, W, Co) f32."""
    N, D, H, W, C = image_ndhwc.shape
    Co, Ci, K, K2, K3 = weight.shape
    assert Ci == C and K == K2 == K3
    p = K // 2
    Dp, Hp, Wp = D + 2 * p, H + 2 * p, W + 2 * p
    WpC = Wp * C
    DH = D * H
    L = W * Co
    KK = K * K

    # Whole-sample-in-VMEM design: check the footprint (double-buffered inputs,
    # resident packed weights, both output slabs) against a conservative budget.
    # TODO(synk): halo-tiled D/H grid + two-pass instance norm for larger volumes
    # (size tiles against v7x's 64 MiB physical VMEM, not v5e/v6e's 128 MiB), which
    # would also give each v7x TensorCore more than one grid step per sample.
    fp_bytes = 4 * (2 * (DH * KK * WpC + Dp * Hp * WpC + 2 * DH * L)
                    + 2 * (KK * WpC * L + WpC * L + L * L))
    assert fp_bytes < 12 * 1024 * 1024, (
        f"per-sample working set {fp_bytes / 2**20:.1f} MiB too large for the "
        "single-block-per-sample kernel; needs the halo-tiled path")

    pad = [(0, 0), (p, p), (p, p), (p, p), (0, 0)]
    xm_p = jnp.pad(image_ndhwc * mask_ndhwc, pad).reshape(N, Dp, Hp, WpC)
    msk_p = jnp.pad(mask_ndhwc, pad).reshape(N, Dp, Hp, WpC)

    # (dz, dy) im2col of the masked image (layout plumbing, done once in XLA);
    # the dx taps stay folded inside the Toeplitz-packed weight.
    cols = [xm_p[:, dz:dz + D, dy:dy + H, :] for dz in range(K) for dy in range(K)]
    X = jnp.concatenate(cols, axis=-1).reshape(N * DH, KK * WpC)

    B, Bm = _pack_conv_weights(weight, W)
    Sel = _channel_selector(Co, W)

    kernel = functools.partial(_pconv_norm_act_kernel,
                               D=D, H=H, W=W, C=C, Co=Co, K=K)

    # NOTE: B/Bm/Sel have constant index maps (no re-DMA across grid steps); they
    # could be single-buffered (pipeline_mode=pl.Buffered(1)) to save ~0.4 MiB of
    # VMEM, which only matters once C/Co or the spatial tiles grow.
    out_img, out_msk = pl.pallas_call(
        kernel,
        out_shape=(jax.ShapeDtypeStruct((N * DH, L), jnp.float32),
                   jax.ShapeDtypeStruct((N * DH, L), jnp.float32)),
        grid_spec=pltpu.PrefetchScalarGridSpec(
            num_scalar_prefetch=0,
            grid=(N,),
            in_specs=[
                pl.BlockSpec((DH, KK * WpC), lambda n: (n, 0)),
                pl.BlockSpec((1, Dp, Hp, WpC), lambda n: (n, 0, 0, 0)),
                pl.BlockSpec((KK * WpC, L), lambda n: (0, 0)),
                pl.BlockSpec((WpC, L), lambda n: (0, 0)),
                pl.BlockSpec((L, L), lambda n: (0, 0)),
            ],
            out_specs=(
                pl.BlockSpec((DH, L), lambda n: (n, 0)),
                pl.BlockSpec((DH, L), lambda n: (n, 0)),
            ),
        ),
        compiler_params=pltpu.CompilerParams(
            dimension_semantics=("parallel",),
            vmem_limit_bytes=16 * 1024 * 1024,
        ),
    )(X, msk_p, B, Bm, Sel)

    return (out_img.reshape(N, D, H, W, Co),
            out_msk.reshape(N, D, H, W, Co))


def reference_ncdhw(image, mask, weight):
    """Pure JAX/XLA mirror of PConvNormActivation.forward (PyTorch NCDHW layout)."""
    N, C, D, H, W = image.shape
    Co, _, K, _, _ = weight.shape
    dn = ("NCDHW", "OIDHW", "NCDHW")
    padding = [(K // 2, K // 2)] * 3
    raw = lax.conv_general_dilated(image * mask, weight, (1, 1, 1), padding,
                                   dimension_numbers=dn)
    um = lax.conv_general_dilated(mask, jnp.ones((Co, C, K, K, K), jnp.float32),
                                  (1, 1, 1), padding, dimension_numbers=dn)
    slide = float(C * K * K * K)
    um_clamped = jnp.clip(um, 0.0, 1.0)
    out = raw * (slide / (um + 1e-8)) * um_clamped
    mean = out.mean(axis=(2, 3, 4), keepdims=True)
    var = ((out - mean) ** 2).mean(axis=(2, 3, 4), keepdims=True)
    out = (out - mean) / jnp.sqrt(var + 1e-5)
    out = out * jnp.tanh(jax.nn.softplus(out))
    return out, um_clamped


if __name__ == "__main__":
    # in_channels=4, out_channels=8, kernel_size=(3,3,3), padding='same',
    # batch=2, spatial=16 (W*Co = 128 keeps the output slab lane-dense).
    N, C, Co = 2, 4, 8
    D = H = W = 16
    K = 3

    key = jax.random.PRNGKey(0)
    k_img, k_msk, k_w = jax.random.split(key, 3)

    image = jax.random.normal(k_img, (N, D, H, W, C), dtype=jnp.float32)
    mask = (jax.random.uniform(k_msk, (N, D, H, W, C)) > 0.3).astype(jnp.float32)
    weight = jax.random.normal(k_w, (Co, C, K, K, K), dtype=jnp.float32) * 0.2

    out_img, out_msk = pconv_norm_activation(image, mask, weight)
    out_img, out_msk = jax.block_until_ready((out_img, out_msk))

    # Cross-check against an XLA reference in PyTorch's NCDHW layout.
    ref_img, ref_msk = reference_ncdhw(jnp.transpose(image, (0, 4, 1, 2, 3)),
                                       jnp.transpose(mask, (0, 4, 1, 2, 3)),
                                       weight)
    ref_img = jnp.transpose(ref_img, (0, 2, 3, 4, 1))
    ref_msk = jnp.transpose(ref_msk, (0, 2, 3, 4, 1))
    np.testing.assert_allclose(np.asarray(out_img), np.asarray(ref_img),
                               rtol=2e-4, atol=2e-4)
    np.testing.assert_allclose(np.asarray(out_msk), np.asarray(ref_msk),
                               rtol=1e-5, atol=1e-5)

    print("KERNEL_OK")
</pallas_src>

<mosaic_0001>
module attributes {stable_mosaic.version = 11 : i64} {
  func.func @_pconv_norm_act_kernel(%arg0: i32, %arg1: memref<256x648xf32, #tpu.memory_space<vmem>>, %arg2: memref<1x18x18x72xf32, #tpu.memory_space<vmem>>, %arg3: memref<648x128xf32, #tpu.memory_space<vmem>>, %arg4: memref<72x128xf32, #tpu.memory_space<vmem>>, %arg5: memref<128x128xf32, #tpu.memory_space<vmem>>, %arg6: memref<256x128xf32, #tpu.memory_space<vmem>>, %arg7: memref<256x128xf32, #tpu.memory_space<vmem>>) attributes {dimension_semantics = [#tpu.dimension_semantics<parallel>], iteration_bounds = array<i64: 2>, scalar_prefetch = 0 : i64, scratch_operands = 0 : i64, tpu.core_type = #tpu.core_type<tc>, window_params = [{transform_indices = @transform_0, window_bounds = array<i64: 256, 648>}, {transform_indices = @transform_1, window_bounds = array<i64: 1, 18, 18, 72>}, {pipeline_mode = #tpu.pipeline_mode<synchronous>, transform_indices = @transform_2, window_bounds = array<i64: 648, 128>}, {pipeline_mode = #tpu.pipeline_mode<synchronous>, transform_indices = @transform_3, window_bounds = array<i64: 72, 128>}, {pipeline_mode = #tpu.pipeline_mode<synchronous>, transform_indices = @transform_4, window_bounds = array<i64: 128, 128>}, {transform_indices = @transform_5, window_bounds = array<i64: 256, 128>}, {transform_indices = @transform_6, window_bounds = array<i64: 256, 128>}]} {
    %c0 = arith.constant 0 : index
    %c0_0 = arith.constant 0 : index
    %0 = vector.load %arg1[%c0, %c0_0] : memref<256x648xf32, #tpu.memory_space<vmem>>, vector<256x648xf32>
    %c0_1 = arith.constant 0 : index
    %c0_2 = arith.constant 0 : index
    %1 = vector.load %arg3[%c0_1, %c0_2] : memref<648x128xf32, #tpu.memory_space<vmem>>, vector<648x128xf32>
    %cst = arith.constant dense<0.000000e+00> : vector<256x128xf32>
    %2 = tpu.matmul %0, %1, %cst {dimension_numbers = #tpu.dot_dimension_numbers<[1], [0], [0], [1], [0, 0, 1, 1], [], []>} : vector<256x648xf32>, vector<648x128xf32>, vector<256x128xf32> -> vector<256x128xf32>
    %c0_3 = arith.constant 0 : index
    %c0_4 = arith.constant 0 : index
    %c0_5 = arith.constant 0 : index
    %c0_6 = arith.constant 0 : index
    %3 = vector.load %arg2[%c0_3, %c0_4, %c0_5, %c0_6] : memref<1x18x18x72xf32, #tpu.memory_space<vmem>>, vector<1x18x18x72xf32>
    %4 = vector.shape_cast %3 : vector<1x18x18x72xf32> to vector<18x18x72xf32>
    %5 = vector.extract_strided_slice %4 {offsets = [0, 0, 0], sizes = [16, 16, 72], strides = [1, 1, 1]} : vector<18x18x72xf32> to vector<16x16x72xf32>
    %6 = vector.extract_strided_slice %4 {offsets = [0, 1, 0], sizes = [16, 16, 72], strides = [1, 1, 1]} : vector<18x18x72xf32> to vector<16x16x72xf32>
    %7 = arith.addf %5, %6 : vector<16x16x72xf32>
    %8 = vector.extract_strided_slice %4 {offsets = [0, 2, 0], sizes = [16, 16, 72], strides = [1, 1, 1]} : vector<18x18x72xf32> to vector<16x16x72xf32>
    %9 = arith.addf %7, %8 : vector<16x16x72xf32>
    %10 = vector.extract_strided_slice %4 {offsets = [1, 0, 0], sizes = [16, 16, 72], strides = [1, 1, 1]} : vector<18x18x72xf32> to vector<16x16x72xf32>
    %11 = arith.addf %9, %10 : vector<16x16x72xf32>
    %12 = vector.extract_strided_slice %4 {offsets = [1, 1, 0], sizes = [16, 16, 72], strides = [1, 1, 1]} : vector<18x18x72xf32> to vector<16x16x72xf32>
    %13 = arith.addf %11, %12 : vector<16x16x72xf32>
    %14 = vector.extract_strided_slice %4 {offsets = [1, 2, 0], sizes = [16, 16, 72], strides = [1, 1, 1]} : vector<18x18x72xf32> to vector<16x16x72xf32>
    %15 = arith.addf %13, %14 : vector<16x16x72xf32>
    %16 = vector.extract_strided_slice %4 {offsets = [2, 0, 0], sizes = [16, 16, 72], strides = [1, 1, 1]} : vector<18x18x72xf32> to vector<16x16x72xf32>
    %17 = arith.addf %15, %16 : vector<16x16x72xf32>
    %18 = vector.extract_strided_slice %4 {offsets = [2, 1, 0], sizes = [16, 16, 72], strides = [1, 1, 1]} : vector<18x18x72xf32> to vector<16x16x72xf32>
    %19 = arith.addf %17, %18 : vector<16x16x72xf32>
    %20 = vector.extract_strided_slice %4 {offsets = [2, 2, 0], sizes = [16, 16, 72], strides = [1, 1, 1]} : vector<18x18x72xf32> to vector<16x16x72xf32>
    %21 = arith.addf %19, %20 : vector<16x16x72xf32>
    %22 = vector.shape_cast %21 : vector<16x16x72xf32> to vector<256x72xf32>
    %c0_7 = arith.constant 0 : index
    %c0_8 = arith.constant 0 : index
    %23 = vector.load %arg4[%c0_7, %c0_8] : memref<72x128xf32, #tpu.memory_space<vmem>>, vector<72x128xf32>
    %cst_9 = arith.constant dense<0.000000e+00> : vector<256x128xf32>
    %24 = tpu.matmul %22, %23, %cst_9 {dimension_numbers = #tpu.dot_dimension_numbers<[1], [0], [0], [1], [0, 0, 1, 1], [], []>} : vector<256x72xf32>, vector<72x128xf32>, vector<256x128xf32> -> vector<256x128xf32>
    %cst_10 = arith.constant 0.000000e+00 : f32
    %cst_11 = arith.constant 1.000000e+00 : f32
    %25 = vector.broadcast %cst_10 : f32 to vector<256x128xf32>
    %26 = arith.maximumf %25, %24 : vector<256x128xf32>
    %27 = vector.broadcast %cst_11 : f32 to vector<256x128xf32>
    %28 = arith.minimumf %27, %26 : vector<256x128xf32>
    %cst_12 = arith.constant 9.99999993E-9 : f32
    %29 = vector.broadcast %cst_12 : f32 to vector<256x128xf32>
    %30 = arith.addf %24, %29 : vector<256x128xf32>
    %31 = tpu.reciprocal %30 {approx = true} : vector<256x128xf32> -> vector<256x128xf32>
    %32 = arith.mulf %30, %31 : vector<256x128xf32>
    %cst_13 = arith.constant 2.000000e+00 : f32
    %33 = vector.broadcast %cst_13 : f32 to vector<256x128xf32>
    %34 = arith.subf %33, %32 : vector<256x128xf32>
    %35 = arith.mulf %31, %34 : vector<256x128xf32>
    %cst_14 = arith.constant 1.080000e+02 : f32
    %36 = vector.broadcast %cst_14 : f32 to vector<256x128xf32>
    %37 = arith.mulf %36, %35 : vector<256x128xf32>
    %38 = arith.mulf %37, %28 : vector<256x128xf32>
    %39 = arith.mulf %2, %38 : vector<256x128xf32>
    %c0_15 = arith.constant 0 : index
    %c0_16 = arith.constant 0 : index
    %40 = vector.load %arg5[%c0_15, %c0_16] : memref<128x128xf32, #tpu.memory_space<vmem>>, vector<128x128xf32>
    %41 = arith.mulf %39, %39 : vector<256x128xf32>
    %42 = vector.shape_cast %39 : vector<256x128xf32> to vector<32x8x128xf32>
    %cst_17 = arith.constant dense<0.000000e+00> : vector<8x128xf32>
    %43 = vector.multi_reduction <add>, %42, %cst_17 [0] : vector<32x8x128xf32> to vector<8x128xf32>
    %44 = vector.shape_cast %41 : vector<256x128xf32> to vector<32x8x128xf32>
    %cst_18 = arith.constant dense<0.000000e+00> : vector<8x128xf32>
    %45 = vector.multi_reduction <add>, %44, %cst_18 [0] : vector<32x8x128xf32> to vector<8x128xf32>
    %cst_19 = arith.constant dense<0.000000e+00> : vector<8x128xf32>
    %46 = tpu.matmul %43, %40, %cst_19 {dimension_numbers = #tpu.dot_dimension_numbers<[1], [0], [0], [1], [0, 0, 1, 1], [], []>} : vector<8x128xf32>, vector<128x128xf32>, vector<8x128xf32> -> vector<8x128xf32>
    %cst_20 = arith.constant dense<0.000000e+00> : vector<128xf32>
    %47 = vector.multi_reduction <add>, %46, %cst_20 [0] : vector<8x128xf32> to vector<128xf32>
    %48 = vector.shape_cast %47 : vector<128xf32> to vector<1x128xf32>
    %cst_21 = arith.constant 2.44140625E-4 : f32
    %49 = vector.broadcast %cst_21 : f32 to vector<1x128xf32>
    %50 = arith.mulf %48, %49 : vector<1x128xf32>
    %cst_22 = arith.constant dense<0.000000e+00> : vector<8x128xf32>
    %51 = tpu.matmul %45, %40, %cst_22 {dimension_numbers = #tpu.dot_dimension_numbers<[1], [0], [0], [1], [0, 0, 1, 1], [], []>} : vector<8x128xf32>, vector<128x128xf32>, vector<8x128xf32> -> vector<8x128xf32>
    %cst_23 = arith.constant dense<0.000000e+00> : vector<128xf32>
    %52 = vector.multi_reduction <add>, %51, %cst_23 [0] : vector<8x128xf32> to vector<128xf32>
    %53 = vector.shape_cast %52 : vector<128xf32> to vector<1x128xf32>
    %cst_24 = arith.constant 2.44140625E-4 : f32
    %54 = vector.broadcast %cst_24 : f32 to vector<1x128xf32>
    %55 = arith.mulf %53, %54 : vector<1x128xf32>
    %56 = arith.mulf %50, %50 : vector<1x128xf32>
    %57 = arith.subf %55, %56 : vector<1x128xf32>
    %58 = vector.broadcast %50 : vector<1x128xf32> to vector<256x128xf32>
    %59 = arith.subf %39, %58 : vector<256x128xf32>
    %cst_25 = arith.constant 9.99999974E-6 : f32
    %60 = vector.broadcast %cst_25 : f32 to vector<1x128xf32>
    %61 = arith.addf %57, %60 : vector<1x128xf32>
    %62 = math.rsqrt %61 : vector<1x128xf32>
    %63 = vector.broadcast %62 : vector<1x128xf32> to vector<256x128xf32>
    %64 = arith.mulf %59, %63 : vector<256x128xf32>
    %cst_26 = arith.constant 2.000000e+01 : f32
    %65 = vector.broadcast %cst_26 : f32 to vector<256x128xf32>
    %66 = arith.minimumf %64, %65 : vector<256x128xf32>
    %67 = math.exp %66 : vector<256x128xf32>
    %68 = arith.mulf %67, %67 : vector<256x128xf32>
    %cst_27 = arith.constant 2.000000e+00 : f32
    %69 = vector.broadcast %cst_27 : f32 to vector<256x128xf32>
    %70 = arith.mulf %69, %67 : vector<256x128xf32>
    %71 = arith.addf %68, %70 : vector<256x128xf32>
    %cst_28 = arith.constant 2.000000e+00 : f32
    %72 = vector.broadcast %cst_28 : f32 to vector<256x128xf32>
    %73 = arith.addf %71, %72 : vector<256x128xf32>
    %74 = arith.divf %71, %73 : vector<256x128xf32>
    %75 = arith.mulf %64, %74 : vector<256x128xf32>
    %c0_29 = arith.constant 0 : index
    %c0_30 = arith.constant 0 : index
    %76 = vector.load %arg6[%c0_29, %c0_30] : memref<256x128xf32, #tpu.memory_space<vmem>>, vector<256x128xf32>
    tpu.vector_store %arg6[%c0_29, %c0_30], %75 {strides = array<i32>} : memref<256x128xf32, #tpu.memory_space<vmem>>, vector<256x128xf32>,
    %c0_31 = arith.constant 0 : index
    %c0_32 = arith.constant 0 : index
    %77 = vector.load %arg7[%c0_31, %c0_32] : memref<256x128xf32, #tpu.memory_space<vmem>>, vector<256x128xf32>
    tpu.vector_store %arg7[%c0_31, %c0_32], %28 {strides = array<i32>} : memref<256x128xf32, #tpu.memory_space<vmem>>, vector<256x128xf32>,
    return
  }
  func.func @transform_0(%arg0: i32) -> (i32, i32) {
    %c0_i32 = arith.constant 0 : i32
    %c0_i32_0 = arith.constant 0 : i32
    return %arg0, %c0_i32 : i32, i32
  }
  func.func @transform_1(%arg0: i32) -> (i32, i32, i32, i32) {
    %c0_i32 = arith.constant 0 : i32
    %c0_i32_0 = arith.constant 0 : i32
    %c0_i32_1 = arith.constant 0 : i32
    %c0_i32_2 = arith.constant 0 : i32
    return %arg0, %c0_i32, %c0_i32_0, %c0_i32_1 : i32, i32, i32, i32
  }
  func.func @transform_2(%arg0: i32) -> (i32, i32) {
    %c0_i32 = arith.constant 0 : i32
    %c0_i32_0 = arith.constant 0 : i32
    %c0_i32_1 = arith.constant 0 : i32
    return %c0_i32, %c0_i32_0 : i32, i32
  }
  func.func @transform_3(%arg0: i32) -> (i32, i32) {
    %c0_i32 = arith.constant 0 : i32
    %c0_i32_0 = arith.constant 0 : i32
    %c0_i32_1 = arith.constant 0 : i32
    return %c0_i32, %c0_i32_0 : i32, i32
  }
  func.func @transform_4(%arg0: i32) -> (i32, i32) {
    %c0_i32 = arith.constant 0 : i32
    %c0_i32_0 = arith.constant 0 : i32
    %c0_i32_1 = arith.constant 0 : i32
    return %c0_i32, %c0_i32_0 : i32, i32
  }
  func.func @transform_5(%arg0: i32) -> (i32, i32) {
    %c0_i32 = arith.constant 0 : i32
    %c0_i32_0 = arith.constant 0 : i32
    return %arg0, %c0_i32 : i32, i32
  }
  func.func @transform_6(%arg0: i32) -> (i32, i32) {
    %c0_i32 = arith.constant 0 : i32
    %c0_i32_0 = arith.constant 0 : i32
    return %arg0, %c0_i32 : i32, i32
  }
}

</mosaic_0001>

<llo_original>
// kernel: tpu_custom_call.1
$region0: #{tpu_custom_call.1}
  #allocation0 [shape = 'u32[]', space=smem, size = 0x4, offset = 0x4, fixed_abs, tag = 'smem constant byte address 0x4 - core index']
  #allocation1 [shape = 'u32[144,128]{1,0:T(1,128)}', space=vmem, size = 0x12000, scoped, tag = 'internal scratch']
  %s0 = inlined_call_operand.vmem [shape: f32[512,648], index: 0, kind: input, shape index: {}]
  %s1 = inlined_call_operand.vmem [shape: f32[2,18,18,72], index: 1, kind: input, shape index: {}]
  %s2 = inlined_call_operand.vmem [shape: f32[648,128], index: 2, kind: input, shape index: {}]
  %s3 = inlined_call_operand.vmem [shape: f32[72,128], index: 3, kind: input, shape index: {}]
  %s4 = inlined_call_operand.vmem [shape: f32[128,128], index: 4, kind: input, shape index: {}]
  %s5 = inlined_call_operand.hbm [shape: f32[512,128], index: 5, kind: output, shape index: {0}]
  %s6 = inlined_call_operand.hbm [shape: f32[512,128], index: 6, kind: output, shape index: {1}]
  %7 = xla_tuple %s5, %s6
  %s8 = sld [smem:[#allocation0]]
  $region61: #{tpu_custom_call.1} parent=0
    _
  %s10 = ssub.s32 1, %s8
  %s11 = scalar_select 0, %s10, %s8
  $region1: #{tpu_custom_call.1} parent=0
    #allocation2 [shape = 'u8[262144]{0}', space=vmem, size = 0x40000, scoped, tag = 'output window, operand 0']
    #allocation3 [shape = 's32[2]{0}', space=sflag, size = 0x8, scoped, tag = 'scoped memory for tpu_custom_call.1']
    #allocation4 [shape = 'u8[262144]{0}', space=vmem, size = 0x40000, scoped, tag = 'output window, operand 1']
    #allocation5 [shape = 's32[2]{0}', space=sflag, size = 0x8, scoped, tag = 'scoped memory for tpu_custom_call.1']
    %12 = vsyncpa [#allocation3], 0
    %s13 = scalar_lea.sflag [#allocation3], 1
    %14 = vsyncpa %s13, 0
    %15 = vsyncpa [#allocation5], 0
    %s16 = scalar_lea.sflag [#allocation5], 1
    %17 = vsyncpa %s16, 0
    loop: start=0, step=1, limit=4
    $region2: #{tpu_custom_call.1} parent=1 // loop_pre_header
      _
    $region3: #{tpu_custom_call.1} parent=1 // loop_header
      %s19 = sphi 0, %s23
      %p20 = scmp.ge.s32.totalorder %s19, 4
      %s29 = sphi 0, %s31
      %s32 = sphi 0, %s29
      %s33 = sphi 0, %s32
      %s49 = sphi 0, %s33
      %s55 = sphi 0, %s57
      %s58 = sphi 0, %s55
      %s59 = sphi 0, %s58
      %s75 = sphi 0, %s59
      %s79 = sphi 0, %s79
      %s81 = sphi 0, %s79
      %s82 = sphi 0, %s81
      %s96 = sphi 0, %s82
      %s100 = sphi 0, %s100
      %s102 = sphi 0, %s100
      %s103 = sphi 0, %s102
      %s117 = sphi 0, %s103
      %s121 = sphi 0, %s121
      %s123 = sphi 0, %s121
      %s124 = sphi 0, %s123
      %s138 = sphi 0, %s124
      %s144 = sphi 0, %s146
      %s147 = sphi 0, %s144
      %s148 = sphi 0, %s147
      %s164 = sphi 0, %s148
      %s170 = sphi 0, %s172
      %s173 = sphi 0, %s170
      %s174 = sphi 0, %s173
      %s190 = sphi 0, %s174
    $region4: #{tpu_custom_call.1} parent=1 // loop_header_branch
      %22 = sbr.rel (%p20) target = $region8
    $region5: #{tpu_custom_call.1} parent=1 // loop_body
      %s24 = ssub.s32 %s19, 1
      %s25 = ssub.s32 %s19, 2
      %s26 = sadd.s32 %s19, 1
      %s27 = ssub.s32 %s19, %s26
      %p28 = scmp.eq.s32.totalorder %s27, 0
      %s30 = sadd.s32 %s29, 1
      %s31 = scalar_select %p28, %s29, %s30
      %p34 = pneg %p28
      %p35 = scmp.eq.s32.totalorder %s19, 1
      %p36 = por %p34, %p35
      %p37 = scmp.ne.s32.totalorder %s29, %s32
      %p38 = scmp.eq.s32.totalorder %s19, 0
      %p39 = por %p37, %p38
      %p40 = scmp.ne.s32.totalorder %s29, %s32
      %p41 = scmp.eq.s32.totalorder %s24, 1
      %p42 = por %p40, %p41
      %p43 = scmp.ne.s32.totalorder %s32, %s33
      %p44 = scmp.eq.s32.totalorder %s24, 0
      %p45 = por %p43, %p44
      %p46 = scmp.ne.s32.totalorder %s32, %s33
      %p47 = scmp.eq.s32.totalorder %s25, 1
      %p48 = por %p46, %p47
      %p50 = scmp.ne.s32.totalorder %s33, %s49
      %p51 = scmp.eq.s32.totalorder %s25, 0
      %p52 = por %p50, %p51
      %s53 = ssub.s32 %s19, %s26
      %p54 = scmp.eq.s32.totalorder %s53, 0
      %s56 = sadd.s32 %s55, 1
      %s57 = scalar_select %p54, %s55, %s56
      %p60 = pneg %p54
      %p61 = scmp.eq.s32.totalorder %s19, 1
      %p62 = por %p60, %p61
      %p63 = scmp.ne.s32.totalorder %s55, %s58
      %p64 = scmp.eq.s32.totalorder %s19, 0
      %p65 = por %p63, %p64
      %p66 = scmp.ne.s32.totalorder %s55, %s58
      %p67 = scmp.eq.s32.totalorder %s24, 1
      %p68 = por %p66, %p67
      %p69 = scmp.ne.s32.totalorder %s58, %s59
      %p70 = scmp.eq.s32.totalorder %s24, 0
      %p71 = por %p69, %p70
      %p72 = scmp.ne.s32.totalorder %s58, %s59
      %p73 = scmp.eq.s32.totalorder %s25, 1
      %p74 = por %p72, %p73
      %p76 = scmp.ne.s32.totalorder %s59, %s75
      %p77 = scmp.eq.s32.totalorder %s25, 0
      %p78 = por %p76, %p77
      %s80 = sadd.s32 %s79, 1
      %p83 = scmp.eq.s32.totalorder %s19, 1
      %p84 = scmp.ne.s32.totalorder %s79, %s81
      %p85 = scmp.eq.s32.totalorder %s19, 0
      %p86 = por %p84, %p85
      %p87 = scmp.ne.s32.totalorder %s79, %s81
      %p88 = scmp.eq.s32.totalorder %s24, 1
      %p89 = por %p87, %p88
      %p90 = scmp.ne.s32.totalorder %s81, %s82
      %p91 = scmp.eq.s32.totalorder %s24, 0
      %p92 = por %p90, %p91
      %p93 = scmp.ne.s32.totalorder %s81, %s82
      %p94 = scmp.eq.s32.totalorder %s25, 1
      %p95 = por %p93, %p94
      %p97 = scmp.ne.s32.totalorder %s82, %s96
      %p98 = scmp.eq.s32.totalorder %s25, 0
      %p99 = por %p97, %p98
      %s101 = sadd.s32 %s100, 1
      %p104 = scmp.eq.s32.totalorder %s19, 1
      %p105 = scmp.ne.s32.totalorder %s100, %s102
      %p106 = scmp.eq.s32.totalorder %s19, 0
      %p107 = por %p105, %p106
      %p108 = scmp.ne.s32.totalorder %s100, %s102
      %p109 = scmp.eq.s32.totalorder %s24, 1
      %p110 = por %p108, %p109
      %p111 = scmp.ne.s32.totalorder %s102, %s103
      %p112 = scmp.eq.s32.totalorder %s24, 0
      %p113 = por %p111, %p112
      %p114 = scmp.ne.s32.totalorder %s102, %s103
      %p115 = scmp.eq.s32.totalorder %s25, 1
      %p116 = por %p114, %p115
      %p118 = scmp.ne.s32.totalorder %s103, %s117
      %p119 = scmp.eq.s32.totalorder %s25, 0
      %p120 = por %p118, %p119
      %s122 = sadd.s32 %s121, 1
      %p125 = scmp.eq.s32.totalorder %s19, 1
      %p126 = scmp.ne.s32.totalorder %s121, %s123
      %p127 = scmp.eq.s32.totalorder %s19, 0
      %p128 = por %p126, %p127
      %p129 = scmp.ne.s32.totalorder %s121, %s123
      %p130 = scmp.eq.s32.totalorder %s24, 1
      %p131 = por %p129, %p130
      %p132 = scmp.ne.s32.totalorder %s123, %s124
      %p133 = scmp.eq.s32.totalorder %s24, 0
      %p134 = por %p132, %p133
      %p135 = scmp.ne.s32.totalorder %s123, %s124
      %p136 = scmp.eq.s32.totalorder %s25, 1
      %p137 = por %p135, %p136
      %p139 = scmp.ne.s32.totalorder %s124, %s138
      %p140 = scmp.eq.s32.totalorder %s25, 0
      %p141 = por %p139, %p140
      %s142 = ssub.s32 %s19, %s26
      %p143 = scmp.eq.s32.totalorder %s142, 0
      %s145 = sadd.s32 %s144, 1
      %s146 = scalar_select %p143, %s144, %s145
      %p149 = pneg %p143
      %p150 = scmp.eq.s32.totalorder %s19, 1
      %p151 = por %p149, %p150
      %p152 = scmp.ne.s32.totalorder %s144, %s147
      %p153 = scmp.eq.s32.totalorder %s19, 0
      %p154 = por %p152, %p153
      %p155 = scmp.ne.s32.totalorder %s144, %s147
      %p156 = scmp.eq.s32.totalorder %s24, 1
      %p157 = por %p155, %p156
      %p158 = scmp.ne.s32.totalorder %s147, %s148
      %p159 = scmp.eq.s32.totalorder %s24, 0
      %p160 = por %p158, %p159
      %p161 = scmp.ne.s32.totalorder %s147, %s148
      %p162 = scmp.eq.s32.totalorder %s25, 1
      %p163 = por %p161, %p162
      %p165 = scmp.ne.s32.totalorder %s148, %s164
      %p166 = scmp.eq.s32.totalorder %s25, 0
      %p167 = por %p165, %p166
      %s168 = ssub.s32 %s19, %s26
      %p169 = scmp.eq.s32.totalorder %s168, 0
      %s171 = sadd.s32 %s170, 1
      %s172 = scalar_select %p169, %s170, %s171
      %p175 = pneg %p169
      %p176 = scmp.eq.s32.totalorder %s19, 1
      %p177 = por %p175, %p176
      %p178 = scmp.ne.s32.totalorder %s170, %s173
      %p179 = scmp.eq.s32.totalorder %s19, 0
      %p180 = por %p178, %p179
      %p181 = scmp.ne.s32.totalorder %s170, %s173
      %p182 = scmp.eq.s32.totalorder %s24, 1
      %p183 = por %p181, %p182
      %p184 = scmp.ne.s32.totalorder %s173, %s174
      %p185 = scmp.eq.s32.totalorder %s24, 0
      %p186 = por %p184, %p185
      %p187 = scmp.ne.s32.totalorder %s173, %s174
      %p188 = scmp.eq.s32.totalorder %s25, 1
      %p189 = por %p187, %p188
      %p191 = scmp.ne.s32.totalorder %s174, %s190
      %p192 = scmp.eq.s32.totalorder %s25, 0
      %p193 = por %p191, %p192
      %p194 = scmp.le.s32.totalorder 1, %s19
      %p195 = scmp.lt.s32.totalorder %s19, 3
      %p196 = pnand %p194, %p195
      %p197 = pneg %p196
      // Predicated region
      $region9: #{tpu_custom_call.1} parent=5 // pred_check
        _
      $region10: #{tpu_custom_call.1} parent=5 // pred_check_branch
        %199 = sbr.rel (%p196) target = $region12
      $region11: #{tpu_custom_call.1} parent=5 // pred_region
        %s200 = ssub.s32 %s19, 1
        // Predicated region
        $region13: #{tpu_custom_call.1} parent=11 // pred_check
          %p201 = pneg %p92
        $region14: #{tpu_custom_call.1} parent=11 // pred_check_branch
          %203 = sbr.rel (%p201) target = $region16
        $region15: #{tpu_custom_call.1} parent=11 // pred_region
          _
        $region16: #{tpu_custom_call.1} parent=11 // pred_fallthru
          _
        // Predicated region
        $region17: #{tpu_custom_call.1} parent=11 // pred_check
          %p204 = pneg %p113
        $region18: #{tpu_custom_call.1} parent=11 // pred_check_branch
          %206 = sbr.rel (%p204) target = $region20
        $region19: #{tpu_custom_call.1} parent=11 // pred_region
          _
        $region20: #{tpu_custom_call.1} parent=11 // pred_fallthru
          _
        // Predicated region
        $region21: #{tpu_custom_call.1} parent=11 // pred_check
          %p207 = pneg %p134
        $region22: #{tpu_custom_call.1} parent=11 // pred_check_branch
          %209 = sbr.rel (%p207) target = $region24
        $region23: #{tpu_custom_call.1} parent=11 // pred_region
          _
        $region24: #{tpu_custom_call.1} parent=11 // pred_fallthru
          _
      $region12: #{tpu_custom_call.1} parent=5 // pred_fallthru
        _
      %p210 = scmp.lt.s32.totalorder %s19, 2
      // Predicated region
      $region25: #{tpu_custom_call.1} parent=5 // pred_check
        %p211 = pneg %p210
      $region26: #{tpu_custom_call.1} parent=5 // pred_check_branch
        %213 = sbr.rel (%p211) target = $region28
      $region27: #{tpu_custom_call.1} parent=5 // pred_region
        // Predicated region
        $region29: #{tpu_custom_call.1} parent=27 // pred_check
          %p214 = pneg %p39
        $region30: #{tpu_custom_call.1} parent=27 // pred_check_branch
          %216 = sbr.rel (%p214) target = $region32
        $region31: #{tpu_custom_call.1} parent=27 // pred_region
          %s217 = smul.u32 32, %s19
          %p218 = scmp.lt.s32.totalorder %s217, 63
          %s219 = scalar_select %p218, %s217, 63
          %s220 = smul.addr %s219, 6
          %s221 = smul.addr %s220, 8
          %s222 = scalar_lea.vmem %s0, %s221
          %s223 = smul.u32 32, %s19
        $region32: #{tpu_custom_call.1} parent=27 // pred_fallthru
          _
        // Predicated region
        $region33: #{tpu_custom_call.1} parent=27 // pred_check
          %p224 = pneg %p65
        $region34: #{tpu_custom_call.1} parent=27 // pred_check_branch
          %226 = sbr.rel (%p224) target = $region36
        $region35: #{tpu_custom_call.1} parent=27 // pred_region
          %p227 = scmp.lt.s32.totalorder %s19, 1
          %s228 = scalar_select %p227, %s19, 1
          %s229 = smul.addr %s228, 54
          %s230 = smul.addr %s229, 8
          %s231 = scalar_lea.vmem %s1, %s230
        $region36: #{tpu_custom_call.1} parent=27 // pred_fallthru
          _
      $region28: #{tpu_custom_call.1} parent=5 // pred_fallthru
        _
      %p232 = scmp.le.s32.totalorder 1, %s19
      %p233 = scmp.lt.s32.totalorder %s19, 3
      %p234 = pnand %p232, %p233
      %p235 = pneg %p234
      // Predicated region
      $region37: #{tpu_custom_call.1} parent=5 // pred_check
        _
      $region38: #{tpu_custom_call.1} parent=5 // pred_check_branch
        %237 = sbr.rel (%p234) target = $region40
      $region39: #{tpu_custom_call.1} parent=5 // pred_region
        %s238 = ssub.s32 %s19, 1
        %s239 = smul.u32 32, %s24
        %p240 = scmp.lt.s32.totalorder %s239, 63
        %s241 = scalar_select %p240, %s239, 63
        %s242 = smul.addr %s241, 6
        %s243 = smul.addr %s242, 8
        %s244 = scalar_lea.vmem %s0, %s243
        %p245 = pneg %p45
        %p246 = pneg %p42
        %p247 = scmp.lt.s32.totalorder %s24, 1
        %s248 = scalar_select %p247, %s24, 1
        %s249 = smul.addr %s248, 54
        %s250 = smul.addr %s249, 8
        %s251 = scalar_lea.vmem %s1, %s250
        %p252 = pneg %p71
        %p253 = pneg %p68
        %p254 = pneg %p92
        %p255 = pneg %p89
        %p256 = pneg %p113
        %p257 = pneg %p110
        %p258 = pneg %p134
        %p259 = pneg %p131
        %p260 = pneg %p160
        %p261 = pneg %p157
        %s262 = sand.u32 %s147, 1
        %s263 = scalar_lea.sflag [#allocation3], %s262
        %s264 = sand.u32 %s147, 1
        %s265 = smul.addr %s264, 256
        %s266 = scalar_lea.vmem [#allocation2], %s265
        %p267 = pneg %p186
        %p268 = pneg %p183
        %s269 = sand.u32 %s173, 1
        %s270 = scalar_lea.sflag [#allocation5], %s269
        %s271 = sand.u32 %s173, 1
        %s272 = smul.addr %s271, 256
        %s273 = scalar_lea.vmem [#allocation4], %s272
        %s274 = smul.u32 32, %s24
        %p275 = scmp.lt.s32.totalorder %s274, 63
        %s276 = scalar_select %p275, %s274, 63
        %s277 = smul.addr %s276, 6
        %s278 = smul.addr %s277, 8
        %s279 = scalar_lea.vmem %s0, %s278
        %s280 = smul.u32 32, %s24
        %p281 = scmp.lt.s32.totalorder %s24, 1
        %s282 = scalar_select %p281, %s24, 1
        %s283 = smul.addr %s282, 54
        %s284 = smul.addr %s283, 8
        %s285 = scalar_lea.vmem %s1, %s284
        %s286 = smul.u32 32, %s24
        %s287 = smul.u32 32, %s24
        %v288 = vld [vmem:[%s279] sm:$0xff]
        %v289 = vld [vmem:[%s279 + $0x8] sm:$0xff]
        %v290 = vld [vmem:[%s279 + $0x10] sm:$0xff]
        %v291 = vld [vmem:[%s279 + $0x18] sm:$0xff]
        %v292 = vld [vmem:[%s279 + $0x20] sm:$0xff]
        %v293 = vld [vmem:[%s279 + $0x28] sm:$0xff]
        %v294 = vld [vmem:[%s279 + $0x30] sm:$0xff]
        %v295 = vld [vmem:[%s279 + $0x38] sm:$0xff]
        %v296 = vld [vmem:[%s279 + $0x40] sm:$0xff]
        %v297 = vld [vmem:[%s279 + $0x48] sm:$0xff]
        %v298 = vld [vmem:[%s279 + $0x50] sm:$0xff]
        %v299 = vld [vmem:[%s279 + $0x58] sm:$0xff]
        %v300 = vld [vmem:[%s279 + $0x60] sm:$0xff]
        %v301 = vld [vmem:[%s279 + $0x68] sm:$0xff]
        %v302 = vld [vmem:[%s279 + $0x70] sm:$0xff]
        %v303 = vld [vmem:[%s279 + $0x78] sm:$0xff]
        %v304 = vld [vmem:[%s279 + $0x80] sm:$0xff]
        %v305 = vld [vmem:[%s279 + $0x88] sm:$0xff]
        %v306 = vld [vmem:[%s279 + $0x90] sm:$0xff]
        %v307 = vld [vmem:[%s279 + $0x98] sm:$0xff]
        %v308 = vld [vmem:[%s279 + $0xa0] sm:$0xff]
        %v309 = vld [vmem:[%s279 + $0xa8] sm:$0xff]
        %v310 = vld [vmem:[%s279 + $0xb0] sm:$0xff]
        %v311 = vld [vmem:[%s279 + $0xb8] sm:$0xff]
        %v312 = vld [vmem:[%s279 + $0xc0] sm:$0xff]
        %v313 = vld [vmem:[%s279 + $0xc8] sm:$0xff]
        %v314 = vld [vmem:[%s279 + $0xd0] sm:$0xff]
        %v315 = vld [vmem:[%s279 + $0xd8] sm:$0xff]
        %v316 = vld [vmem:[%s279 + $0xe0] sm:$0xff]
        %v317 = vld [vmem:[%s279 + $0xe8] sm:$0xff]
        %v318 = vld [vmem:[%s279 + $0xf0] sm:$0xff]
        %v319 = vld [vmem:[%s279 + $0xf8] sm:$0xff]
        %v320 = vld [vmem:[%s279 + $0x100] sm:$0xff]
        %v321 = vld [vmem:[%s279 + $0x108] sm:$0xff]
        %v322 = vld [vmem:[%s279 + $0x110] sm:$0xff]
        %v323 = vld [vmem:[%s279 + $0x118] sm:$0xff]
        %v324 = vld [vmem:[%s279 + $0x120] sm:$0xff]
        %v325 = vld [vmem:[%s279 + $0x128] sm:$0xff]
        %v326 = vld [vmem:[%s279 + $0x130] sm:$0xff]
        %v327 = vld [vmem:[%s279 + $0x138] sm:$0xff]
        %v328 = vld [vmem:[%s279 + $0x140] sm:$0xff]
        %v329 = vld [vmem:[%s279 + $0x148] sm:$0xff]
        %v330 = vld [vmem:[%s279 + $0x150] sm:$0xff]
        %v331 = vld [vmem:[%s279 + $0x158] sm:$0xff]
        %v332 = vld [vmem:[%s279 + $0x160] sm:$0xff]
        %v333 = vld [vmem:[%s279 + $0x168] sm:$0xff]
        %v334 = vld [vmem:[%s279 + $0x170] sm:$0xff]
        %v335 = vld [vmem:[%s279 + $0x178] sm:$0xff]
        %v336 = vld [vmem:[%s279 + $0x180] sm:$0xff]
        %v337 = vld [vmem:[%s279 + $0x188] sm:$0xff]
        %v338 = vld [vmem:[%s279 + $0x190] sm:$0xff]
        %v339 = vld [vmem:[%s279 + $0x198] sm:$0xff]
        %v340 = vld [vmem:[%s279 + $0x1a0] sm:$0xff]
        %v341 = vld [vmem:[%s279 + $0x1a8] sm:$0xff]
        %v342 = vld [vmem:[%s279 + $0x1b0] sm:$0xff]
        %v343 = vld [vmem:[%s279 + $0x1b8] sm:$0xff]
        %v344 = vld [vmem:[%s279 + $0x1c0] sm:$0xff]
        %v345 = vld [vmem:[%s279 + $0x1c8] sm:$0xff]
        %v346 = vld [vmem:[%s279 + $0x1d0] sm:$0xff]
        %v347 = vld [vmem:[%s279 + $0x1d8] sm:$0xff]
        %v348 = vld [vmem:[%s279 + $0x1e0] sm:$0xff]
        %v349 = vld [vmem:[%s279 + $0x1e8] sm:$0xff]
        %v350 = vld [vmem:[%s279 + $0x1f0] sm:$0xff]
        %v351 = vld [vmem:[%s279 + $0x1f8] sm:$0xff]
        %v352 = vld [vmem:[%s279 + $0x200] sm:$0xff]
        %v353 = vld [vmem:[%s279 + $0x208] sm:$0xff]
        %v354 = vld [vmem:[%s279 + $0x210] sm:$0xff]
        %v355 = vld [vmem:[%s279 + $0x218] sm:$0xff]
        %v356 = vld [vmem:[%s279 + $0x220] sm:$0xff]
        %v357 = vld [vmem:[%s279 + $0x228] sm:$0xff]
        %v358 = vld [vmem:[%s279 + $0x230] sm:$0xff]
        %v359 = vld [vmem:[%s279 + $0x238] sm:$0xff]
        %v360 = vld [vmem:[%s279 + $0x240] sm:$0xff]
        %v361 = vld [vmem:[%s279 + $0x248] sm:$0xff]
        %v362 = vld [vmem:[%s279 + $0x250] sm:$0xff]
        %v363 = vld [vmem:[%s279 + $0x258] sm:$0xff]
        %v364 = vld [vmem:[%s279 + $0x260] sm:$0xff]
        %v365 = vld [vmem:[%s279 + $0x268] sm:$0xff]
        %v366 = vld [vmem:[%s279 + $0x270] sm:$0xff]
        %v367 = vld [vmem:[%s279 + $0x278] sm:$0xff]
        %v368 = vld [vmem:[%s279 + $0x280] sm:$0xff]
        %v369 = vld [vmem:[%s279 + $0x288] sm:$0xff]
        %v370 = vld [vmem:[%s279 + $0x290] sm:$0xff]
        %v371 = vld [vmem:[%s279 + $0x298] sm:$0xff]
        %v372 = vld [vmem:[%s279 + $0x2a0] sm:$0xff]
        %v373 = vld [vmem:[%s279 + $0x2a8] sm:$0xff]
        %v374 = vld [vmem:[%s279 + $0x2b0] sm:$0xff]
        %v375 = vld [vmem:[%s279 + $0x2b8] sm:$0xff]
        %v376 = vld [vmem:[%s279 + $0x2c0] sm:$0xff]
        %v377 = vld [vmem:[%s279 + $0x2c8] sm:$0xff]
        %v378 = vld [vmem:[%s279 + $0x2d0] sm:$0xff]
        %v379 = vld [vmem:[%s279 + $0x2d8] sm:$0xff]
        %v380 = vld [vmem:[%s279 + $0x2e0] sm:$0xff]
        %v381 = vld [vmem:[%s279 + $0x2e8] sm:$0xff]
        %v382 = vld [vmem:[%s279 + $0x2f0] sm:$0xff]
        %v383 = vld [vmem:[%s279 + $0x2f8] sm:$0xff]
        %v384 = vld [vmem:[%s279 + $0x300] sm:$0xff]
        %v385 = vld [vmem:[%s279 + $0x308] sm:$0xff]
        %v386 = vld [vmem:[%s279 + $0x310] sm:$0xff]
        %v387 = vld [vmem:[%s279 + $0x318] sm:$0xff]
        %v388 = vld [vmem:[%s279 + $0x320] sm:$0xff]
        %v389 = vld [vmem:[%s279 + $0x328] sm:$0xff]
        %v390 = vld [vmem:[%s279 + $0x330] sm:$0xff]
        %v391 = vld [vmem:[%s279 + $0x338] sm:$0xff]
        %v392 = vld [vmem:[%s279 + $0x340] sm:$0xff]
        %v393 = vld [vmem:[%s279 + $0x348] sm:$0xff]
        %v394 = vld [vmem:[%s279 + $0x350] sm:$0xff]
        %v395 = vld [vmem:[%s279 + $0x358] sm:$0xff]
        %v396 = vld [vmem:[%s279 + $0x360] sm:$0xff]
        %v397 = vld [vmem:[%s279 + $0x368] sm:$0xff]
        %v398 = vld [vmem:[%s279 + $0x370] sm:$0xff]
        %v399 = vld [vmem:[%s279 + $0x378] sm:$0xff]
        %v400 = vld [vmem:[%s279 + $0x380] sm:$0xff]
        %v401 = vld [vmem:[%s279 + $0x388] sm:$0xff]
        %v402 = vld [vmem:[%s279 + $0x390] sm:$0xff]
        %v403 = vld [vmem:[%s279 + $0x398] sm:$0xff]
        %v404 = vld [vmem:[%s279 + $0x3a0] sm:$0xff]
        %v405 = vld [vmem:[%s279 + $0x3a8] sm:$0xff]
        %v406 = vld [vmem:[%s279 + $0x3b0] sm:$0xff]
        %v407 = vld [vmem:[%s279 + $0x3b8] sm:$0xff]
        %v408 = vld [vmem:[%s279 + $0x3c0] sm:$0xff]
        %v409 = vld [vmem:[%s279 + $0x3c8] sm:$0xff]
        %v410 = vld [vmem:[%s279 + $0x3d0] sm:$0xff]
        %v411 = vld [vmem:[%s279 + $0x3d8] sm:$0xff]
        %v412 = vld [vmem:[%s279 + $0x3e0] sm:$0xff]
        %v413 = vld [vmem:[%s279 + $0x3e8] sm:$0xff]
        %v414 = vld [vmem:[%s279 + $0x3f0] sm:$0xff]
        %v415 = vld [vmem:[%s279 + $0x3f8] sm:$0xff]
        %v416 = vld [vmem:[%s279 + $0x400] sm:$0xff]
        %v417 = vld [vmem:[%s279 + $0x408] sm:$0xff]
        %v418 = vld [vmem:[%s279 + $0x410] sm:$0xff]
        %v419 = vld [vmem:[%s279 + $0x418] sm:$0xff]
        %v420 = vld [vmem:[%s279 + $0x420] sm:$0xff]
        %v421 = vld [vmem:[%s279 + $0x428] sm:$0xff]
        %v422 = vld [vmem:[%s279 + $0x430] sm:$0xff]
        %v423 = vld [vmem:[%s279 + $0x438] sm:$0xff]
        %v424 = vld [vmem:[%s279 + $0x440] sm:$0xff]
        %v425 = vld [vmem:[%s279 + $0x448] sm:$0xff]
        %v426 = vld [vmem:[%s279 + $0x450] sm:$0xff]
        %v427 = vld [vmem:[%s279 + $0x458] sm:$0xff]
        %v428 = vld [vmem:[%s279 + $0x460] sm:$0xff]
        %v429 = vld [vmem:[%s279 + $0x468] sm:$0xff]
        %v430 = vld [vmem:[%s279 + $0x470] sm:$0xff]
        %v431 = vld [vmem:[%s279 + $0x478] sm:$0xff]
        %v432 = vld [vmem:[%s279 + $0x480] sm:$0xff]
        %v433 = vld [vmem:[%s279 + $0x488] sm:$0xff]
        %v434 = vld [vmem:[%s279 + $0x490] sm:$0xff]
        %v435 = vld [vmem:[%s279 + $0x498] sm:$0xff]
        %v436 = vld [vmem:[%s279 + $0x4a0] sm:$0xff]
        %v437 = vld [vmem:[%s279 + $0x4a8] sm:$0xff]
        %v438 = vld [vmem:[%s279 + $0x4b0] sm:$0xff]
        %v439 = vld [vmem:[%s279 + $0x4b8] sm:$0xff]
        %v440 = vld [vmem:[%s279 + $0x4c0] sm:$0xff]
        %v441 = vld [vmem:[%s279 + $0x4c8] sm:$0xff]
        %v442 = vld [vmem:[%s279 + $0x4d0] sm:$0xff]
        %v443 = vld [vmem:[%s279 + $0x4d8] sm:$0xff]
        %v444 = vld [vmem:[%s279 + $0x4e0] sm:$0xff]
        %v445 = vld [vmem:[%s279 + $0x4e8] sm:$0xff]
        %v446 = vld [vmem:[%s279 + $0x4f0] sm:$0xff]
        %v447 = vld [vmem:[%s279 + $0x4f8] sm:$0xff]
        %v448 = vld [vmem:[%s279 + $0x500] sm:$0xff]
        %v449 = vld [vmem:[%s279 + $0x508] sm:$0xff]
        %v450 = vld [vmem:[%s279 + $0x510] sm:$0xff]
        %v451 = vld [vmem:[%s279 + $0x518] sm:$0xff]
        %v452 = vld [vmem:[%s279 + $0x520] sm:$0xff]
        %v453 = vld [vmem:[%s279 + $0x528] sm:$0xff]
        %v454 = vld [vmem:[%s279 + $0x530] sm:$0xff]
        %v455 = vld [vmem:[%s279 + $0x538] sm:$0xff]
        %v456 = vld [vmem:[%s279 + $0x540] sm:$0xff]
        %v457 = vld [vmem:[%s279 + $0x548] sm:$0xff]
        %v458 = vld [vmem:[%s279 + $0x550] sm:$0xff]
        %v459 = vld [vmem:[%s279 + $0x558] sm:$0xff]
        %v460 = vld [vmem:[%s279 + $0x560] sm:$0xff]
        %v461 = vld [vmem:[%s279 + $0x568] sm:$0xff]
        %v462 = vld [vmem:[%s279 + $0x570] sm:$0xff]
        %v463 = vld [vmem:[%s279 + $0x578] sm:$0xff]
        %v464 = vld [vmem:[%s279 + $0x580] sm:$0xff]
        %v465 = vld [vmem:[%s279 + $0x588] sm:$0xff]
        %v466 = vld [vmem:[%s279 + $0x590] sm:$0xff]
        %v467 = vld [vmem:[%s279 + $0x598] sm:$0xff]
        %v468 = vld [vmem:[%s279 + $0x5a0] sm:$0xff]
        %v469 = vld [vmem:[%s279 + $0x5a8] sm:$0xff]
        %v470 = vld [vmem:[%s279 + $0x5b0] sm:$0xff]
        %v471 = vld [vmem:[%s279 + $0x5b8] sm:$0xff]
        %v472 = vld [vmem:[%s279 + $0x5c0] sm:$0xff]
        %v473 = vld [vmem:[%s279 + $0x5c8] sm:$0xff]
        %v474 = vld [vmem:[%s279 + $0x5d0] sm:$0xff]
        %v475 = vld [vmem:[%s279 + $0x5d8] sm:$0xff]
        %v476 = vld [vmem:[%s279 + $0x5e0] sm:$0xff]
        %v477 = vld [vmem:[%s279 + $0x5e8] sm:$0xff]
        %v478 = vld [vmem:[%s279 + $0x5f0] sm:$0xff]
        %v479 = vld [vmem:[%s279 + $0x5f8] sm:$0xff]
        %v480 = vld [vmem:[%s2] sm:$0xff]
        %v481 = vld [vmem:[%s2 + $0x8] sm:$0xff]
        %v482 = vld [vmem:[%s2 + $0x10] sm:$0xff]
        %v483 = vld [vmem:[%s2 + $0x18] sm:$0xff]
        %v484 = vld [vmem:[%s2 + $0x20] sm:$0xff]
        %v485 = vld [vmem:[%s2 + $0x28] sm:$0xff]
        %v486 = vld [vmem:[%s2 + $0x30] sm:$0xff]
        %v487 = vld [vmem:[%s2 + $0x38] sm:$0xff]
        %v488 = vld [vmem:[%s2 + $0x40] sm:$0xff]
        %v489 = vld [vmem:[%s2 + $0x48] sm:$0xff]
        %v490 = vld [vmem:[%s2 + $0x50] sm:$0xff]
        %v491 = vld [vmem:[%s2 + $0x58] sm:$0xff]
        %v492 = vld [vmem:[%s2 + $0x60] sm:$0xff]
        %v493 = vld [vmem:[%s2 + $0x68] sm:$0xff]
        %v494 = vld [vmem:[%s2 + $0x70] sm:$0xff]
        %v495 = vld [vmem:[%s2 + $0x78] sm:$0xff]
        %v496 = vld [vmem:[%s2 + $0x80] sm:$0xff]
        %v497 = vld [vmem:[%s2 + $0x88] sm:$0xff]
        %v498 = vld [vmem:[%s2 + $0x90] sm:$0xff]
        %v499 = vld [vmem:[%s2 + $0x98] sm:$0xff]
        %v500 = vld [vmem:[%s2 + $0xa0] sm:$0xff]
        %v501 = vld [vmem:[%s2 + $0xa8] sm:$0xff]
        %v502 = vld [vmem:[%s2 + $0xb0] sm:$0xff]
        %v503 = vld [vmem:[%s2 + $0xb8] sm:$0xff]
        %v504 = vld [vmem:[%s2 + $0xc0] sm:$0xff]
        %v505 = vld [vmem:[%s2 + $0xc8] sm:$0xff]
        %v506 = vld [vmem:[%s2 + $0xd0] sm:$0xff]
        %v507 = vld [vmem:[%s2 + $0xd8] sm:$0xff]
        %v508 = vld [vmem:[%s2 + $0xe0] sm:$0xff]
        %v509 = vld [vmem:[%s2 + $0xe8] sm:$0xff]
        %v510 = vld [vmem:[%s2 + $0xf0] sm:$0xff]
        %v511 = vld [vmem:[%s2 + $0xf8] sm:$0xff]
        %v512 = vld [vmem:[%s2 + $0x100] sm:$0xff]
        %v513 = vld [vmem:[%s2 + $0x108] sm:$0xff]
        %v514 = vld [vmem:[%s2 + $0x110] sm:$0xff]
        %v515 = vld [vmem:[%s2 + $0x118] sm:$0xff]
        %v516 = vld [vmem:[%s2 + $0x120] sm:$0xff]
        %v517 = vld [vmem:[%s2 + $0x128] sm:$0xff]
        %v518 = vld [vmem:[%s2 + $0x130] sm:$0xff]
        %v519 = vld [vmem:[%s2 + $0x138] sm:$0xff]
        %v520 = vld [vmem:[%s2 + $0x140] sm:$0xff]
        %v521 = vld [vmem:[%s2 + $0x148] sm:$0xff]
        %v522 = vld [vmem:[%s2 + $0x150] sm:$0xff]
        %v523 = vld [vmem:[%s2 + $0x158] sm:$0xff]
        %v524 = vld [vmem:[%s2 + $0x160] sm:$0xff]
        %v525 = vld [vmem:[%s2 + $0x168] sm:$0xff]
        %v526 = vld [vmem:[%s2 + $0x170] sm:$0xff]
        %v527 = vld [vmem:[%s2 + $0x178] sm:$0xff]
        %v528 = vld [vmem:[%s2 + $0x180] sm:$0xff]
        %v529 = vld [vmem:[%s2 + $0x188] sm:$0xff]
        %v530 = vld [vmem:[%s2 + $0x190] sm:$0xff]
        %v531 = vld [vmem:[%s2 + $0x198] sm:$0xff]
        %v532 = vld [vmem:[%s2 + $0x1a0] sm:$0xff]
        %v533 = vld [vmem:[%s2 + $0x1a8] sm:$0xff]
        %v534 = vld [vmem:[%s2 + $0x1b0] sm:$0xff]
        %v535 = vld [vmem:[%s2 + $0x1b8] sm:$0xff]
        %v536 = vld [vmem:[%s2 + $0x1c0] sm:$0xff]
        %v537 = vld [vmem:[%s2 + $0x1c8] sm:$0xff]
        %v538 = vld [vmem:[%s2 + $0x1d0] sm:$0xff]
        %v539 = vld [vmem:[%s2 + $0x1d8] sm:$0xff]
        %v540 = vld [vmem:[%s2 + $0x1e0] sm:$0xff]
        %v541 = vld [vmem:[%s2 + $0x1e8] sm:$0xff]
        %v542 = vld [vmem:[%s2 + $0x1f0] sm:$0xff]
        %v543 = vld [vmem:[%s2 + $0x1f8] sm:$0xff]
        %v544 = vld [vmem:[%s2 + $0x200] sm:$0xff]
        %v545 = vld [vmem:[%s2 + $0x208] sm:$0xff]
        %v546 = vld [vmem:[%s2 + $0x210] sm:$0xff]
        %v547 = vld [vmem:[%s2 + $0x218] sm:$0xff]
        %v548 = vld [vmem:[%s2 + $0x220] sm:$0xff]
        %v549 = vld [vmem:[%s2 + $0x228] sm:$0xff]
        %v550 = vld [vmem:[%s2 + $0x230] sm:$0xff]
        %v551 = vld [vmem:[%s2 + $0x238] sm:$0xff]
        %v552 = vld [vmem:[%s2 + $0x240] sm:$0xff]
        %v553 = vld [vmem:[%s2 + $0x248] sm:$0xff]
        %v554 = vld [vmem:[%s2 + $0x250] sm:$0xff]
        %v555 = vld [vmem:[%s2 + $0x258] sm:$0xff]
        %v556 = vld [vmem:[%s2 + $0x260] sm:$0xff]
        %v557 = vld [vmem:[%s2 + $0x268] sm:$0xff]
        %v558 = vld [vmem:[%s2 + $0x270] sm:$0xff]
        %v559 = vld [vmem:[%s2 + $0x278] sm:$0xff]
        %v560 = vld [vmem:[%s2 + $0x280] sm:$0xff]
        %vm561 = vcmask 64512
        %v563 = vsel %vm561, %v293, 0
        %v566 = vsel %vm561, %v299, 0
        %v569 = vsel %vm561, %v305, 0
        %v572 = vsel %vm561, %v311, 0
        %v575 = vsel %vm561, %v317, 0
        %v578 = vsel %vm561, %v323, 0
        %v581 = vsel %vm561, %v329, 0
        %v584 = vsel %vm561, %v335, 0
        %v587 = vsel %vm561, %v341, 0
        %v590 = vsel %vm561, %v347, 0
        %v593 = vsel %vm561, %v353, 0
        %v596 = vsel %vm561, %v359, 0
        %v599 = vsel %vm561, %v365, 0
        %v602 = vsel %vm561, %v371, 0
        %v605 = vsel %vm561, %v377, 0
        %v608 = vsel %vm561, %v383, 0
        %v611 = vsel %vm561, %v389, 0
        %v614 = vsel %vm561, %v395, 0
        %v617 = vsel %vm561, %v401, 0
        %v620 = vsel %vm561, %v407, 0
        %v623 = vsel %vm561, %v413, 0
        %v626 = vsel %vm561, %v419, 0
        %v629 = vsel %vm561, %v425, 0
        %v632 = vsel %vm561, %v431, 0
        %v635 = vsel %vm561, %v437, 0
        %v638 = vsel %vm561, %v443, 0
        %v641 = vsel %vm561, %v449, 0
        %v644 = vsel %vm561, %v455, 0
        %v647 = vsel %vm561, %v461, 0
        %v650 = vsel %vm561, %v467, 0
        %v653 = vsel %vm561, %v473, 0
        %v656 = vsel %vm561, %v479, 0
        %658 = vmatprep.subr.mxu0 0.0
        %659 = vmatpush1.msra.mxu0 %v480
        %660 = vmatprep.subr.mxu0 0.0
        %661 = vmatpush1.msra.mxu0 %v481
        %662 = vmatprep.subr.mxu0 0.0
        %663 = vmatpush1.msra.mxu0 %v482
        %664 = vmatprep.subr.mxu0 0.0
        %665 = vmatpush1.msra.mxu0 %v483
        %666 = vmatprep.subr.mxu0 0.0
        %667 = vmatpush1.msra.mxu0 %v484
        %668 = vmatprep.subr.mxu0 0.0
        %669 = vmatpush1.msra.mxu0 %v485
        %670 = vmatprep.subr.mxu0 0.0
        %671 = vmatpush1.msra.mxu0 %v486
        %672 = vmatprep.subr.mxu0 0.0
        %673 = vmatpush1.msra.mxu0 %v487
        %674 = vmatprep.subr.mxu0 0.0
        %675 = vmatpush1.msra.mxu0 %v488
        %676 = vmatprep.subr.mxu0 0.0
        %677 = vmatpush1.msra.mxu0 %v489
        %678 = vmatprep.subr.mxu0 0.0
        %679 = vmatpush1.msra.mxu0 %v490
        %680 = vmatprep.subr.mxu0 0.0
        %681 = vmatpush1.msra.mxu0 %v491
        %682 = vmatprep.subr.mxu0 0.0
        %683 = vmatpush1.msra.mxu0 %v492
        %684 = vmatprep.subr.mxu0 0.0
        %685 = vmatpush1.msra.mxu0 %v493
        %686 = vmatprep.subr.mxu0 0.0
        %687 = vmatpush1.msra.mxu0 %v494
        %688 = vmatprep.subr.mxu0 0.0
        %689 = vmatpush1.msra.mxu0 %v495
        %690 = vmatprep.subr.mxu0 0.0
        %691 = vmatpush1.msra.mxu0 %v496
        %692 = vmatprep.subr.mxu0 0.0
        %693 = vmatpush1.msra.mxu0 %v497
        %694 = vmatprep.subr.mxu0 0.0
        %695 = vmatpush1.msra.mxu0 %v498
        %696 = vmatprep.subr.mxu0 0.0
        %697 = vmatpush1.msra.mxu0 %v499
        %698 = vmatprep.subr.mxu0 0.0
        %699 = vmatpush1.msra.mxu0 %v500
        %700 = vmatprep.subr.mxu0 0.0
        %701 = vmatpush1.msra.mxu0 %v501
        %702 = vmatprep.subr.mxu0 0.0
        %703 = vmatpush1.msra.mxu0 %v502
        %704 = vmatprep.subr.mxu0 0.0
        %705 = vmatpush1.msra.mxu0 %v503
        %706 = vmatprep.subr.mxu0 0.0
        %707 = vmatpush1.msra.mxu0 %v504
        %708 = vmatprep.subr.mxu0 0.0
        %709 = vmatpush1.msra.mxu0 %v505
        %710 = vmatprep.subr.mxu0 0.0
        %711 = vmatpush1.msra.mxu0 %v506
        %712 = vmatprep.subr.mxu0 0.0
        %713 = vmatpush1.msra.mxu0 %v507
        %714 = vmatprep.subr.mxu0 0.0
        %715 = vmatpush1.msra.mxu0 %v508
        %716 = vmatprep.subr.mxu0 0.0
        %717 = vmatpush1.msra.mxu0 %v509
        %718 = vmatprep.subr.mxu0 0.0
        %719 = vmatpush1.msra.mxu0 %v510
        %720 = vmatprep.subr.mxu0 0.0
        %721 = vmatpush1.msra.mxu0 %v511
        %722 = vmatprep.mubr.f32.mxu0 %v289
        %723 = vmatmul.mubr.f32.gmra.mrb[0].mxu0 %v288
        %v724 = vpop.f32.mrb[0].mxu0
        %v725 = vadd.f32 0.0, %v724
        %v726 = vpop.f32.mrb[0].mxu0
        %727 = vmatprep.mubr.f32.mxu0 %v295
        %728 = vmatmul.mubr.f32.gmra.mrb[0].mxu0 %v294
        %v729 = vpop.f32.mrb[0].mxu0
        %v730 = vadd.f32 0.0, %v729
        %v731 = vpop.f32.mrb[0].mxu0
        %732 = vmatprep.mubr.f32.mxu0 %v301
        %733 = vmatmul.mubr.f32.gmra.mrb[0].mxu0 %v300
        %v734 = vpop.f32.mrb[0].mxu0
        %v735 = vadd.f32 0.0, %v734
        %v736 = vpop.f32.mrb[0].mxu0
        %737 = vmatprep.mubr.f32.mxu0 %v307
        %738 = vmatmul.mubr.f32.gmra.mrb[0].mxu0 %v306
        %v739 = vpop.f32.mrb[0].mxu0
        %v740 = vadd.f32 0.0, %v739
        %v741 = vpop.f32.mrb[0].mxu0
        %742 = vmatprep.mubr.f32.mxu0 %v313
        %743 = vmatmul.mubr.f32.gmra.mrb[0].mxu0 %v312
        %v744 = vpop.f32.mrb[0].mxu0
        %v745 = vadd.f32 0.0, %v744
        %v746 = vpop.f32.mrb[0].mxu0
        %747 = vmatprep.mubr.f32.mxu0 %v319
        %748 = vmatmul.mubr.f32.gmra.mrb[0].mxu0 %v318
        %v749 = vpop.f32.mrb[0].mxu0
        %v750 = vadd.f32 0.0, %v749
        %v751 = vpop.f32.mrb[0].mxu0
        %752 = vmatprep.mubr.f32.mxu0 %v325
        %753 = vmatmul.mubr.f32.gmra.mrb[0].mxu0 %v324
        %v754 = vpop.f32.mrb[0].mxu0
        %v755 = vadd.f32 0.0, %v754
        %v756 = vpop.f32.mrb[0].mxu0
        %757 = vmatprep.mubr.f32.mxu0 %v331
        %758 = vmatmul.mubr.f32.gmra.mrb[0].mxu0 %v330
        %v759 = vpop.f32.mrb[0].mxu0
        %v760 = vadd.f32 0.0, %v759
        %v761 = vpop.f32.mrb[0].mxu0
        %762 = vmatprep.mubr.f32.mxu0 %v337
        %763 = vmatmul.mubr.f32.gmra.mrb[0].mxu0 %v336
        %v764 = vpop.f32.mrb[0].mxu0
        %v765 = vadd.f32 0.0, %v764
        %v766 = vpop.f32.mrb[0].mxu0
        %767 = vmatprep.mubr.f32.mxu0 %v343
        %768 = vmatmul.mubr.f32.gmra.mrb[0].mxu0 %v342
        %v769 = vpop.f32.mrb[0].mxu0
        %v770 = vadd.f32 0.0, %v769
        %v771 = vpop.f32.mrb[0].mxu0
        %772 = vmatprep.mubr.f32.mxu0 %v349
        %773 = vmatmul.mubr.f32.gmra.mrb[0].mxu0 %v348
        %v774 = vpop.f32.mrb[0].mxu0
        %v775 = vadd.f32 0.0, %v774
        %v776 = vpop.f32.mrb[0].mxu0
        %777 = vmatprep.mubr.f32.mxu0 %v355
        %778 = vmatmul.mubr.f32.gmra.mrb[0].mxu0 %v354
        %v779 = vpop.f32.mrb[0].mxu0
        %v780 = vadd.f32 0.0, %v779
        %v781 = vpop.f32.mrb[0].mxu0
        %782 = vmatprep.mubr.f32.mxu0 %v361
        %783 = vmatmul.mubr.f32.gmra.mrb[0].mxu0 %v360
        %v784 = vpop.f32.mrb[0].mxu0
        %v785 = vadd.f32 0.0, %v784
        %v786 = vpop.f32.mrb[0].mxu0
        %787 = vmatprep.mubr.f32.mxu0 %v367
        %788 = vmatmul.mubr.f32.gmra.mrb[0].mxu0 %v366
        %v789 = vpop.f32.mrb[0].mxu0
        %v790 = vadd.f32 0.0, %v789
        %v791 = vpop.f32.mrb[0].mxu0
        %792 = vmatprep.mubr.f32.mxu0 %v373
        %793 = vmatmul.mubr.f32.gmra.mrb[0].mxu0 %v372
        %v794 = vpop.f32.mrb[0].mxu0
        %v795 = vadd.f32 0.0, %v794
        %v796 = vpop.f32.mrb[0].mxu0
        %797 = vmatprep.mubr.f32.mxu0 %v379
        %798 = vmatmul.mubr.f32.gmra.mrb[0].mxu0 %v378
        %v799 = vpop.f32.mrb[0].mxu0
        %v800 = vadd.f32 0.0, %v799
        %v801 = vpop.f32.mrb[0].mxu0
        %802 = vmatprep.mubr.f32.mxu0 %v385
        %803 = vmatmul.mubr.f32.gmra.mrb[0].mxu0 %v384
        %v804 = vpop.f32.mrb[0].mxu0
        %v805 = vadd.f32 0.0, %v804
        %v806 = vpop.f32.mrb[0].mxu0
        %807 = vmatprep.mubr.f32.mxu0 %v391
        %808 = vmatmul.mubr.f32.gmra.mrb[0].mxu0 %v390
        %v809 = vpop.f32.mrb[0].mxu0
        %v810 = vadd.f32 0.0, %v809
        %v811 = vpop.f32.mrb[0].mxu0
        %812 = vmatprep.mubr.f32.mxu0 %v397
        %813 = vmatmul.mubr.f32.gmra.mrb[0].mxu0 %v396
        %v814 = vpop.f32.mrb[0].mxu0
        %v815 = vadd.f32 0.0, %v814
        %v816 = vpop.f32.mrb[0].mxu0
        %817 = vmatprep.mubr.f32.mxu0 %v403
        %818 = vmatmul.mubr.f32.gmra.mrb[0].mxu0 %v402
        %v819 = vpop.f32.mrb[0].mxu0
        %v820 = vadd.f32 0.0, %v819
        %v821 = vpop.f32.mrb[0].mxu0
        %822 = vmatprep.mubr.f32.mxu0 %v409
        %823 = vmatmul.mubr.f32.gmra.mrb[0].mxu0 %v408
        %v824 = vpop.f32.mrb[0].mxu0
        %v825 = vadd.f32 0.0, %v824
        %v826 = vpop.f32.mrb[0].mxu0
        %827 = vmatprep.mubr.f32.mxu0 %v415
        %828 = vmatmul.mubr.f32.gmra.mrb[0].mxu0 %v414
        %v829 = vpop.f32.mrb[0].mxu0
        %v830 = vadd.f32 0.0, %v829
        %v831 = vpop.f32.mrb[0].mxu0
        %832 = vmatprep.mubr.f32.mxu0 %v421
        %833 = vmatmul.mubr.f32.gmra.mrb[0].mxu0 %v420
        %v834 = vpop.f32.mrb[0].mxu0
        %v835 = vadd.f32 0.0, %v834
        %v836 = vpop.f32.mrb[0].mxu0
        %837 = vmatprep.mubr.f32.mxu0 %v427
        %838 = vmatmul.mubr.f32.gmra.mrb[0].mxu0 %v426
        %v839 = vpop.f32.mrb[0].mxu0
        %v840 = vadd.f32 0.0, %v839
        %v841 = vpop.f32.mrb[0].mxu0
        %842 = vmatprep.mubr.f32.mxu0 %v433
        %843 = vmatmul.mubr.f32.gmra.mrb[0].mxu0 %v432
        %v844 = vpop.f32.mrb[0].mxu0
        %v845 = vadd.f32 0.0, %v844
        %v846 = vpop.f32.mrb[0].mxu0
        %847 = vmatprep.mubr.f32.mxu0 %v439
        %848 = vmatmul.mubr.f32.gmra.mrb[0].mxu0 %v438
        %v849 = vpop.f32.mrb[0].mxu0
        %v850 = vadd.f32 0.0, %v849
        %v851 = vpop.f32.mrb[0].mxu0
        %852 = vmatprep.mubr.f32.mxu0 %v445
        %853 = vmatmul.mubr.f32.gmra.mrb[0].mxu0 %v444
        %v854 = vpop.f32.mrb[0].mxu0
        %v855 = vadd.f32 0.0, %v854
        %v856 = vpop.f32.mrb[0].mxu0
        %857 = vmatprep.mubr.f32.mxu0 %v451
        %858 = vmatmul.mubr.f32.gmra.mrb[0].mxu0 %v450
        %v859 = vpop.f32.mrb[0].mxu0
        %v860 = vadd.f32 0.0, %v859
        %v861 = vpop.f32.mrb[0].mxu0
        %862 = vmatprep.mubr.f32.mxu0 %v457
        %863 = vmatmul.mubr.f32.gmra.mrb[0].mxu0 %v456
        %v864 = vpop.f32.mrb[0].mxu0
        %v865 = vadd.f32 0.0, %v864
        %v866 = vpop.f32.mrb[0].mxu0
        %867 = vmatprep.mubr.f32.mxu0 %v463
        %868 = vmatmul.mubr.f32.gmra.mrb[0].mxu0 %v462
        %v869 = vpop.f32.mrb[0].mxu0
        %v870 = vadd.f32 0.0, %v869
        %v871 = vpop.f32.mrb[0].mxu0
        %872 = vmatprep.mubr.f32.mxu0 %v469
        %873 = vmatmul.mubr.f32.gmra.mrb[0].mxu0 %v468
        %v874 = vpop.f32.mrb[0].mxu0
        %v875 = vadd.f32 0.0, %v874
        %v876 = vpop.f32.mrb[0].mxu0
        %877 = vmatprep.mubr.f32.mxu0 %v475
        %878 = vmatmul.mubr.f32.gmra.mrb[0].mxu0 %v474
        %v879 = vpop.f32.mrb[0].mxu0
        %v880 = vadd.f32 0.0, %v879
        %v881 = vpop.f32.mrb[0].mxu0
        %882 = vdwg.mxu0
        %883 = vmatprep.subr.mxu0 0.0
        %884 = vmatpush1.msra.mxu0 %v512
        %885 = vmatprep.subr.mxu0 0.0
        %886 = vmatpush1.msra.mxu0 %v513
        %887 = vmatprep.subr.mxu0 0.0
        %888 = vmatpush1.msra.mxu0 %v514
        %889 = vmatprep.subr.mxu0 0.0
        %890 = vmatpush1.msra.mxu0 %v515
        %891 = vmatprep.subr.mxu0 0.0
        %892 = vmatpush1.msra.mxu0 %v516
        %893 = vmatprep.subr.mxu0 0.0
        %894 = vmatpush1.msra.mxu0 %v517
        %895 = vmatprep.subr.mxu0 0.0
        %896 = vmatpush1.msra.mxu0 %v518
        %897 = vmatprep.subr.mxu0 0.0
        %898 = vmatpush1.msra.mxu0 %v519
        %899 = vmatprep.subr.mxu0 0.0
        %900 = vmatpush1.msra.mxu0 %v520
        %901 = vmatprep.subr.mxu0 0.0
        %902 = vmatpush1.msra.mxu0 %v521
        %903 = vmatprep.subr.mxu0 0.0
        %904 = vmatpush1.msra.mxu0 %v522
        %905 = vmatprep.subr.mxu0 0.0
        %906 = vmatpush1.msra.mxu0 %v523
        %907 = vmatprep.subr.mxu0 0.0
        %908 = vmatpush1.msra.mxu0 %v524
        %909 = vmatprep.subr.mxu0 0.0
        %910 = vmatpush1.msra.mxu0 %v525
        %911 = vmatprep.subr.mxu0 0.0
        %912 = vmatpush1.msra.mxu0 %v526
        %913 = vmatprep.subr.mxu0 0.0
        %914 = vmatpush1.msra.mxu0 %v527
        %915 = vmatprep.subr.mxu0 0.0
        %916 = vmatpush1.msra.mxu0 %v528
        %917 = vmatprep.subr.mxu0 0.0
        %918 = vmatpush1.msra.mxu0 %v529
        %919 = vmatprep.subr.mxu0 0.0
        %920 = vmatpush1.msra.mxu0 %v530
        %921 = vmatprep.subr.mxu0 0.0
        %922 = vmatpush1.msra.mxu0 %v531
        %923 = vmatprep.subr.mxu0 0.0
        %924 = vmatpush1.msra.mxu0 %v532
        %925 = vmatprep.subr.mxu0 0.0
        %926 = vmatpush1.msra.mxu0 %v533
        %927 = vmatprep.subr.mxu0 0.0
        %928 = vmatpush1.msra.mxu0 %v534
        %929 = vmatprep.subr.mxu0 0.0
        %930 = vmatpush1.msra.mxu0 %v535
        %931 = vmatprep.subr.mxu0 0.0
        %932 = vmatpush1.msra.mxu0 %v536
        %933 = vmatprep.subr.mxu0 0.0
        %934 = vmatpush1.msra.mxu0 %v537
        %935 = vmatprep.subr.mxu0 0.0
        %936 = vmatpush1.msra.mxu0 %v538
        %937 = vmatprep.subr.mxu0 0.0
        %938 = vmatpush1.msra.mxu0 %v539
        %939 = vmatprep.subr.mxu0 0.0
        %940 = vmatpush1.msra.mxu0 %v540
        %941 = vmatprep.subr.mxu0 0.0
        %942 = vmatpush1.msra.mxu0 %v541
        %943 = vmatprep.subr.mxu0 0.0
        %944 = vmatpush1.msra.mxu0 %v542
        %945 = vmatprep.subr.mxu0 0.0
        %946 = vmatpush1.msra.mxu0 %v543
        %947 = vmatprep.mubr.f32.mxu0 %v291
        %948 = vmatmul.mubr.f32.gmra.mrb[0].mxu0 %v290
        %v949 = vpop.f32.mrb[0].mxu0
        %v950 = vadd.f32 %v725, %v949
        %v951 = vpop.f32.mrb[0].mxu0
        %952 = vmatprep.mubr.f32.mxu0 %v297
        %953 = vmatmul.mubr.f32.gmra.mrb[0].mxu0 %v296
        %v954 = vpop.f32.mrb[0].mxu0
        %v955 = vadd.f32 %v730, %v954
        %v956 = vpop.f32.mrb[0].mxu0
        %957 = vmatprep.mubr.f32.mxu0 %v303
        %958 = vmatmul.mubr.f32.gmra.mrb[0].mxu0 %v302
        %v959 = vpop.f32.mrb[0].mxu0
        %v960 = vadd.f32 %v735, %v959
        %v961 = vpop.f32.mrb[0].mxu0
        %962 = vmatprep.mubr.f32.mxu0 %v309
        %963 = vmatmul.mubr.f32.gmra.mrb[0].mxu0 %v308
        %v964 = vpop.f32.mrb[0].mxu0
        %v965 = vadd.f32 %v740, %v964
        %v966 = vpop.f32.mrb[0].mxu0
        %967 = vmatprep.mubr.f32.mxu0 %v315
        %968 = vmatmul.mubr.f32.gmra.mrb[0].mxu0 %v314
        %v969 = vpop.f32.mrb[0].mxu0
        %v970 = vadd.f32 %v745, %v969
        %v971 = vpop.f32.mrb[0].mxu0
        %972 = vmatprep.mubr.f32.mxu0 %v321
        %973 = vmatmul.mubr.f32.gmra.mrb[0].mxu0 %v320
        %v974 = vpop.f32.mrb[0].mxu0
        %v975 = vadd.f32 %v750, %v974
        %v976 = vpop.f32.mrb[0].mxu0
        %977 = vmatprep.mubr.f32.mxu0 %v327
        %978 = vmatmul.mubr.f32.gmra.mrb[0].mxu0 %v326
        %v979 = vpop.f32.mrb[0].mxu0
        %v980 = vadd.f32 %v755, %v979
        %v981 = vpop.f32.mrb[0].mxu0
        %982 = vmatprep.mubr.f32.mxu0 %v333
        %983 = vmatmul.mubr.f32.gmra.mrb[0].mxu0 %v332
        %v984 = vpop.f32.mrb[0].mxu0
        %v985 = vadd.f32 %v760, %v984
        %v986 = vpop.f32.mrb[0].mxu0
        %987 = vmatprep.mubr.f32.mxu0 %v339
        %988 = vmatmul.mubr.f32.gmra.mrb[0].mxu0 %v338
        %v989 = vpop.f32.mrb[0].mxu0
        %v990 = vadd.f32 %v765, %v989
        %v991 = vpop.f32.mrb[0].mxu0
        %992 = vmatprep.mubr.f32.mxu0 %v345
        %993 = vmatmul.mubr.f32.gmra.mrb[0].mxu0 %v344
        %v994 = vpop.f32.mrb[0].mxu0
        %v995 = vadd.f32 %v770, %v994
        %v996 = vpop.f32.mrb[0].mxu0
        %997 = vmatprep.mubr.f32.mxu0 %v351
        %998 = vmatmul.mubr.f32.gmra.mrb[0].mxu0 %v350
        %v999 = vpop.f32.mrb[0].mxu0
        %v1000 = vadd.f32 %v775, %v999
        %v1001 = vpop.f32.mrb[0].mxu0
        %1002 = vmatprep.mubr.f32.mxu0 %v357
        %1003 = vmatmul.mubr.f32.gmra.mrb[0].mxu0 %v356
        %v1004 = vpop.f32.mrb[0].mxu0
        %v1005 = vadd.f32 %v780, %v1004
        %v1006 = vpop.f32.mrb[0].mxu0
        %1007 = vmatprep.mubr.f32.mxu0 %v363
        %1008 = vmatmul.mubr.f32.gmra.mrb[0].mxu0 %v362
        %v1009 = vpop.f32.mrb[0].mxu0
        %v1010 = vadd.f32 %v785, %v1009
        %v1011 = vpop.f32.mrb[0].mxu0
        %1012 = vmatprep.mubr.f32.mxu0 %v369
        %1013 = vmatmul.mubr.f32.gmra.mrb[0].mxu0 %v368
        %v1014 = vpop.f32.mrb[0].mxu0
        %v1015 = vadd.f32 %v790, %v1014
        %v1016 = vpop.f32.mrb[0].mxu0
        %1017 = vmatprep.mubr.f32.mxu0 %v375
        %1018 = vmatmul.mubr.f32.gmra.mrb[0].mxu0 %v374
        %v1019 = vpop.f32.mrb[0].mxu0
        %v1020 = vadd.f32 %v795, %v1019
        %v1021 = vpop.f32.mrb[0].mxu0
        %1022 = vmatprep.mubr.f32.mxu0 %v381
        %1023 = vmatmul.mubr.f32.gmra.mrb[0].mxu0 %v380
        %v1024 = vpop.f32.mrb[0].mxu0
        %v1025 = vadd.f32 %v800, %v1024
        %v1026 = vpop.f32.mrb[0].mxu0
        %1027 = vmatprep.mubr.f32.mxu0 %v387
        %1028 = vmatmul.mubr.f32.gmra.mrb[0].mxu0 %v386
        %v1029 = vpop.f32.mrb[0].mxu0
        %v1030 = vadd.f32 %v805, %v1029
        %v1031 = vpop.f32.mrb[0].mxu0
        %1032 = vmatprep.mubr.f32.mxu0 %v393
        %1033 = vmatmul.mubr.f32.gmra.mrb[0].mxu0 %v392
        %v1034 = vpop.f32.mrb[0].mxu0
        %v1035 = vadd.f32 %v810, %v1034
        %v1036 = vpop.f32.mrb[0].mxu0
        %1037 = vmatprep.mubr.f32.mxu0 %v399
        %1038 = vmatmul.mubr.f32.gmra.mrb[0].mxu0 %v398
        %v1039 = vpop.f32.mrb[0].mxu0
        %v1040 = vadd.f32 %v815, %v1039
        %v1041 = vpop.f32.mrb[0].mxu0
        %1042 = vmatprep.mubr.f32.mxu0 %v405
        %1043 = vmatmul.mubr.f32.gmra.mrb[0].mxu0 %v404
        %v1044 = vpop.f32.mrb[0].mxu0
        %v1045 = vadd.f32 %v820, %v1044
        %v1046 = vpop.f32.mrb[0].mxu0
        %1047 = vmatprep.mubr.f32.mxu0 %v411
        %1048 = vmatmul.mubr.f32.gmra.mrb[0].mxu0 %v410
        %v1049 = vpop.f32.mrb[0].mxu0
        %v1050 = vadd.f32 %v825, %v1049
        %v1051 = vpop.f32.mrb[0].mxu0
        %1052 = vmatprep.mubr.f32.mxu0 %v417
        %1053 = vmatmul.mubr.f32.gmra.mrb[0].mxu0 %v416
        %v1054 = vpop.f32.mrb[0].mxu0
        %v1055 = vadd.f32 %v830, %v1054
        %v1056 = vpop.f32.mrb[0].mxu0
        %1057 = vmatprep.mubr.f32.mxu0 %v423
        %1058 = vmatmul.mubr.f32.gmra.mrb[0].mxu0 %v422
        %v1059 = vpop.f32.mrb[0].mxu0
        %v1060 = vadd.f32 %v835, %v1059
        %v1061 = vpop.f32.mrb[0].mxu0
        %1062 = vmatprep.mubr.f32.mxu0 %v429
        %1063 = vmatmul.mubr.f32.gmra.mrb[0].mxu0 %v428
        %v1064 = vpop.f32.mrb[0].mxu0
        %v1065 = vadd.f32 %v840, %v1064
        %v1066 = vpop.f32.mrb[0].mxu0
        %1067 = vmatprep.mubr.f32.mxu0 %v435
        %1068 = vmatmul.mubr.f32.gmra.mrb[0].mxu0 %v434
        %v1069 = vpop.f32.mrb[0].mxu0
        %v1070 = vadd.f32 %v845, %v1069
        %v1071 = vpop.f32.mrb[0].mxu0
        %1072 = vmatprep.mubr.f32.mxu0 %v441
        %1073 = vmatmul.mubr.f32.gmra.mrb[0].mxu0 %v440
        %v1074 = vpop.f32.mrb[0].mxu0
        %v1075 = vadd.f32 %v850, %v1074
        %v1076 = vpop.f32.mrb[0].mxu0
        %1077 = vmatprep.mubr.f32.mxu0 %v447
        %1078 = vmatmul.mubr.f32.gmra.mrb[0].mxu0 %v446
        %v1079 = vpop.f32.mrb[0].mxu0
        %v1080 = vadd.f32 %v855, %v1079
        %v1081 = vpop.f32.mrb[0].mxu0
        %1082 = vmatprep.mubr.f32.mxu0 %v453
        %1083 = vmatmul.mubr.f32.gmra.mrb[0].mxu0 %v452
        %v1084 = vpop.f32.mrb[0].mxu0
        %v1085 = vadd.f32 %v860, %v1084
        %v1086 = vpop.f32.mrb[0].mxu0
        %1087 = vmatprep.mubr.f32.mxu0 %v459
        %1088 = vmatmul.mubr.f32.gmra.mrb[0].mxu0 %v458
        %v1089 = vpop.f32.mrb[0].mxu0
        %v1090 = vadd.f32 %v865, %v1089
        %v1091 = vpop.f32.mrb[0].mxu0
        %1092 = vmatprep.mubr.f32.mxu0 %v465
        %1093 = vmatmul.mubr.f32.gmra.mrb[0].mxu0 %v464
        %v1094 = vpop.f32.mrb[0].mxu0
        %v1095 = vadd.f32 %v870, %v1094
        %v1096 = vpop.f32.mrb[0].mxu0
        %1097 = vmatprep.mubr.f32.mxu0 %v471
        %1098 = vmatmul.mubr.f32.gmra.mrb[0].mxu0 %v470
        %v1099 = vpop.f32.mrb[0].mxu0
        %v1100 = vadd.f32 %v875, %v1099
        %v1101 = vpop.f32.mrb[0].mxu0
        %1102 = vmatprep.mubr.f32.mxu0 %v477
        %1103 = vmatmul.mubr.f32.gmra.mrb[0].mxu0 %v476
        %v1104 = vpop.f32.mrb[0].mxu0
        %v1105 = vadd.f32 %v880, %v1104
        %v1106 = vpop.f32.mrb[0].mxu0
        %1107 = vdwg.mxu0
        %1108 = vmatprep.subr.mxu0 0.0
        %1109 = vmatpush1.msra.mxu0 %v544
        %1110 = vmatprep.subr.mxu0 0.0
        %1111 = vmatpush1.msra.mxu0 %v545
        %1112 = vmatprep.subr.mxu0 0.0
        %1113 = vmatpush1.msra.mxu0 %v546
        %1114 = vmatprep.subr.mxu0 0.0
        %1115 = vmatpush1.msra.mxu0 %v547
        %1116 = vmatprep.subr.mxu0 0.0
        %1117 = vmatpush1.msra.mxu0 %v548
        %1118 = vmatprep.subr.mxu0 0.0
        %1119 = vmatpush1.msra.mxu0 %v549
        %1120 = vmatprep.subr.mxu0 0.0
        %1121 = vmatpush1.msra.mxu0 %v550
        %1122 = vmatprep.subr.mxu0 0.0
        %1123 = vmatpush1.msra.mxu0 %v551
        %1124 = vmatprep.subr.mxu0 0.0
        %1125 = vmatpush1.msra.mxu0 %v552
        %1126 = vmatprep.subr.mxu0 0.0
        %1127 = vmatpush1.msra.mxu0 %v553
        %1128 = vmatprep.subr.mxu0 0.0
        %1129 = vmatpush1.msra.mxu0 %v554
        %1130 = vmatprep.subr.mxu0 0.0
        %1131 = vmatpush1.msra.mxu0 %v555
        %1132 = vmatprep.subr.mxu0 0.0
        %1133 = vmatpush1.msra.mxu0 %v556
        %1134 = vmatprep.subr.mxu0 0.0
        %1135 = vmatpush1.msra.mxu0 %v557
        %1136 = vmatprep.subr.mxu0 0.0
        %1137 = vmatpush1.msra.mxu0 %v558
        %1138 = vmatprep.subr.mxu0 0.0
        %1139 = vmatpush1.msra.mxu0 %v559
        %1140 = vmatprep.subr.mxu0 0.0
        %1141 = vmatpush1.msra.mxu0 %v560
        %1142 = vmatprep.subr.mxu0 0.0
        %1143 = vmatpush1.msra.mxu0 0.0
        %1144 = vmatprep.subr.mxu0 0.0
        %1145 = vmatpush1.msra.mxu0 0.0
        %1146 = vmatprep.subr.mxu0 0.0
        %1147 = vmatpush1.msra.mxu0 0.0
        %1148 = vmatprep.subr.mxu0 0.0
        %1149 = vmatpush1.msra.mxu0 0.0
        %1150 = vmatprep.subr.mxu0 0.0
        %1151 = vmatpush1.msra.mxu0 0.0
        %1152 = vmatprep.subr.mxu0 0.0
        %1153 = vmatpush1.msra.mxu0 0.0
        %1154 = vmatprep.subr.mxu0 0.0
        %1155 = vmatpush1.msra.mxu0 0.0
        %1156 = vmatprep.subr.mxu0 0.0
        %1157 = vmatpush1.msra.mxu0 0.0
        %1158 = vmatprep.subr.mxu0 0.0
        %1159 = vmatpush1.msra.mxu0 0.0
        %1160 = vmatprep.subr.mxu0 0.0
        %1161 = vmatpush1.msra.mxu0 0.0
        %1162 = vmatprep.subr.mxu0 0.0
        %1163 = vmatpush1.msra.mxu0 0.0
        %1164 = vmatprep.subr.mxu0 0.0
        %1165 = vmatpush1.msra.mxu0 0.0
        %1166 = vmatprep.subr.mxu0 0.0
        %1167 = vmatpush1.msra.mxu0 0.0
        %1168 = vmatprep.subr.mxu0 0.0
        %1169 = vmatpush1.msra.mxu0 0.0
        %1170 = vmatprep.subr.mxu0 0.0
        %1171 = vmatpush1.msra.mxu0 0.0
        %1172 = vmatprep.mubr.f32.mxu0 %v563
        %1173 = vmatmul.mubr.f32.gmra.mrb[0].mxu0 %v292
        %v1174 = vpop.f32.mrb[0].mxu0
        %v1175 = vadd.f32 %v950, %v1174
        %v1176 = vpop.f32.mrb[0].mxu0
        %1177 = vmatprep.mubr.f32.mxu0 %v566
        %1178 = vmatmul.mubr.f32.gmra.mrb[0].mxu0 %v298
        %v1179 = vpop.f32.mrb[0].mxu0
        %v1180 = vadd.f32 %v955, %v1179
        %v1181 = vpop.f32.mrb[0].mxu0
        %1182 = vmatprep.mubr.f32.mxu0 %v569
        %1183 = vmatmul.mubr.f32.gmra.mrb[0].mxu0 %v304
        %v1184 = vpop.f32.mrb[0].mxu0
        %v1185 = vadd.f32 %v960, %v1184
        %v1186 = vpop.f32.mrb[0].mxu0
        %1187 = vmatprep.mubr.f32.mxu0 %v572
        %1188 = vmatmul.mubr.f32.gmra.mrb[0].mxu0 %v310
        %v1189 = vpop.f32.mrb[0].mxu0
        %v1190 = vadd.f32 %v965, %v1189
        %v1191 = vpop.f32.mrb[0].mxu0
        %1192 = vmatprep.mubr.f32.mxu0 %v575
        %1193 = vmatmul.mubr.f32.gmra.mrb[0].mxu0 %v316
        %v1194 = vpop.f32.mrb[0].mxu0
        %v1195 = vadd.f32 %v970, %v1194
        %v1196 = vpop.f32.mrb[0].mxu0
        %1197 = vmatprep.mubr.f32.mxu0 %v578
        %1198 = vmatmul.mubr.f32.gmra.mrb[0].mxu0 %v322
        %v1199 = vpop.f32.mrb[0].mxu0
        %v1200 = vadd.f32 %v975, %v1199
        %v1201 = vpop.f32.mrb[0].mxu0
        %1202 = vmatprep.mubr.f32.mxu0 %v581
        %1203 = vmatmul.mubr.f32.gmra.mrb[0].mxu0 %v328
        %v1204 = vpop.f32.mrb[0].mxu0
        %v1205 = vadd.f32 %v980, %v1204
        %v1206 = vpop.f32.mrb[0].mxu0
        %1207 = vmatprep.mubr.f32.mxu0 %v584
        %1208 = vmatmul.mubr.f32.gmra.mrb[0].mxu0 %v334
        %v1209 = vpop.f32.mrb[0].mxu0
        %v1210 = vadd.f32 %v985, %v1209
        %v1211 = vpop.f32.mrb[0].mxu0
        %1212 = vmatprep.mubr.f32.mxu0 %v587
        %1213 = vmatmul.mubr.f32.gmra.mrb[0].mxu0 %v340
        %v1214 = vpop.f32.mrb[0].mxu0
        %v1215 = vadd.f32 %v990, %v1214
        %v1216 = vpop.f32.mrb[0].mxu0
        %1217 = vmatprep.mubr.f32.mxu0 %v590
        %1218 = vmatmul.mubr.f32.gmra.mrb[0].mxu0 %v346
        %v1219 = vpop.f32.mrb[0].mxu0
        %v1220 = vadd.f32 %v995, %v1219
        %v1221 = vpop.f32.mrb[0].mxu0
        %1222 = vmatprep.mubr.f32.mxu0 %v593
        %1223 = vmatmul.mubr.f32.gmra.mrb[0].mxu0 %v352
        %v1224 = vpop.f32.mrb[0].mxu0
        %v1225 = vadd.f32 %v1000, %v1224
        %v1226 = vpop.f32.mrb[0].mxu0
        %1227 = vmatprep.mubr.f32.mxu0 %v596
        %1228 = vmatmul.mubr.f32.gmra.mrb[0].mxu0 %v358
        %v1229 = vpop.f32.mrb[0].mxu0
        %v1230 = vadd.f32 %v1005, %v1229
        %v1231 = vpop.f32.mrb[0].mxu0
        %1232 = vmatprep.mubr.f32.mxu0 %v599
        %1233 = vmatmul.mubr.f32.gmra.mrb[0].mxu0 %v364
        %v1234 = vpop.f32.mrb[0].mxu0
        %v1235 = vadd.f32 %v1010, %v1234
        %v1236 = vpop.f32.mrb[0].mxu0
        %1237 = vmatprep.mubr.f32.mxu0 %v602
        %1238 = vmatmul.mubr.f32.gmra.mrb[0].mxu0 %v370
        %v1239 = vpop.f32.mrb[0].mxu0
        %v1240 = vadd.f32 %v1015, %v1239
        %v1241 = vpop.f32.mrb[0].mxu0
        %1242 = vmatprep.mubr.f32.mxu0 %v605
        %1243 = vmatmul.mubr.f32.gmra.mrb[0].mxu0 %v376
        %v1244 = vpop.f32.mrb[0].mxu0
        %v1245 = vadd.f32 %v1020, %v1244
        %v1246 = vpop.f32.mrb[0].mxu0
        %1247 = vmatprep.mubr.f32.mxu0 %v608
        %1248 = vmatmul.mubr.f32.gmra.mrb[0].mxu0 %v382
        %v1249 = vpop.f32.mrb[0].mxu0
        %v1250 = vadd.f32 %v1025, %v1249
        %v1251 = vpop.f32.mrb[0].mxu0
        %1252 = vmatprep.mubr.f32.mxu0 %v611
        %1253 = vmatmul.mubr.f32.gmra.mrb[0].mxu0 %v388
        %v1254 = vpop.f32.mrb[0].mxu0
        %v1255 = vadd.f32 %v1030, %v1254
        %v1256 = vpop.f32.mrb[0].mxu0
        %1257 = vmatprep.mubr.f32.mxu0 %v614
        %1258 = vmatmul.mubr.f32.gmra.mrb[0].mxu0 %v394
        %v1259 = vpop.f32.mrb[0].mxu0
        %v1260 = vadd.f32 %v1035, %v1259
        %v1261 = vpop.f32.mrb[0].mxu0
        %1262 = vmatprep.mubr.f32.mxu0 %v617
        %1263 = vmatmul.mubr.f32.gmra.mrb[0].mxu0 %v400
        %v1264 = vpop.f32.mrb[0].mxu0
        %v1265 = vadd.f32 %v1040, %v1264
        %v1266 = vpop.f32.mrb[0].mxu0
        %1267 = vmatprep.mubr.f32.mxu0 %v620
        %1268 = vmatmul.mubr.f32.gmra.mrb[0].mxu0 %v406
        %v1269 = vpop.f32.mrb[0].mxu0
        %v1270 = vadd.f32 %v1045, %v1269
        %v1271 = vpop.f32.mrb[0].mxu0
        %1272 = vmatprep.mubr.f32.mxu0 %v623
        %1273 = vmatmul.mubr.f32.gmra.mrb[0].mxu0 %v412
        %v1274 = vpop.f32.mrb[0].mxu0
        %v1275 = vadd.f32 %v1050, %v1274
        %v1276 = vpop.f32.mrb[0].mxu0
        %1277 = vmatprep.mubr.f32.mxu0 %v626
        %1278 = vmatmul.mubr.f32.gmra.mrb[0].mxu0 %v418
        %v1279 = vpop.f32.mrb[0].mxu0
        %v1280 = vadd.f32 %v1055, %v1279
        %v1281 = vpop.f32.mrb[0].mxu0
        %1282 = vmatprep.mubr.f32.mxu0 %v629
        %1283 = vmatmul.mubr.f32.gmra.mrb[0].mxu0 %v424
        %v1284 = vpop.f32.mrb[0].mxu0
        %v1285 = vadd.f32 %v1060, %v1284
        %v1286 = vpop.f32.mrb[0].mxu0
        %1287 = vmatprep.mubr.f32.mxu0 %v632
        %1288 = vmatmul.mubr.f32.gmra.mrb[0].mxu0 %v430
        %v1289 = vpop.f32.mrb[0].mxu0
        %v1290 = vadd.f32 %v1065, %v1289
        %v1291 = vpop.f32.mrb[0].mxu0
        %1292 = vmatprep.mubr.f32.mxu0 %v635
        %1293 = vmatmul.mubr.f32.gmra.mrb[0].mxu0 %v436
        %v1294 = vpop.f32.mrb[0].mxu0
        %v1295 = vadd.f32 %v1070, %v1294
        %v1296 = vpop.f32.mrb[0].mxu0
        %1297 = vmatprep.mubr.f32.mxu0 %v638
        %1298 = vmatmul.mubr.f32.gmra.mrb[0].mxu0 %v442
        %v1299 = vpop.f32.mrb[0].mxu0
        %v1300 = vadd.f32 %v1075, %v1299
        %v1301 = vpop.f32.mrb[0].mxu0
        %1302 = vmatprep.mubr.f32.mxu0 %v641
        %1303 = vmatmul.mubr.f32.gmra.mrb[0].mxu0 %v448
        %v1304 = vpop.f32.mrb[0].mxu0
        %v1305 = vadd.f32 %v1080, %v1304
        %v1306 = vpop.f32.mrb[0].mxu0
        %1307 = vmatprep.mubr.f32.mxu0 %v644
        %1308 = vmatmul.mubr.f32.gmra.mrb[0].mxu0 %v454
        %v1309 = vpop.f32.mrb[0].mxu0
        %v1310 = vadd.f32 %v1085, %v1309
        %v1311 = vpop.f32.mrb[0].mxu0
        %1312 = vmatprep.mubr.f32.mxu0 %v647
        %1313 = vmatmul.mubr.f32.gmra.mrb[0].mxu0 %v460
        %v1314 = vpop.f32.mrb[0].mxu0
        %v1315 = vadd.f32 %v1090, %v1314
        %v1316 = vpop.f32.mrb[0].mxu0
        %1317 = vmatprep.mubr.f32.mxu0 %v650
        %1318 = vmatmul.mubr.f32.gmra.mrb[0].mxu0 %v466
        %v1319 = vpop.f32.mrb[0].mxu0
        %v1320 = vadd.f32 %v1095, %v1319
        %v1321 = vpop.f32.mrb[0].mxu0
        %1322 = vmatprep.mubr.f32.mxu0 %v653
        %1323 = vmatmul.mubr.f32.gmra.mrb[0].mxu0 %v472
        %v1324 = vpop.f32.mrb[0].mxu0
        %v1325 = vadd.f32 %v1100, %v1324
        %v1326 = vpop.f32.mrb[0].mxu0
        %1327 = vmatprep.mubr.f32.mxu0 %v656
        %1328 = vmatmul.mubr.f32.gmra.mrb[0].mxu0 %v478
        %v1329 = vpop.f32.mrb[0].mxu0
        %v1330 = vadd.f32 %v1105, %v1329
        %v1331 = vpop.f32.mrb[0].mxu0
        %1332 = vdwg.mxu0
        %v1333 = vld [vmem:[%s285] sm:$0xff]
        %v1334 = vld [vmem:[%s285 + $0x8] sm:$0xff]
        %v1335 = vld [vmem:[%s285 + $0x10] sm:$0x3]
        %v1336 = vld [vmem:[%s285 + $0x18] sm:$0xff]
        %v1337 = vld [vmem:[%s285 + $0x20] sm:$0xff]
        %v1338 = vld [vmem:[%s285 + $0x28] sm:$0x3]
        %v1339 = vld [vmem:[%s285 + $0x30] sm:$0xff]
        %v1340 = vld [vmem:[%s285 + $0x38] sm:$0xff]
        %v1341 = vld [vmem:[%s285 + $0x40] sm:$0x3]
        %v1342 = vld [vmem:[%s285 + $0x48] sm:$0xff]
        %v1343 = vld [vmem:[%s285 + $0x50] sm:$0xff]
        %v1344 = vld [vmem:[%s285 + $0x58] sm:$0x3]
        %v1345 = vld [vmem:[%s285 + $0x60] sm:$0xff]
        %v1346 = vld [vmem:[%s285 + $0x68] sm:$0xff]
        %v1347 = vld [vmem:[%s285 + $0x70] sm:$0x3]
        %v1348 = vld [vmem:[%s285 + $0x78] sm:$0xff]
        %v1349 = vld [vmem:[%s285 + $0x80] sm:$0xff]
        %v1350 = vld [vmem:[%s285 + $0x88] sm:$0x3]
        %v1351 = vld [vmem:[%s285 + $0x90] sm:$0xff]
        %v1352 = vld [vmem:[%s285 + $0x98] sm:$0xff]
        %v1353 = vld [vmem:[%s285 + $0xa0] sm:$0x3]
        %v1354 = vld [vmem:[%s285 + $0xa8] sm:$0xff]
        %v1355 = vld [vmem:[%s285 + $0xb0] sm:$0xff]
        %v1356 = vld [vmem:[%s285 + $0xb8] sm:$0x3]
        %v1357 = vld [vmem:[%s285 + $0xc0] sm:$0xff]
        %v1358 = vld [vmem:[%s285 + $0xc8] sm:$0xff]
        %v1359 = vld [vmem:[%s285 + $0xd0] sm:$0x3]
        %v1360 = vld [vmem:[%s285 + $0xd8] sm:$0xff]
        %v1361 = vld [vmem:[%s285 + $0xe0] sm:$0xff]
        %v1362 = vld [vmem:[%s285 + $0xe8] sm:$0x3]
        %v1363 = vld [vmem:[%s285 + $0xf0] sm:$0xff]
        %v1364 = vld [vmem:[%s285 + $0xf8] sm:$0xff]
        %v1365 = vld [vmem:[%s285 + $0x100] sm:$0x3]
        %v1366 = vld [vmem:[%s285 + $0x108] sm:$0xff]
        %v1367 = vld [vmem:[%s285 + $0x110] sm:$0xff]
        %v1368 = vld [vmem:[%s285 + $0x118] sm:$0x3]
        %v1369 = vld [vmem:[%s285 + $0x120] sm:$0xff]
        %v1370 = vld [vmem:[%s285 + $0x128] sm:$0xff]
        %v1371 = vld [vmem:[%s285 + $0x130] sm:$0x3]
        %v1372 = vld [vmem:[%s285 + $0x138] sm:$0xff]
        %v1373 = vld [vmem:[%s285 + $0x140] sm:$0xff]
        %v1374 = vld [vmem:[%s285 + $0x148] sm:$0x3]
        %v1375 = vld [vmem:[%s285 + $0x150] sm:$0xff]
        %v1376 = vld [vmem:[%s285 + $0x158] sm:$0xff]
        %v1377 = vld [vmem:[%s285 + $0x160] sm:$0x3]
        %v1378 = vld [vmem:[%s285 + $0x168] sm:$0xff]
        %v1379 = vld [vmem:[%s285 + $0x170] sm:$0xff]
        %v1380 = vld [vmem:[%s285 + $0x178] sm:$0x3]
        %v1381 = vld [vmem:[%s285 + $0x180] sm:$0xff]
        %v1382 = vld [vmem:[%s285 + $0x188] sm:$0xff]
        %v1383 = vld [vmem:[%s285 + $0x190] sm:$0x3]
        %v1384 = vld [vmem:[%s285 + $0x198] sm:$0xff]
        %v1385 = vld [vmem:[%s285 + $0x1a0] sm:$0xff]
        %v1386 = vld [vmem:[%s285 + $0x1a8] sm:$0x3]
        %vm1435 = vcmask 1046528
        %v1436 = vrot.slane %v1333, 1
        %v1437 = vrot.slane %v1334, 1
        %v1438 = vsel %vm1435, %v1436, %v1437
        %v1439 = vrot.slane %v1335, 1
        %v1440 = vsel %vm1435, %v1437, %v1439
        %v1441 = vrot.slane %v1336, 1
        %v1442 = vrot.slane %v1337, 1
        %v1443 = vsel %vm1435, %v1441, %v1442
        %v1444 = vrot.slane %v1338, 1
        %v1445 = vsel %vm1435, %v1442, %v1444
        %v1446 = vrot.slane %v1339, 1
        %v1447 = vrot.slane %v1340, 1
        %v1448 = vsel %vm1435, %v1446, %v1447
        %v1449 = vrot.slane %v1341, 1
        %v1450 = vsel %vm1435, %v1447, %v1449
        %v1451 = vrot.slane %v1342, 1
        %v1452 = vrot.slane %v1343, 1
        %v1453 = vsel %vm1435, %v1451, %v1452
        %v1454 = vrot.slane %v1344, 1
        %v1455 = vsel %vm1435, %v1452, %v1454
        %v1456 = vrot.slane %v1345, 1
        %v1457 = vrot.slane %v1346, 1
        %v1458 = vsel %vm1435, %v1456, %v1457
        %v1459 = vrot.slane %v1347, 1
        %v1460 = vsel %vm1435, %v1457, %v1459
        %v1461 = vrot.slane %v1348, 1
        %v1462 = vrot.slane %v1349, 1
        %v1463 = vsel %vm1435, %v1461, %v1462
        %v1464 = vrot.slane %v1350, 1
        %v1465 = vsel %vm1435, %v1462, %v1464
        %v1466 = vrot.slane %v1351, 1
        %v1467 = vrot.slane %v1352, 1
        %v1468 = vsel %vm1435, %v1466, %v1467
        %v1469 = vrot.slane %v1353, 1
        %v1470 = vsel %vm1435, %v1467, %v1469
        %v1471 = vrot.slane %v1354, 1
        %v1472 = vrot.slane %v1355, 1
        %v1473 = vsel %vm1435, %v1471, %v1472
        %v1474 = vrot.slane %v1356, 1
        %v1475 = vsel %vm1435, %v1472, %v1474
        %v1476 = vrot.slane %v1357, 1
        %v1477 = vrot.slane %v1358, 1
        %v1478 = vsel %vm1435, %v1476, %v1477
        %v1479 = vrot.slane %v1359, 1
        %v1480 = vsel %vm1435, %v1477, %v1479
        %v1481 = vrot.slane %v1360, 1
        %v1482 = vrot.slane %v1361, 1
        %v1483 = vsel %vm1435, %v1481, %v1482
        %v1484 = vrot.slane %v1362, 1
        %v1485 = vsel %vm1435, %v1482, %v1484
        %v1486 = vrot.slane %v1363, 1
        %v1487 = vrot.slane %v1364, 1
        %v1488 = vsel %vm1435, %v1486, %v1487
        %v1489 = vrot.slane %v1365, 1
        %v1490 = vsel %vm1435, %v1487, %v1489
        %v1491 = vrot.slane %v1366, 1
        %v1492 = vrot.slane %v1367, 1
        %v1493 = vsel %vm1435, %v1491, %v1492
        %v1494 = vrot.slane %v1368, 1
        %v1495 = vsel %vm1435, %v1492, %v1494
        %v1496 = vrot.slane %v1369, 1
        %v1497 = vrot.slane %v1370, 1
        %v1498 = vsel %vm1435, %v1496, %v1497
        %v1499 = vrot.slane %v1371, 1
        %v1500 = vsel %vm1435, %v1497, %v1499
        %v1501 = vrot.slane %v1372, 1
        %v1502 = vrot.slane %v1373, 1
        %v1503 = vsel %vm1435, %v1501, %v1502
        %v1504 = vrot.slane %v1374, 1
        %v1505 = vsel %vm1435, %v1502, %v1504
        %v1506 = vrot.slane %v1375, 1
        %v1507 = vrot.slane %v1376, 1
        %v1508 = vsel %vm1435, %v1506, %v1507
        %v1509 = vrot.slane %v1377, 1
        %v1510 = vsel %vm1435, %v1507, %v1509
        %v1511 = vrot.slane %v1378, 1
        %v1512 = vrot.slane %v1379, 1
        %v1513 = vsel %vm1435, %v1511, %v1512
        %v1514 = vrot.slane %v1380, 1
        %v1515 = vsel %vm1435, %v1512, %v1514
        %v1548 = vadd.f32 %v1333, %v1438
        %v1549 = vadd.f32 %v1334, %v1440
        %v1550 = vadd.f32 %v1336, %v1443
        %v1551 = vadd.f32 %v1337, %v1445
        %v1552 = vadd.f32 %v1339, %v1448
        %v1553 = vadd.f32 %v1340, %v1450
        %v1554 = vadd.f32 %v1342, %v1453
        %v1555 = vadd.f32 %v1343, %v1455
        %v1556 = vadd.f32 %v1345, %v1458
        %v1557 = vadd.f32 %v1346, %v1460
        %v1558 = vadd.f32 %v1348, %v1463
        %v1559 = vadd.f32 %v1349, %v1465
        %v1560 = vadd.f32 %v1351, %v1468
        %v1561 = vadd.f32 %v1352, %v1470
        %v1562 = vadd.f32 %v1354, %v1473
        %v1563 = vadd.f32 %v1355, %v1475
        %v1564 = vadd.f32 %v1357, %v1478
        %v1565 = vadd.f32 %v1358, %v1480
        %v1566 = vadd.f32 %v1360, %v1483
        %v1567 = vadd.f32 %v1361, %v1485
        %v1568 = vadd.f32 %v1363, %v1488
        %v1569 = vadd.f32 %v1364, %v1490
        %v1570 = vadd.f32 %v1366, %v1493
        %v1571 = vadd.f32 %v1367, %v1495
        %v1572 = vadd.f32 %v1369, %v1498
        %v1573 = vadd.f32 %v1370, %v1500
        %v1574 = vadd.f32 %v1372, %v1503
        %v1575 = vadd.f32 %v1373, %v1505
        %v1576 = vadd.f32 %v1375, %v1508
        %v1577 = vadd.f32 %v1376, %v1510
        %v1578 = vadd.f32 %v1378, %v1513
        %v1579 = vadd.f32 %v1379, %v1515
        %vm1580 = vcmask 1045504
        %v1581 = vrot.slane %v1333, 2
        %v1582 = vrot.slane %v1334, 2
        %v1583 = vsel %vm1580, %v1581, %v1582
        %v1584 = vrot.slane %v1335, 2
        %v1585 = vsel %vm1580, %v1582, %v1584
        %v1586 = vrot.slane %v1336, 2
        %v1587 = vrot.slane %v1337, 2
        %v1588 = vsel %vm1580, %v1586, %v1587
        %v1589 = vrot.slane %v1338, 2
        %v1590 = vsel %vm1580, %v1587, %v1589
        %v1591 = vrot.slane %v1339, 2
        %v1592 = vrot.slane %v1340, 2
        %v1593 = vsel %vm1580, %v1591, %v1592
        %v1594 = vrot.slane %v1341, 2
        %v1595 = vsel %vm1580, %v1592, %v1594
        %v1596 = vrot.slane %v1342, 2
        %v1597 = vrot.slane %v1343, 2
        %v1598 = vsel %vm1580, %v1596, %v1597
        %v1599 = vrot.slane %v1344, 2
        %v1600 = vsel %vm1580, %v1597, %v1599
        %v1601 = vrot.slane %v1345, 2
        %v1602 = vrot.slane %v1346, 2
        %v1603 = vsel %vm1580, %v1601, %v1602
        %v1604 = vrot.slane %v1347, 2
        %v1605 = vsel %vm1580, %v1602, %v1604
        %v1606 = vrot.slane %v1348, 2
        %v1607 = vrot.slane %v1349, 2
        %v1608 = vsel %vm1580, %v1606, %v1607
        %v1609 = vrot.slane %v1350, 2
        %v1610 = vsel %vm1580, %v1607, %v1609
        %v1611 = vrot.slane %v1351, 2
        %v1612 = vrot.slane %v1352, 2
        %v1613 = vsel %vm1580, %v1611, %v1612
        %v1614 = vrot.slane %v1353, 2
        %v1615 = vsel %vm1580, %v1612, %v1614
        %v1616 = vrot.slane %v1354, 2
        %v1617 = vrot.slane %v1355, 2
        %v1618 = vsel %vm1580, %v1616, %v1617
        %v1619 = vrot.slane %v1356, 2
        %v1620 = vsel %vm1580, %v1617, %v1619
        %v1621 = vrot.slane %v1357, 2
        %v1622 = vrot.slane %v1358, 2
        %v1623 = vsel %vm1580, %v1621, %v1622
        %v1624 = vrot.slane %v1359, 2
        %v1625 = vsel %vm1580, %v1622, %v1624
        %v1626 = vrot.slane %v1360, 2
        %v1627 = vrot.slane %v1361, 2
        %v1628 = vsel %vm1580, %v1626, %v1627
        %v1629 = vrot.slane %v1362, 2
        %v1630 = vsel %vm1580, %v1627, %v1629
        %v1631 = vrot.slane %v1363, 2
        %v1632 = vrot.slane %v1364, 2
        %v1633 = vsel %vm1580, %v1631, %v1632
        %v1634 = vrot.slane %v1365, 2
        %v1635 = vsel %vm1580, %v1632, %v1634
        %v1636 = vrot.slane %v1366, 2
        %v1637 = vrot.slane %v1367, 2
        %v1638 = vsel %vm1580, %v1636, %v1637
        %v1639 = vrot.slane %v1368, 2
        %v1640 = vsel %vm1580, %v1637, %v1639
        %v1641 = vrot.slane %v1369, 2
        %v1642 = vrot.slane %v1370, 2
        %v1643 = vsel %vm1580, %v1641, %v1642
        %v1644 = vrot.slane %v1371, 2
        %v1645 = vsel %vm1580, %v1642, %v1644
        %v1646 = vrot.slane %v1372, 2
        %v1647 = vrot.slane %v1373, 2
        %v1648 = vsel %vm1580, %v1646, %v1647
        %v1649 = vrot.slane %v1374, 2
        %v1650 = vsel %vm1580, %v1647, %v1649
        %v1651 = vrot.slane %v1375, 2
        %v1652 = vrot.slane %v1376, 2
        %v1653 = vsel %vm1580, %v1651, %v1652
        %v1654 = vrot.slane %v1377, 2
        %v1655 = vsel %vm1580, %v1652, %v1654
        %v1656 = vrot.slane %v1378, 2
        %v1657 = vrot.slane %v1379, 2
        %v1658 = vsel %vm1580, %v1656, %v1657
        %v1659 = vrot.slane %v1380, 2
        %v1660 = vsel %vm1580, %v1657, %v1659
        %v1693 = vadd.f32 %v1548, %v1583
        %v1694 = vadd.f32 %v1549, %v1585
        %v1695 = vadd.f32 %v1550, %v1588
        %v1696 = vadd.f32 %v1551, %v1590
        %v1697 = vadd.f32 %v1552, %v1593
        %v1698 = vadd.f32 %v1553, %v1595
        %v1699 = vadd.f32 %v1554, %v1598
        %v1700 = vadd.f32 %v1555, %v1600
        %v1701 = vadd.f32 %v1556, %v1603
        %v1702 = vadd.f32 %v1557, %v1605
        %v1703 = vadd.f32 %v1558, %v1608
        %v1704 = vadd.f32 %v1559, %v1610
        %v1705 = vadd.f32 %v1560, %v1613
        %v1706 = vadd.f32 %v1561, %v1615
        %v1707 = vadd.f32 %v1562, %v1618
        %v1708 = vadd.f32 %v1563, %v1620
        %v1709 = vadd.f32 %v1564, %v1623
        %v1710 = vadd.f32 %v1565, %v1625
        %v1711 = vadd.f32 %v1566, %v1628
        %v1712 = vadd.f32 %v1567, %v1630
        %v1713 = vadd.f32 %v1568, %v1633
        %v1714 = vadd.f32 %v1569, %v1635
        %v1715 = vadd.f32 %v1570, %v1638
        %v1716 = vadd.f32 %v1571, %v1640
        %v1717 = vadd.f32 %v1572, %v1643
        %v1718 = vadd.f32 %v1573, %v1645
        %v1719 = vadd.f32 %v1574, %v1648
        %v1720 = vadd.f32 %v1575, %v1650
        %v1721 = vadd.f32 %v1576, %v1653
        %v1722 = vadd.f32 %v1577, %v1655
        %v1723 = vadd.f32 %v1578, %v1658
        %v1724 = vadd.f32 %v1579, %v1660
        %v1725 = vadd.f32 %v1693, %v1336
        %v1726 = vadd.f32 %v1694, %v1337
        %v1727 = vadd.f32 %v1695, %v1339
        %v1728 = vadd.f32 %v1696, %v1340
        %v1729 = vadd.f32 %v1697, %v1342
        %v1730 = vadd.f32 %v1698, %v1343
        %v1731 = vadd.f32 %v1699, %v1345
        %v1732 = vadd.f32 %v1700, %v1346
        %v1733 = vadd.f32 %v1701, %v1348
        %v1734 = vadd.f32 %v1702, %v1349
        %v1735 = vadd.f32 %v1703, %v1351
        %v1736 = vadd.f32 %v1704, %v1352
        %v1737 = vadd.f32 %v1705, %v1354
        %v1738 = vadd.f32 %v1706, %v1355
        %v1739 = vadd.f32 %v1707, %v1357
        %v1740 = vadd.f32 %v1708, %v1358
        %v1741 = vadd.f32 %v1709, %v1360
        %v1742 = vadd.f32 %v1710, %v1361
        %v1743 = vadd.f32 %v1711, %v1363
        %v1744 = vadd.f32 %v1712, %v1364
        %v1745 = vadd.f32 %v1713, %v1366
        %v1746 = vadd.f32 %v1714, %v1367
        %v1747 = vadd.f32 %v1715, %v1369
        %v1748 = vadd.f32 %v1716, %v1370
        %v1749 = vadd.f32 %v1717, %v1372
        %v1750 = vadd.f32 %v1718, %v1373
        %v1751 = vadd.f32 %v1719, %v1375
        %v1752 = vadd.f32 %v1720, %v1376
        %v1753 = vadd.f32 %v1721, %v1378
        %v1754 = vadd.f32 %v1722, %v1379
        %v1755 = vadd.f32 %v1723, %v1381
        %v1756 = vadd.f32 %v1724, %v1382
        %v1760 = vrot.slane %v1381, 1
        %v1761 = vrot.slane %v1382, 1
        %v1762 = vsel %vm1435, %v1760, %v1761
        %v1763 = vrot.slane %v1383, 1
        %v1764 = vsel %vm1435, %v1761, %v1763
        %v1767 = vadd.f32 %v1725, %v1443
        %v1768 = vadd.f32 %v1726, %v1445
        %v1769 = vadd.f32 %v1727, %v1448
        %v1770 = vadd.f32 %v1728, %v1450
        %v1771 = vadd.f32 %v1729, %v1453
        %v1772 = vadd.f32 %v1730, %v1455
        %v1773 = vadd.f32 %v1731, %v1458
        %v1774 = vadd.f32 %v1732, %v1460
        %v1775 = vadd.f32 %v1733, %v1463
        %v1776 = vadd.f32 %v1734, %v1465
        %v1777 = vadd.f32 %v1735, %v1468
        %v1778 = vadd.f32 %v1736, %v1470
        %v1779 = vadd.f32 %v1737, %v1473
        %v1780 = vadd.f32 %v1738, %v1475
        %v1781 = vadd.f32 %v1739, %v1478
        %v1782 = vadd.f32 %v1740, %v1480
        %v1783 = vadd.f32 %v1741, %v1483
        %v1784 = vadd.f32 %v1742, %v1485
        %v1785 = vadd.f32 %v1743, %v1488
        %v1786 = vadd.f32 %v1744, %v1490
        %v1787 = vadd.f32 %v1745, %v1493
        %v1788 = vadd.f32 %v1746, %v1495
        %v1789 = vadd.f32 %v1747, %v1498
        %v1790 = vadd.f32 %v1748, %v1500
        %v1791 = vadd.f32 %v1749, %v1503
        %v1792 = vadd.f32 %v1750, %v1505
        %v1793 = vadd.f32 %v1751, %v1508
        %v1794 = vadd.f32 %v1752, %v1510
        %v1795 = vadd.f32 %v1753, %v1513
        %v1796 = vadd.f32 %v1754, %v1515
        %v1797 = vadd.f32 %v1755, %v1762
        %v1798 = vadd.f32 %v1756, %v1764
        %v1799 = vrot.slane %v1381, 2
        %v1800 = vrot.slane %v1382, 2
        %v1801 = vsel %vm1580, %v1799, %v1800
        %v1802 = vrot.slane %v1383, 2
        %v1803 = vsel %vm1580, %v1800, %v1802
        %v1806 = vadd.f32 %v1767, %v1588
        %v1807 = vadd.f32 %v1768, %v1590
        %v1808 = vadd.f32 %v1769, %v1593
        %v1809 = vadd.f32 %v1770, %v1595
        %v1810 = vadd.f32 %v1771, %v1598
        %v1811 = vadd.f32 %v1772, %v1600
        %v1812 = vadd.f32 %v1773, %v1603
        %v1813 = vadd.f32 %v1774, %v1605
        %v1814 = vadd.f32 %v1775, %v1608
        %v1815 = vadd.f32 %v1776, %v1610
        %v1816 = vadd.f32 %v1777, %v1613
        %v1817 = vadd.f32 %v1778, %v1615
        %v1818 = vadd.f32 %v1779, %v1618
        %v1819 = vadd.f32 %v1780, %v1620
        %v1820 = vadd.f32 %v1781, %v1623
        %v1821 = vadd.f32 %v1782, %v1625
        %v1822 = vadd.f32 %v1783, %v1628
        %v1823 = vadd.f32 %v1784, %v1630
        %v1824 = vadd.f32 %v1785, %v1633
        %v1825 = vadd.f32 %v1786, %v1635
        %v1826 = vadd.f32 %v1787, %v1638
        %v1827 = vadd.f32 %v1788, %v1640
        %v1828 = vadd.f32 %v1789, %v1643
        %v1829 = vadd.f32 %v1790, %v1645
        %v1830 = vadd.f32 %v1791, %v1648
        %v1831 = vadd.f32 %v1792, %v1650
        %v1832 = vadd.f32 %v1793, %v1653
        %v1833 = vadd.f32 %v1794, %v1655
        %v1834 = vadd.f32 %v1795, %v1658
        %v1835 = vadd.f32 %v1796, %v1660
        %v1836 = vadd.f32 %v1797, %v1801
        %v1837 = vadd.f32 %v1798, %v1803
        %v1838 = vadd.f32 %v1806, %v1339
        %v1839 = vadd.f32 %v1807, %v1340
        %v1840 = vadd.f32 %v1808, %v1342
        %v1841 = vadd.f32 %v1809, %v1343
        %v1842 = vadd.f32 %v1810, %v1345
        %v1843 = vadd.f32 %v1811, %v1346
        %v1844 = vadd.f32 %v1812, %v1348
        %v1845 = vadd.f32 %v1813, %v1349
        %v1846 = vadd.f32 %v1814, %v1351
        %v1847 = vadd.f32 %v1815, %v1352
        %v1848 = vadd.f32 %v1816, %v1354
        %v1849 = vadd.f32 %v1817, %v1355
        %v1850 = vadd.f32 %v1818, %v1357
        %v1851 = vadd.f32 %v1819, %v1358
        %v1852 = vadd.f32 %v1820, %v1360
        %v1853 = vadd.f32 %v1821, %v1361
        %v1854 = vadd.f32 %v1822, %v1363
        %v1855 = vadd.f32 %v1823, %v1364
        %v1856 = vadd.f32 %v1824, %v1366
        %v1857 = vadd.f32 %v1825, %v1367
        %v1858 = vadd.f32 %v1826, %v1369
        %v1859 = vadd.f32 %v1827, %v1370
        %v1860 = vadd.f32 %v1828, %v1372
        %v1861 = vadd.f32 %v1829, %v1373
        %v1862 = vadd.f32 %v1830, %v1375
        %v1863 = vadd.f32 %v1831, %v1376
        %v1864 = vadd.f32 %v1832, %v1378
        %v1865 = vadd.f32 %v1833, %v1379
        %v1866 = vadd.f32 %v1834, %v1381
        %v1867 = vadd.f32 %v1835, %v1382
        %v1868 = vadd.f32 %v1836, %v1384
        %v1869 = vadd.f32 %v1837, %v1385
        %v1873 = vrot.slane %v1384, 1
        %v1874 = vrot.slane %v1385, 1
        %v1875 = vsel %vm1435, %v1873, %v1874
        %v1876 = vrot.slane %v1386, 1
        %v1877 = vsel %vm1435, %v1874, %v1876
        %v1880 = vadd.f32 %v1838, %v1448
        %v1881 = vadd.f32 %v1839, %v1450
        %v1882 = vadd.f32 %v1840, %v1453
        %v1883 = vadd.f32 %v1841, %v1455
        %v1884 = vadd.f32 %v1842, %v1458
        %v1885 = vadd.f32 %v1843, %v1460
        %v1886 = vadd.f32 %v1844, %v1463
        %v1887 = vadd.f32 %v1845, %v1465
        %v1888 = vadd.f32 %v1846, %v1468
        %v1889 = vadd.f32 %v1847, %v1470
        %v1890 = vadd.f32 %v1848, %v1473
        %v1891 = vadd.f32 %v1849, %v1475
        %v1892 = vadd.f32 %v1850, %v1478
        %v1893 = vadd.f32 %v1851, %v1480
        %v1894 = vadd.f32 %v1852, %v1483
        %v1895 = vadd.f32 %v1853, %v1485
        %v1896 = vadd.f32 %v1854, %v1488
        %v1897 = vadd.f32 %v1855, %v1490
        %v1898 = vadd.f32 %v1856, %v1493
        %v1899 = vadd.f32 %v1857, %v1495
        %v1900 = vadd.f32 %v1858, %v1498
        %v1901 = vadd.f32 %v1859, %v1500
        %v1902 = vadd.f32 %v1860, %v1503
        %v1903 = vadd.f32 %v1861, %v1505
        %v1904 = vadd.f32 %v1862, %v1508
        %v1905 = vadd.f32 %v1863, %v1510
        %v1906 = vadd.f32 %v1864, %v1513
        %v1907 = vadd.f32 %v1865, %v1515
        %v1908 = vadd.f32 %v1866, %v1762
        %v1909 = vadd.f32 %v1867, %v1764
        %v1910 = vadd.f32 %v1868, %v1875
        %v1911 = vadd.f32 %v1869, %v1877
        %v1912 = vrot.slane %v1384, 2
        %v1913 = vrot.slane %v1385, 2
        %v1914 = vsel %vm1580, %v1912, %v1913
        %v1915 = vrot.slane %v1386, 2
        %v1916 = vsel %vm1580, %v1913, %v1915
        %v1919 = vadd.f32 %v1880, %v1593
        %v1920 = vadd.f32 %v1881, %v1595
        %v1921 = vadd.f32 %v1882, %v1598
        %v1922 = vadd.f32 %v1883, %v1600
        %v1923 = vadd.f32 %v1884, %v1603
        %v1924 = vadd.f32 %v1885, %v1605
        %v1925 = vadd.f32 %v1886, %v1608
        %v1926 = vadd.f32 %v1887, %v1610
        %v1927 = vadd.f32 %v1888, %v1613
        %v1928 = vadd.f32 %v1889, %v1615
        %v1929 = vadd.f32 %v1890, %v1618
        %v1930 = vadd.f32 %v1891, %v1620
        %v1931 = vadd.f32 %v1892, %v1623
        %v1932 = vadd.f32 %v1893, %v1625
        %v1933 = vadd.f32 %v1894, %v1628
        %v1934 = vadd.f32 %v1895, %v1630
        %v1935 = vadd.f32 %v1896, %v1633
        %v1936 = vadd.f32 %v1897, %v1635
        %v1937 = vadd.f32 %v1898, %v1638
        %v1938 = vadd.f32 %v1899, %v1640
        %v1939 = vadd.f32 %v1900, %v1643
        %v1940 = vadd.f32 %v1901, %v1645
        %v1941 = vadd.f32 %v1902, %v1648
        %v1942 = vadd.f32 %v1903, %v1650
        %v1943 = vadd.f32 %v1904, %v1653
        %v1944 = vadd.f32 %v1905, %v1655
        %v1945 = vadd.f32 %v1906, %v1658
        %v1946 = vadd.f32 %v1907, %v1660
        %v1947 = vadd.f32 %v1908, %v1801
        %v1948 = vadd.f32 %v1909, %v1803
        %v1949 = vadd.f32 %v1910, %v1914
        %v1950 = vadd.f32 %v1911, %v1916
        %v1951 = vld [vmem:[%s3] sm:$0xff]
        %v1952 = vld [vmem:[%s3 + $0x8] sm:$0xff]
        %v1953 = vld [vmem:[%s3 + $0x10] sm:$0xff]
        %v1954 = vld [vmem:[%s3 + $0x18] sm:$0xff]
        %v1955 = vld [vmem:[%s3 + $0x20] sm:$0xff]
        %v1956 = vld [vmem:[%s3 + $0x28] sm:$0xff]
        %v1957 = vld [vmem:[%s3 + $0x30] sm:$0xff]
        %v1958 = vld [vmem:[%s3 + $0x38] sm:$0xff]
        %v1959 = vld [vmem:[%s3 + $0x40] sm:$0xff]
        %vm1960 = vcmask 588800
        %v1962 = vsel %vm1960, %v1919, 0
        %v1965 = vsel %vm1960, %v1920, 0
        %v1968 = vsel %vm1960, %v1921, 0
        %v1971 = vsel %vm1960, %v1922, 0
        %v1974 = vsel %vm1960, %v1923, 0
        %v1977 = vsel %vm1960, %v1924, 0
        %v1980 = vsel %vm1960, %v1925, 0
        %v1983 = vsel %vm1960, %v1926, 0
        %v1986 = vsel %vm1960, %v1927, 0
        %v1989 = vsel %vm1960, %v1928, 0
        %v1992 = vsel %vm1960, %v1929, 0
        %v1995 = vsel %vm1960, %v1930, 0
        %v1998 = vsel %vm1960, %v1931, 0
        %v2001 = vsel %vm1960, %v1932, 0
        %v2004 = vsel %vm1960, %v1933, 0
        %v2007 = vsel %vm1960, %v1934, 0
        %v2010 = vsel %vm1960, %v1935, 0
        %v2013 = vsel %vm1960, %v1936, 0
        %v2016 = vsel %vm1960, %v1937, 0
        %v2019 = vsel %vm1960, %v1938, 0
        %v2022 = vsel %vm1960, %v1939, 0
        %v2025 = vsel %vm1960, %v1940, 0
        %v2028 = vsel %vm1960, %v1941, 0
        %v2031 = vsel %vm1960, %v1942, 0
        %v2034 = vsel %vm1960, %v1943, 0
        %v2037 = vsel %vm1960, %v1944, 0
        %v2040 = vsel %vm1960, %v1945, 0
        %v2043 = vsel %vm1960, %v1946, 0
        %v2046 = vsel %vm1960, %v1947, 0
        %v2049 = vsel %vm1960, %v1948, 0
        %v2052 = vsel %vm1960, %v1949, 0
        %v2055 = vsel %vm1960, %v1950, 0
        %2057 = vmatprep.subr.mxu0 0.0
        %2058 = vmatpush1.msra.mxu0 %v1951
        %2059 = vmatprep.subr.mxu0 0.0
        %2060 = vmatpush1.msra.mxu0 %v1952
        %2061 = vmatprep.subr.mxu0 0.0
        %2062 = vmatpush1.msra.mxu0 %v1953
        %2063 = vmatprep.subr.mxu0 0.0
        %2064 = vmatpush1.msra.mxu0 %v1954
        %2065 = vmatprep.subr.mxu0 0.0
        %2066 = vmatpush1.msra.mxu0 %v1955
        %2067 = vmatprep.subr.mxu0 0.0
        %2068 = vmatpush1.msra.mxu0 %v1956
        %2069 = vmatprep.subr.mxu0 0.0
        %2070 = vmatpush1.msra.mxu0 %v1957
        %2071 = vmatprep.subr.mxu0 0.0
        %2072 = vmatpush1.msra.mxu0 %v1958
        %2073 = vmatprep.subr.mxu0 0.0
        %2074 = vmatpush1.msra.mxu0 %v1959
        %2075 = vmatprep.subr.mxu0 0.0
        %2076 = vmatpush1.msra.mxu0 0.0
        %2077 = vmatprep.subr.mxu0 0.0
        %2078 = vmatpush1.msra.mxu0 0.0
        %2079 = vmatprep.subr.mxu0 0.0
        %2080 = vmatpush1.msra.mxu0 0.0
        %2081 = vmatprep.subr.mxu0 0.0
        %2082 = vmatpush1.msra.mxu0 0.0
        %2083 = vmatprep.subr.mxu0 0.0
        %2084 = vmatpush1.msra.mxu0 0.0
        %2085 = vmatprep.subr.mxu0 0.0
        %2086 = vmatpush1.msra.mxu0 0.0
        %2087 = vmatprep.subr.mxu0 0.0
        %2088 = vmatpush1.msra.mxu0 0.0
        %2089 = vmatprep.subr.mxu0 0.0
        %2090 = vmatpush1.msra.mxu0 0.0
        %2091 = vmatprep.subr.mxu0 0.0
        %2092 = vmatpush1.msra.mxu0 0.0
        %2093 = vmatprep.subr.mxu0 0.0
        %2094 = vmatpush1.msra.mxu0 0.0
        %2095 = vmatprep.subr.mxu0 0.0
        %2096 = vmatpush1.msra.mxu0 0.0
        %2097 = vmatprep.subr.mxu0 0.0
        %2098 = vmatpush1.msra.mxu0 0.0
        %2099 = vmatprep.subr.mxu0 0.0
        %2100 = vmatpush1.msra.mxu0 0.0
        %2101 = vmatprep.subr.mxu0 0.0
        %2102 = vmatpush1.msra.mxu0 0.0
        %2103 = vmatprep.subr.mxu0 0.0
        %2104 = vmatpush1.msra.mxu0 0.0
        %2105 = vmatprep.subr.mxu0 0.0
        %2106 = vmatpush1.msra.mxu0 0.0
        %2107 = vmatprep.subr.mxu0 0.0
        %2108 = vmatpush1.msra.mxu0 0.0
        %2109 = vmatprep.subr.mxu0 0.0
        %2110 = vmatpush1.msra.mxu0 0.0
        %2111 = vmatprep.subr.mxu0 0.0
        %2112 = vmatpush1.msra.mxu0 0.0
        %2113 = vmatprep.subr.mxu0 0.0
        %2114 = vmatpush1.msra.mxu0 0.0
        %2115 = vmatprep.subr.mxu0 0.0
        %2116 = vmatpush1.msra.mxu0 0.0
        %2117 = vmatprep.subr.mxu0 0.0
        %2118 = vmatpush1.msra.mxu0 0.0
        %2119 = vmatprep.subr.mxu0 0.0
        %2120 = vmatpush1.msra.mxu0 0.0
        %2121 = vmatprep.mubr.f32.mxu0 0.0
        %2122 = vmatmul.mubr.f32.gmra.mrb[0].mxu0 %v1962
        %v2123 = vpop.f32.mrb[0].mxu0
        %v2124 = vadd.f32 0.0, %v2123
        %v2125 = vpop.f32.mrb[0].mxu0
        %2126 = vmatprep.mubr.f32.mxu0 0.0
        %2127 = vmatmul.mubr.f32.gmra.mrb[0].mxu0 %v1965
        %v2128 = vpop.f32.mrb[0].mxu0
        %v2129 = vadd.f32 0.0, %v2128
        %v2130 = vpop.f32.mrb[0].mxu0
        %2131 = vmatprep.mubr.f32.mxu0 0.0
        %2132 = vmatmul.mubr.f32.gmra.mrb[0].mxu0 %v1968
        %v2133 = vpop.f32.mrb[0].mxu0
        %v2134 = vadd.f32 0.0, %v2133
        %v2135 = vpop.f32.mrb[0].mxu0
        %2136 = vmatprep.mubr.f32.mxu0 0.0
        %2137 = vmatmul.mubr.f32.gmra.mrb[0].mxu0 %v1971
        %v2138 = vpop.f32.mrb[0].mxu0
        %v2139 = vadd.f32 0.0, %v2138
        %v2140 = vpop.f32.mrb[0].mxu0
        %2141 = vmatprep.mubr.f32.mxu0 0.0
        %2142 = vmatmul.mubr.f32.gmra.mrb[0].mxu0 %v1974
        %v2143 = vpop.f32.mrb[0].mxu0
        %v2144 = vadd.f32 0.0, %v2143
        %v2145 = vpop.f32.mrb[0].mxu0
        %2146 = vmatprep.mubr.f32.mxu0 0.0
        %2147 = vmatmul.mubr.f32.gmra.mrb[0].mxu0 %v1977
        %v2148 = vpop.f32.mrb[0].mxu0
        %v2149 = vadd.f32 0.0, %v2148
        %v2150 = vpop.f32.mrb[0].mxu0
        %2151 = vmatprep.mubr.f32.mxu0 0.0
        %2152 = vmatmul.mubr.f32.gmra.mrb[0].mxu0 %v1980
        %v2153 = vpop.f32.mrb[0].mxu0
        %v2154 = vadd.f32 0.0, %v2153
        %v2155 = vpop.f32.mrb[0].mxu0
        %2156 = vmatprep.mubr.f32.mxu0 0.0
        %2157 = vmatmul.mubr.f32.gmra.mrb[0].mxu0 %v1983
        %v2158 = vpop.f32.mrb[0].mxu0
        %v2159 = vadd.f32 0.0, %v2158
        %v2160 = vpop.f32.mrb[0].mxu0
        %2161 = vmatprep.mubr.f32.mxu0 0.0
        %2162 = vmatmul.mubr.f32.gmra.mrb[0].mxu0 %v1986
        %v2163 = vpop.f32.mrb[0].mxu0
        %v2164 = vadd.f32 0.0, %v2163
        %v2165 = vpop.f32.mrb[0].mxu0
        %2166 = vmatprep.mubr.f32.mxu0 0.0
        %2167 = vmatmul.mubr.f32.gmra.mrb[0].mxu0 %v1989
        %v2168 = vpop.f32.mrb[0].mxu0
        %v2169 = vadd.f32 0.0, %v2168
        %v2170 = vpop.f32.mrb[0].mxu0
        %2171 = vmatprep.mubr.f32.mxu0 0.0
        %2172 = vmatmul.mubr.f32.gmra.mrb[0].mxu0 %v1992
        %v2173 = vpop.f32.mrb[0].mxu0
        %v2174 = vadd.f32 0.0, %v2173
        %v2175 = vpop.f32.mrb[0].mxu0
        %2176 = vmatprep.mubr.f32.mxu0 0.0
        %2177 = vmatmul.mubr.f32.gmra.mrb[0].mxu0 %v1995
        %v2178 = vpop.f32.mrb[0].mxu0
        %v2179 = vadd.f32 0.0, %v2178
        %v2180 = vpop.f32.mrb[0].mxu0
        %2181 = vmatprep.mubr.f32.mxu0 0.0
        %2182 = vmatmul.mubr.f32.gmra.mrb[0].mxu0 %v1998
        %v2183 = vpop.f32.mrb[0].mxu0
        %v2184 = vadd.f32 0.0, %v2183
        %v2185 = vpop.f32.mrb[0].mxu0
        %2186 = vmatprep.mubr.f32.mxu0 0.0
        %2187 = vmatmul.mubr.f32.gmra.mrb[0].mxu0 %v2001
        %v2188 = vpop.f32.mrb[0].mxu0
        %v2189 = vadd.f32 0.0, %v2188
        %v2190 = vpop.f32.mrb[0].mxu0
        %2191 = vmatprep.mubr.f32.mxu0 0.0
        %2192 = vmatmul.mubr.f32.gmra.mrb[0].mxu0 %v2004
        %v2193 = vpop.f32.mrb[0].mxu0
        %v2194 = vadd.f32 0.0, %v2193
        %v2195 = vpop.f32.mrb[0].mxu0
        %2196 = vmatprep.mubr.f32.mxu0 0.0
        %2197 = vmatmul.mubr.f32.gmra.mrb[0].mxu0 %v2007
        %v2198 = vpop.f32.mrb[0].mxu0
        %v2199 = vadd.f32 0.0, %v2198
        %v2200 = vpop.f32.mrb[0].mxu0
        %2201 = vmatprep.mubr.f32.mxu0 0.0
        %2202 = vmatmul.mubr.f32.gmra.mrb[0].mxu0 %v2010
        %v2203 = vpop.f32.mrb[0].mxu0
        %v2204 = vadd.f32 0.0, %v2203
        %v2205 = vpop.f32.mrb[0].mxu0
        %2206 = vmatprep.mubr.f32.mxu0 0.0
        %2207 = vmatmul.mubr.f32.gmra.mrb[0].mxu0 %v2013
        %v2208 = vpop.f32.mrb[0].mxu0
        %v2209 = vadd.f32 0.0, %v2208
        %v2210 = vpop.f32.mrb[0].mxu0
        %2211 = vmatprep.mubr.f32.mxu0 0.0
        %2212 = vmatmul.mubr.f32.gmra.mrb[0].mxu0 %v2016
        %v2213 = vpop.f32.mrb[0].mxu0
        %v2214 = vadd.f32 0.0, %v2213
        %v2215 = vpop.f32.mrb[0].mxu0
        %2216 = vmatprep.mubr.f32.mxu0 0.0
        %2217 = vmatmul.mubr.f32.gmra.mrb[0].mxu0 %v2019
        %v2218 = vpop.f32.mrb[0].mxu0
        %v2219 = vadd.f32 0.0, %v2218
        %v2220 = vpop.f32.mrb[0].mxu0
        %2221 = vmatprep.mubr.f32.mxu0 0.0
        %2222 = vmatmul.mubr.f32.gmra.mrb[0].mxu0 %v2022
        %v2223 = vpop.f32.mrb[0].mxu0
        %v2224 = vadd.f32 0.0, %v2223
        %v2225 = vpop.f32.mrb[0].mxu0
        %2226 = vmatprep.mubr.f32.mxu0 0.0
        %2227 = vmatmul.mubr.f32.gmra.mrb[0].mxu0 %v2025
        %v2228 = vpop.f32.mrb[0].mxu0
        %v2229 = vadd.f32 0.0, %v2228
        %v2230 = vpop.f32.mrb[0].mxu0
        %2231 = vmatprep.mubr.f32.mxu0 0.0
        %2232 = vmatmul.mubr.f32.gmra.mrb[0].mxu0 %v2028
        %v2233 = vpop.f32.mrb[0].mxu0
        %v2234 = vadd.f32 0.0, %v2233
        %v2235 = vpop.f32.mrb[0].mxu0
        %2236 = vmatprep.mubr.f32.mxu0 0.0
        %2237 = vmatmul.mubr.f32.gmra.mrb[0].mxu0 %v2031
        %v2238 = vpop.f32.mrb[0].mxu0
        %v2239 = vadd.f32 0.0, %v2238
        %v2240 = vpop.f32.mrb[0].mxu0
        %2241 = vmatprep.mubr.f32.mxu0 0.0
        %2242 = vmatmul.mubr.f32.gmra.mrb[0].mxu0 %v2034
        %v2243 = vpop.f32.mrb[0].mxu0
        %v2244 = vadd.f32 0.0, %v2243
        %v2245 = vpop.f32.mrb[0].mxu0
        %2246 = vmatprep.mubr.f32.mxu0 0.0
        %2247 = vmatmul.mubr.f32.gmra.mrb[0].mxu0 %v2037
        %v2248 = vpop.f32.mrb[0].mxu0
        %v2249 = vadd.f32 0.0, %v2248
        %v2250 = vpop.f32.mrb[0].mxu0
        %2251 = vmatprep.mubr.f32.mxu0 0.0
        %2252 = vmatmul.mubr.f32.gmra.mrb[0].mxu0 %v2040
        %v2253 = vpop.f32.mrb[0].mxu0
        %v2254 = vadd.f32 0.0, %v2253
        %v2255 = vpop.f32.mrb[0].mxu0
        %2256 = vmatprep.mubr.f32.mxu0 0.0
        %2257 = vmatmul.mubr.f32.gmra.mrb[0].mxu0 %v2043
        %v2258 = vpop.f32.mrb[0].mxu0
        %v2259 = vadd.f32 0.0, %v2258
        %v2260 = vpop.f32.mrb[0].mxu0
        %2261 = vmatprep.mubr.f32.mxu0 0.0
        %2262 = vmatmul.mubr.f32.gmra.mrb[0].mxu0 %v2046
        %v2263 = vpop.f32.mrb[0].mxu0
        %v2264 = vadd.f32 0.0, %v2263
        %v2265 = vpop.f32.mrb[0].mxu0
        %2266 = vmatprep.mubr.f32.mxu0 0.0
        %2267 = vmatmul.mubr.f32.gmra.mrb[0].mxu0 %v2049
        %v2268 = vpop.f32.mrb[0].mxu0
        %v2269 = vadd.f32 0.0, %v2268
        %v2270 = vpop.f32.mrb[0].mxu0
        %2271 = vmatprep.mubr.f32.mxu0 0.0
        %2272 = vmatmul.mubr.f32.gmra.mrb[0].mxu0 %v2052
        %v2273 = vpop.f32.mrb[0].mxu0
        %v2274 = vadd.f32 0.0, %v2273
        %v2275 = vpop.f32.mrb[0].mxu0
        %2276 = vmatprep.mubr.f32.mxu0 0.0
        %2277 = vmatmul.mubr.f32.gmra.mrb[0].mxu0 %v2055
        %v2278 = vpop.f32.mrb[0].mxu0
        %v2279 = vadd.f32 0.0, %v2278
        %v2280 = vpop.f32.mrb[0].mxu0
        %2281 = vdwg.mxu0
        %v2282 = vmax.f32 %v2124, 0.0
        %v2283 = vmax.f32 %v2129, 0.0
        %v2284 = vmax.f32 %v2134, 0.0
        %v2285 = vmax.f32 %v2139, 0.0
        %v2286 = vmax.f32 %v2144, 0.0
        %v2287 = vmax.f32 %v2149, 0.0
        %v2288 = vmax.f32 %v2154, 0.0
        %v2289 = vmax.f32 %v2159, 0.0
        %v2290 = vmax.f32 %v2164, 0.0
        %v2291 = vmax.f32 %v2169, 0.0
        %v2292 = vmax.f32 %v2174, 0.0
        %v2293 = vmax.f32 %v2179, 0.0
        %v2294 = vmax.f32 %v2184, 0.0
        %v2295 = vmax.f32 %v2189, 0.0
        %v2296 = vmax.f32 %v2194, 0.0
        %v2297 = vmax.f32 %v2199, 0.0
        %v2298 = vmax.f32 %v2204, 0.0
        %v2299 = vmax.f32 %v2209, 0.0
        %v2300 = vmax.f32 %v2214, 0.0
        %v2301 = vmax.f32 %v2219, 0.0
        %v2302 = vmax.f32 %v2224, 0.0
        %v2303 = vmax.f32 %v2229, 0.0
        %v2304 = vmax.f32 %v2234, 0.0
        %v2305 = vmax.f32 %v2239, 0.0
        %v2306 = vmax.f32 %v2244, 0.0
        %v2307 = vmax.f32 %v2249, 0.0
        %v2308 = vmax.f32 %v2254, 0.0
        %v2309 = vmax.f32 %v2259, 0.0
        %v2310 = vmax.f32 %v2264, 0.0
        %v2311 = vmax.f32 %v2269, 0.0
        %v2312 = vmax.f32 %v2274, 0.0
        %v2313 = vmax.f32 %v2279, 0.0
        %v2314 = vmin.f32 %v2282, 1.0
        %v2315 = vmin.f32 %v2283, 1.0
        %v2316 = vmin.f32 %v2284, 1.0
        %v2317 = vmin.f32 %v2285, 1.0
        %v2318 = vmin.f32 %v2286, 1.0
        %v2319 = vmin.f32 %v2287, 1.0
        %v2320 = vmin.f32 %v2288, 1.0
        %v2321 = vmin.f32 %v2289, 1.0
        %v2322 = vmin.f32 %v2290, 1.0
        %v2323 = vmin.f32 %v2291, 1.0
        %v2324 = vmin.f32 %v2292, 1.0
        %v2325 = vmin.f32 %v2293, 1.0
        %v2326 = vmin.f32 %v2294, 1.0
        %v2327 = vmin.f32 %v2295, 1.0
        %v2328 = vmin.f32 %v2296, 1.0
        %v2329 = vmin.f32 %v2297, 1.0
        %v2330 = vmin.f32 %v2298, 1.0
        %v2331 = vmin.f32 %v2299, 1.0
        %v2332 = vmin.f32 %v2300, 1.0
        %v2333 = vmin.f32 %v2301, 1.0
        %v2334 = vmin.f32 %v2302, 1.0
        %v2335 = vmin.f32 %v2303, 1.0
        %v2336 = vmin.f32 %v2304, 1.0
        %v2337 = vmin.f32 %v2305, 1.0
        %v2338 = vmin.f32 %v2306, 1.0
        %v2339 = vmin.f32 %v2307, 1.0
        %v2340 = vmin.f32 %v2308, 1.0
        %v2341 = vmin.f32 %v2309, 1.0
        %v2342 = vmin.f32 %v2310, 1.0
        %v2343 = vmin.f32 %v2311, 1.0
        %v2344 = vmin.f32 %v2312, 1.0
        %v2345 = vmin.f32 %v2313, 1.0
        %v2346 = vadd.f32 %v2124, 1e-08
        %v2347 = vadd.f32 %v2129, 1e-08
        %v2348 = vadd.f32 %v2134, 1e-08
        %v2349 = vadd.f32 %v2139, 1e-08
        %v2350 = vadd.f32 %v2144, 1e-08
        %v2351 = vadd.f32 %v2149, 1e-08
        %v2352 = vadd.f32 %v2154, 1e-08
        %v2353 = vadd.f32 %v2159, 1e-08
        %v2354 = vadd.f32 %v2164, 1e-08
        %v2355 = vadd.f32 %v2169, 1e-08
        %v2356 = vadd.f32 %v2174, 1e-08
        %v2357 = vadd.f32 %v2179, 1e-08
        %v2358 = vadd.f32 %v2184, 1e-08
        %v2359 = vadd.f32 %v2189, 1e-08
        %v2360 = vadd.f32 %v2194, 1e-08
        %v2361 = vadd.f32 %v2199, 1e-08
        %v2362 = vadd.f32 %v2204, 1e-08
        %v2363 = vadd.f32 %v2209, 1e-08
        %v2364 = vadd.f32 %v2214, 1e-08
        %v2365 = vadd.f32 %v2219, 1e-08
        %v2366 = vadd.f32 %v2224, 1e-08
        %v2367 = vadd.f32 %v2229, 1e-08
        %v2368 = vadd.f32 %v2234, 1e-08
        %v2369 = vadd.f32 %v2239, 1e-08
        %v2370 = vadd.f32 %v2244, 1e-08
        %v2371 = vadd.f32 %v2249, 1e-08
        %v2372 = vadd.f32 %v2254, 1e-08
        %v2373 = vadd.f32 %v2259, 1e-08
        %v2374 = vadd.f32 %v2264, 1e-08
        %v2375 = vadd.f32 %v2269, 1e-08
        %v2376 = vadd.f32 %v2274, 1e-08
        %v2377 = vadd.f32 %v2279, 1e-08
        %v2378 = vrcp.pop %v2346
        %v2379 = vrcp.pop %v2347
        %v2380 = vrcp.pop %v2348
        %v2381 = vrcp.pop %v2349
        %v2382 = vrcp.pop %v2350
        %v2383 = vrcp.pop %v2351
        %v2384 = vrcp.pop %v2352
        %v2385 = vrcp.pop %v2353
        %v2386 = vrcp.pop %v2354
        %v2387 = vrcp.pop %v2355
        %v2388 = vrcp.pop %v2356
        %v2389 = vrcp.pop %v2357
        %v2390 = vrcp.pop %v2358
        %v2391 = vrcp.pop %v2359
        %v2392 = vrcp.pop %v2360
        %v2393 = vrcp.pop %v2361
        %v2394 = vrcp.pop %v2362
        %v2395 = vrcp.pop %v2363
        %v2396 = vrcp.pop %v2364
        %v2397 = vrcp.pop %v2365
        %v2398 = vrcp.pop %v2366
        %v2399 = vrcp.pop %v2367
        %v2400 = vrcp.pop %v2368
        %v2401 = vrcp.pop %v2369
        %v2402 = vrcp.pop %v2370
        %v2403 = vrcp.pop %v2371
        %v2404 = vrcp.pop %v2372
        %v2405 = vrcp.pop %v2373
        %v2406 = vrcp.pop %v2374
        %v2407 = vrcp.pop %v2375
        %v2408 = vrcp.pop %v2376
        %v2409 = vrcp.pop %v2377
        %v2410 = vmul.f32 %v2346, %v2378
        %v2411 = vmul.f32 %v2347, %v2379
        %v2412 = vmul.f32 %v2348, %v2380
        %v2413 = vmul.f32 %v2349, %v2381
        %v2414 = vmul.f32 %v2350, %v2382
        %v2415 = vmul.f32 %v2351, %v2383
        %v2416 = vmul.f32 %v2352, %v2384
        %v2417 = vmul.f32 %v2353, %v2385
        %v2418 = vmul.f32 %v2354, %v2386
        %v2419 = vmul.f32 %v2355, %v2387
        %v2420 = vmul.f32 %v2356, %v2388
        %v2421 = vmul.f32 %v2357, %v2389
        %v2422 = vmul.f32 %v2358, %v2390
        %v2423 = vmul.f32 %v2359, %v2391
        %v2424 = vmul.f32 %v2360, %v2392
        %v2425 = vmul.f32 %v2361, %v2393
        %v2426 = vmul.f32 %v2362, %v2394
        %v2427 = vmul.f32 %v2363, %v2395
        %v2428 = vmul.f32 %v2364, %v2396
        %v2429 = vmul.f32 %v2365, %v2397
        %v2430 = vmul.f32 %v2366, %v2398
        %v2431 = vmul.f32 %v2367, %v2399
        %v2432 = vmul.f32 %v2368, %v2400
        %v2433 = vmul.f32 %v2369, %v2401
        %v2434 = vmul.f32 %v2370, %v2402
        %v2435 = vmul.f32 %v2371, %v2403
        %v2436 = vmul.f32 %v2372, %v2404
        %v2437 = vmul.f32 %v2373, %v2405
        %v2438 = vmul.f32 %v2374, %v2406
        %v2439 = vmul.f32 %v2375, %v2407
        %v2440 = vmul.f32 %v2376, %v2408
        %v2441 = vmul.f32 %v2377, %v2409
        %v2442 = vsub.f32 2.0, %v2410
        %v2443 = vsub.f32 2.0, %v2411
        %v2444 = vsub.f32 2.0, %v2412
        %v2445 = vsub.f32 2.0, %v2413
        %v2446 = vsub.f32 2.0, %v2414
        %v2447 = vsub.f32 2.0, %v2415
        %v2448 = vsub.f32 2.0, %v2416
        %v2449 = vsub.f32 2.0, %v2417
        %v2450 = vsub.f32 2.0, %v2418
        %v2451 = vsub.f32 2.0, %v2419
        %v2452 = vsub.f32 2.0, %v2420
        %v2453 = vsub.f32 2.0, %v2421
        %v2454 = vsub.f32 2.0, %v2422
        %v2455 = vsub.f32 2.0, %v2423
        %v2456 = vsub.f32 2.0, %v2424
        %v2457 = vsub.f32 2.0, %v2425
        %v2458 = vsub.f32 2.0, %v2426
        %v2459 = vsub.f32 2.0, %v2427
        %v2460 = vsub.f32 2.0, %v2428
        %v2461 = vsub.f32 2.0, %v2429
        %v2462 = vsub.f32 2.0, %v2430
        %v2463 = vsub.f32 2.0, %v2431
        %v2464 = vsub.f32 2.0, %v2432
        %v2465 = vsub.f32 2.0, %v2433
        %v2466 = vsub.f32 2.0, %v2434
        %v2467 = vsub.f32 2.0, %v2435
        %v2468 = vsub.f32 2.0, %v2436
        %v2469 = vsub.f32 2.0, %v2437
        %v2470 = vsub.f32 2.0, %v2438
        %v2471 = vsub.f32 2.0, %v2439
        %v2472 = vsub.f32 2.0, %v2440
        %v2473 = vsub.f32 2.0, %v2441
        %v2474 = vmul.f32 %v2378, %v2442
        %v2475 = vmul.f32 %v2379, %v2443
        %v2476 = vmul.f32 %v2380, %v2444
        %v2477 = vmul.f32 %v2381, %v2445
        %v2478 = vmul.f32 %v2382, %v2446
        %v2479 = vmul.f32 %v2383, %v2447
        %v2480 = vmul.f32 %v2384, %v2448
        %v2481 = vmul.f32 %v2385, %v2449
        %v2482 = vmul.f32 %v2386, %v2450
        %v2483 = vmul.f32 %v2387, %v2451
        %v2484 = vmul.f32 %v2388, %v2452
        %v2485 = vmul.f32 %v2389, %v2453
        %v2486 = vmul.f32 %v2390, %v2454
        %v2487 = vmul.f32 %v2391, %v2455
        %v2488 = vmul.f32 %v2392, %v2456
        %v2489 = vmul.f32 %v2393, %v2457
        %v2490 = vmul.f32 %v2394, %v2458
        %v2491 = vmul.f32 %v2395, %v2459
        %v2492 = vmul.f32 %v2396, %v2460
        %v2493 = vmul.f32 %v2397, %v2461
        %v2494 = vmul.f32 %v2398, %v2462
        %v2495 = vmul.f32 %v2399, %v2463
        %v2496 = vmul.f32 %v2400, %v2464
        %v2497 = vmul.f32 %v2401, %v2465
        %v2498 = vmul.f32 %v2402, %v2466
        %v2499 = vmul.f32 %v2403, %v2467
        %v2500 = vmul.f32 %v2404, %v2468
        %v2501 = vmul.f32 %v2405, %v2469
        %v2502 = vmul.f32 %v2406, %v2470
        %v2503 = vmul.f32 %v2407, %v2471
        %v2504 = vmul.f32 %v2408, %v2472
        %v2505 = vmul.f32 %v2409, %v2473
        %v2506 = vmul.f32 %v2474, 108.0
        %v2507 = vmul.f32 %v2475, 108.0
        %v2508 = vmul.f32 %v2476, 108.0
        %v2509 = vmul.f32 %v2477, 108.0
        %v2510 = vmul.f32 %v2478, 108.0
        %v2511 = vmul.f32 %v2479, 108.0
        %v2512 = vmul.f32 %v2480, 108.0
        %v2513 = vmul.f32 %v2481, 108.0
        %v2514 = vmul.f32 %v2482, 108.0
        %v2515 = vmul.f32 %v2483, 108.0
        %v2516 = vmul.f32 %v2484, 108.0
        %v2517 = vmul.f32 %v2485, 108.0
        %v2518 = vmul.f32 %v2486, 108.0
        %v2519 = vmul.f32 %v2487, 108.0
        %v2520 = vmul.f32 %v2488, 108.0
        %v2521 = vmul.f32 %v2489, 108.0
        %v2522 = vmul.f32 %v2490, 108.0
        %v2523 = vmul.f32 %v2491, 108.0
        %v2524 = vmul.f32 %v2492, 108.0
        %v2525 = vmul.f32 %v2493, 108.0
        %v2526 = vmul.f32 %v2494, 108.0
        %v2527 = vmul.f32 %v2495, 108.0
        %v2528 = vmul.f32 %v2496, 108.0
        %v2529 = vmul.f32 %v2497, 108.0
        %v2530 = vmul.f32 %v2498, 108.0
        %v2531 = vmul.f32 %v2499, 108.0
        %v2532 = vmul.f32 %v2500, 108.0
        %v2533 = vmul.f32 %v2501, 108.0
        %v2534 = vmul.f32 %v2502, 108.0
        %v2535 = vmul.f32 %v2503, 108.0
        %v2536 = vmul.f32 %v2504, 108.0
        %v2537 = vmul.f32 %v2505, 108.0
        %v2538 = vmul.f32 %v2506, %v2314
        %v2539 = vmul.f32 %v2507, %v2315
        %v2540 = vmul.f32 %v2508, %v2316
        %v2541 = vmul.f32 %v2509, %v2317
        %v2542 = vmul.f32 %v2510, %v2318
        %v2543 = vmul.f32 %v2511, %v2319
        %v2544 = vmul.f32 %v2512, %v2320
        %v2545 = vmul.f32 %v2513, %v2321
        %v2546 = vmul.f32 %v2514, %v2322
        %v2547 = vmul.f32 %v2515, %v2323
        %v2548 = vmul.f32 %v2516, %v2324
        %v2549 = vmul.f32 %v2517, %v2325
        %v2550 = vmul.f32 %v2518, %v2326
        %v2551 = vmul.f32 %v2519, %v2327
        %v2552 = vmul.f32 %v2520, %v2328
        %v2553 = vmul.f32 %v2521, %v2329
        %v2554 = vmul.f32 %v2522, %v2330
        %v2555 = vmul.f32 %v2523, %v2331
        %v2556 = vmul.f32 %v2524, %v2332
        %v2557 = vmul.f32 %v2525, %v2333
        %v2558 = vmul.f32 %v2526, %v2334
        %v2559 = vmul.f32 %v2527, %v2335
        %v2560 = vmul.f32 %v2528, %v2336
        %v2561 = vmul.f32 %v2529, %v2337
        %v2562 = vmul.f32 %v2530, %v2338
        %v2563 = vmul.f32 %v2531, %v2339
        %v2564 = vmul.f32 %v2532, %v2340
        %v2565 = vmul.f32 %v2533, %v2341
        %v2566 = vmul.f32 %v2534, %v2342
        %v2567 = vmul.f32 %v2535, %v2343
        %v2568 = vmul.f32 %v2536, %v2344
        %v2569 = vmul.f32 %v2537, %v2345
        %v2570 = vmul.f32 %v1175, %v2538
        %v2571 = vmul.f32 %v1180, %v2539
        %v2572 = vmul.f32 %v1185, %v2540
        %v2573 = vmul.f32 %v1190, %v2541
        %v2574 = vmul.f32 %v1195, %v2542
        %v2575 = vmul.f32 %v1200, %v2543
        %v2576 = vmul.f32 %v1205, %v2544
        %v2577 = vmul.f32 %v1210, %v2545
        %v2578 = vmul.f32 %v1215, %v2546
        %v2579 = vmul.f32 %v1220, %v2547
        %v2580 = vmul.f32 %v1225, %v2548
        %v2581 = vmul.f32 %v1230, %v2549
        %v2582 = vmul.f32 %v1235, %v2550
        %v2583 = vmul.f32 %v1240, %v2551
        %v2584 = vmul.f32 %v1245, %v2552
        %v2585 = vmul.f32 %v1250, %v2553
        %v2586 = vmul.f32 %v1255, %v2554
        %v2587 = vmul.f32 %v1260, %v2555
        %v2588 = vmul.f32 %v1265, %v2556
        %v2589 = vmul.f32 %v1270, %v2557
        %v2590 = vmul.f32 %v1275, %v2558
        %v2591 = vmul.f32 %v1280, %v2559
        %v2592 = vmul.f32 %v1285, %v2560
        %v2593 = vmul.f32 %v1290, %v2561
        %v2594 = vmul.f32 %v1295, %v2562
        %v2595 = vmul.f32 %v1300, %v2563
        %v2596 = vmul.f32 %v1305, %v2564
        %v2597 = vmul.f32 %v1310, %v2565
        %v2598 = vmul.f32 %v1315, %v2566
        %v2599 = vmul.f32 %v1320, %v2567
        %v2600 = vmul.f32 %v1325, %v2568
        %v2601 = vmul.f32 %v1330, %v2569
        %v2602 = vld [vmem:[%s4] sm:$0xff]
        %v2603 = vld [vmem:[%s4 + $0x8] sm:$0xff]
        %v2604 = vld [vmem:[%s4 + $0x10] sm:$0xff]
        %v2605 = vld [vmem:[%s4 + $0x18] sm:$0xff]
        %v2606 = vld [vmem:[%s4 + $0x20] sm:$0xff]
        %v2607 = vld [vmem:[%s4 + $0x28] sm:$0xff]
        %v2608 = vld [vmem:[%s4 + $0x30] sm:$0xff]
        %v2609 = vld [vmem:[%s4 + $0x38] sm:$0xff]
        %v2610 = vld [vmem:[%s4 + $0x40] sm:$0xff]
        %v2611 = vld [vmem:[%s4 + $0x48] sm:$0xff]
        %v2612 = vld [vmem:[%s4 + $0x50] sm:$0xff]
        %v2613 = vld [vmem:[%s4 + $0x58] sm:$0xff]
        %v2614 = vld [vmem:[%s4 + $0x60] sm:$0xff]
        %v2615 = vld [vmem:[%s4 + $0x68] sm:$0xff]
        %v2616 = vld [vmem:[%s4 + $0x70] sm:$0xff]
        %v2617 = vld [vmem:[%s4 + $0x78] sm:$0xff]
        %v2618 = vmul.f32 %v2570, %v2570
        %v2619 = vmul.f32 %v2571, %v2571
        %v2620 = vmul.f32 %v2572, %v2572
        %v2621 = vmul.f32 %v2573, %v2573
        %v2622 = vmul.f32 %v2574, %v2574
        %v2623 = vmul.f32 %v2575, %v2575
        %v2624 = vmul.f32 %v2576, %v2576
        %v2625 = vmul.f32 %v2577, %v2577
        %v2626 = vmul.f32 %v2578, %v2578
        %v2627 = vmul.f32 %v2579, %v2579
        %v2628 = vmul.f32 %v2580, %v2580
        %v2629 = vmul.f32 %v2581, %v2581
        %v2630 = vmul.f32 %v2582, %v2582
        %v2631 = vmul.f32 %v2583, %v2583
        %v2632 = vmul.f32 %v2584, %v2584
        %v2633 = vmul.f32 %v2585, %v2585
        %v2634 = vmul.f32 %v2586, %v2586
        %v2635 = vmul.f32 %v2587, %v2587
        %v2636 = vmul.f32 %v2588, %v2588
        %v2637 = vmul.f32 %v2589, %v2589
        %v2638 = vmul.f32 %v2590, %v2590
        %v2639 = vmul.f32 %v2591, %v2591
        %v2640 = vmul.f32 %v2592, %v2592
        %v2641 = vmul.f32 %v2593, %v2593
        %v2642 = vmul.f32 %v2594, %v2594
        %v2643 = vmul.f32 %v2595, %v2595
        %v2644 = vmul.f32 %v2596, %v2596
        %v2645 = vmul.f32 %v2597, %v2597
        %v2646 = vmul.f32 %v2598, %v2598
        %v2647 = vmul.f32 %v2599, %v2599
        %v2648 = vmul.f32 %v2600, %v2600
        %v2649 = vmul.f32 %v2601, %v2601
        %v2650 = vadd.f32 %v2570, %v2571
        %v2651 = vadd.f32 %v2650, %v2572
        %v2652 = vadd.f32 %v2651, %v2573
        %v2653 = vadd.f32 %v2652, %v2574
        %v2654 = vadd.f32 %v2653, %v2575
        %v2655 = vadd.f32 %v2654, %v2576
        %v2656 = vadd.f32 %v2655, %v2577
        %v2657 = vadd.f32 %v2656, %v2578
        %v2658 = vadd.f32 %v2657, %v2579
        %v2659 = vadd.f32 %v2658, %v2580
        %v2660 = vadd.f32 %v2659, %v2581
        %v2661 = vadd.f32 %v2660, %v2582
        %v2662 = vadd.f32 %v2661, %v2583
        %v2663 = vadd.f32 %v2662, %v2584
        %v2664 = vadd.f32 %v2663, %v2585
        %v2665 = vadd.f32 %v2664, %v2586
        %v2666 = vadd.f32 %v2665, %v2587
        %v2667 = vadd.f32 %v2666, %v2588
        %v2668 = vadd.f32 %v2667, %v2589
        %v2669 = vadd.f32 %v2668, %v2590
        %v2670 = vadd.f32 %v2669, %v2591
        %v2671 = vadd.f32 %v2670, %v2592
        %v2672 = vadd.f32 %v2671, %v2593
        %v2673 = vadd.f32 %v2672, %v2594
        %v2674 = vadd.f32 %v2673, %v2595
        %v2675 = vadd.f32 %v2674, %v2596
        %v2676 = vadd.f32 %v2675, %v2597
        %v2677 = vadd.f32 %v2676, %v2598
        %v2678 = vadd.f32 %v2677, %v2599
        %v2679 = vadd.f32 %v2678, %v2600
        %v2680 = vadd.f32 %v2679, %v2601
        %v2681 = vadd.f32 %v2618, %v2619
        %v2682 = vadd.f32 %v2681, %v2620
        %v2683 = vadd.f32 %v2682, %v2621
        %v2684 = vadd.f32 %v2683, %v2622
        %v2685 = vadd.f32 %v2684, %v2623
        %v2686 = vadd.f32 %v2685, %v2624
        %v2687 = vadd.f32 %v2686, %v2625
        %v2688 = vadd.f32 %v2687, %v2626
        %v2689 = vadd.f32 %v2688, %v2627
        %v2690 = vadd.f32 %v2689, %v2628
        %v2691 = vadd.f32 %v2690, %v2629
        %v2692 = vadd.f32 %v2691, %v2630
        %v2693 = vadd.f32 %v2692, %v2631
        %v2694 = vadd.f32 %v2693, %v2632
        %v2695 = vadd.f32 %v2694, %v2633
        %v2696 = vadd.f32 %v2695, %v2634
        %v2697 = vadd.f32 %v2696, %v2635
        %v2698 = vadd.f32 %v2697, %v2636
        %v2699 = vadd.f32 %v2698, %v2637
        %v2700 = vadd.f32 %v2699, %v2638
        %v2701 = vadd.f32 %v2700, %v2639
        %v2702 = vadd.f32 %v2701, %v2640
        %v2703 = vadd.f32 %v2702, %v2641
        %v2704 = vadd.f32 %v2703, %v2642
        %v2705 = vadd.f32 %v2704, %v2643
        %v2706 = vadd.f32 %v2705, %v2644
        %v2707 = vadd.f32 %v2706, %v2645
        %v2708 = vadd.f32 %v2707, %v2646
        %v2709 = vadd.f32 %v2708, %v2647
        %v2710 = vadd.f32 %v2709, %v2648
        %v2711 = vadd.f32 %v2710, %v2649
        %2712 = vmatprep.subr.mxu0 0.0
        %2713 = vmatpush1.msra.mxu0 %v2602
        %2714 = vmatprep.subr.mxu0 0.0
        %2715 = vmatpush1.msra.mxu0 %v2603
        %2716 = vmatprep.subr.mxu0 0.0
        %2717 = vmatpush1.msra.mxu0 %v2604
        %2718 = vmatprep.subr.mxu0 0.0
        %2719 = vmatpush1.msra.mxu0 %v2605
        %2720 = vmatprep.subr.mxu0 0.0
        %2721 = vmatpush1.msra.mxu0 %v2606
        %2722 = vmatprep.subr.mxu0 0.0
        %2723 = vmatpush1.msra.mxu0 %v2607
        %2724 = vmatprep.subr.mxu0 0.0
        %2725 = vmatpush1.msra.mxu0 %v2608
        %2726 = vmatprep.subr.mxu0 0.0
        %2727 = vmatpush1.msra.mxu0 %v2609
        %2728 = vmatprep.subr.mxu0 0.0
        %2729 = vmatpush1.msra.mxu0 %v2610
        %2730 = vmatprep.subr.mxu0 0.0
        %2731 = vmatpush1.msra.mxu0 %v2611
        %2732 = vmatprep.subr.mxu0 0.0
        %2733 = vmatpush1.msra.mxu0 %v2612
        %2734 = vmatprep.subr.mxu0 0.0
        %2735 = vmatpush1.msra.mxu0 %v2613
        %2736 = vmatprep.subr.mxu0 0.0
        %2737 = vmatpush1.msra.mxu0 %v2614
        %2738 = vmatprep.subr.mxu0 0.0
        %2739 = vmatpush1.msra.mxu0 %v2615
        %2740 = vmatprep.subr.mxu0 0.0
        %2741 = vmatpush1.msra.mxu0 %v2616
        %2742 = vmatprep.subr.mxu0 0.0
        %2743 = vmatpush1.msra.mxu0 %v2617
        %2744 = vmatprep.subr.mxu0 0.0
        %2745 = vmatpush1.msra.mxu0 0.0
        %2746 = vmatprep.subr.mxu0 0.0
        %2747 = vmatpush1.msra.mxu0 0.0
        %2748 = vmatprep.subr.mxu0 0.0
        %2749 = vmatpush1.msra.mxu0 0.0
        %2750 = vmatprep.subr.mxu0 0.0
        %2751 = vmatpush1.msra.mxu0 0.0
        %2752 = vmatprep.subr.mxu0 0.0
        %2753 = vmatpush1.msra.mxu0 0.0
        %2754 = vmatprep.subr.mxu0 0.0
        %2755 = vmatpush1.msra.mxu0 0.0
        %2756 = vmatprep.subr.mxu0 0.0
        %2757 = vmatpush1.msra.mxu0 0.0
        %2758 = vmatprep.subr.mxu0 0.0
        %2759 = vmatpush1.msra.mxu0 0.0
        %2760 = vmatprep.subr.mxu0 0.0
        %2761 = vmatpush1.msra.mxu0 0.0
        %2762 = vmatprep.subr.mxu0 0.0
        %2763 = vmatpush1.msra.mxu0 0.0
        %2764 = vmatprep.subr.mxu0 0.0
        %2765 = vmatpush1.msra.mxu0 0.0
        %2766 = vmatprep.subr.mxu0 0.0
        %2767 = vmatpush1.msra.mxu0 0.0
        %2768 = vmatprep.subr.mxu0 0.0
        %2769 = vmatpush1.msra.mxu0 0.0
        %2770 = vmatprep.subr.mxu0 0.0
        %2771 = vmatpush1.msra.mxu0 0.0
        %2772 = vmatprep.subr.mxu0 0.0
        %2773 = vmatpush1.msra.mxu0 0.0
        %2774 = vmatprep.subr.mxu0 0.0
        %2775 = vmatpush1.msra.mxu0 0.0
        %2776 = vmatprep.mubr.f32.mxu0 0.0
        %2777 = vmatmul.mubr.f32.gmra.mrb[0].mxu0 %v2680
        %v2778 = vpop.f32.mrb[0].mxu0
        %v2779 = vadd.f32 0.0, %v2778
        %v2780 = vpop.f32.mrb[0].mxu0
        %2781 = vdwg.mxu0
        %v2782 = vrot.slane %v2779, 4
        %v2783 = vadd.f32 %v2779, %v2782
        %v2784 = vrot.slane %v2783, 2
        %v2785 = vadd.f32 %v2783, %v2784
        %v2786 = vrot.slane %v2785, 1
        %v2787 = vadd.f32 %v2785, %v2786
        %v2788 = vmul.f32 %v2787, 0.00024414063
        %2789 = vmatprep.subr.mxu0 0.0
        %2790 = vmatpush1.msra.mxu0 %v2602
        %2791 = vmatprep.subr.mxu0 0.0
        %2792 = vmatpush1.msra.mxu0 %v2603
        %2793 = vmatprep.subr.mxu0 0.0
        %2794 = vmatpush1.msra.mxu0 %v2604
        %2795 = vmatprep.subr.mxu0 0.0
        %2796 = vmatpush1.msra.mxu0 %v2605
        %2797 = vmatprep.subr.mxu0 0.0
        %2798 = vmatpush1.msra.mxu0 %v2606
        %2799 = vmatprep.subr.mxu0 0.0
        %2800 = vmatpush1.msra.mxu0 %v2607
        %2801 = vmatprep.subr.mxu0 0.0
        %2802 = vmatpush1.msra.mxu0 %v2608
        %2803 = vmatprep.subr.mxu0 0.0
        %2804 = vmatpush1.msra.mxu0 %v2609
        %2805 = vmatprep.subr.mxu0 0.0
        %2806 = vmatpush1.msra.mxu0 %v2610
        %2807 = vmatprep.subr.mxu0 0.0
        %2808 = vmatpush1.msra.mxu0 %v2611
        %2809 = vmatprep.subr.mxu0 0.0
        %2810 = vmatpush1.msra.mxu0 %v2612
        %2811 = vmatprep.subr.mxu0 0.0
        %2812 = vmatpush1.msra.mxu0 %v2613
        %2813 = vmatprep.subr.mxu0 0.0
        %2814 = vmatpush1.msra.mxu0 %v2614
        %2815 = vmatprep.subr.mxu0 0.0
        %2816 = vmatpush1.msra.mxu0 %v2615
        %2817 = vmatprep.subr.mxu0 0.0
        %2818 = vmatpush1.msra.mxu0 %v2616
        %2819 = vmatprep.subr.mxu0 0.0
        %2820 = vmatpush1.msra.mxu0 %v2617
        %2821 = vmatprep.subr.mxu0 0.0
        %2822 = vmatpush1.msra.mxu0 0.0
        %2823 = vmatprep.subr.mxu0 0.0
        %2824 = vmatpush1.msra.mxu0 0.0
        %2825 = vmatprep.subr.mxu0 0.0
        %2826 = vmatpush1.msra.mxu0 0.0
        %2827 = vmatprep.subr.mxu0 0.0
        %2828 = vmatpush1.msra.mxu0 0.0
        %2829 = vmatprep.subr.mxu0 0.0
        %2830 = vmatpush1.msra.mxu0 0.0
        %2831 = vmatprep.subr.mxu0 0.0
        %2832 = vmatpush1.msra.mxu0 0.0
        %2833 = vmatprep.subr.mxu0 0.0
        %2834 = vmatpush1.msra.mxu0 0.0
        %2835 = vmatprep.subr.mxu0 0.0
        %2836 = vmatpush1.msra.mxu0 0.0
        %2837 = vmatprep.subr.mxu0 0.0
        %2838 = vmatpush1.msra.mxu0 0.0
        %2839 = vmatprep.subr.mxu0 0.0
        %2840 = vmatpush1.msra.mxu0 0.0
        %2841 = vmatprep.subr.mxu0 0.0
        %2842 = vmatpush1.msra.mxu0 0.0
        %2843 = vmatprep.subr.mxu0 0.0
        %2844 = vmatpush1.msra.mxu0 0.0
        %2845 = vmatprep.subr.mxu0 0.0
        %2846 = vmatpush1.msra.mxu0 0.0
        %2847 = vmatprep.subr.mxu0 0.0
        %2848 = vmatpush1.msra.mxu0 0.0
        %2849 = vmatprep.subr.mxu0 0.0
        %2850 = vmatpush1.msra.mxu0 0.0
        %2851 = vmatprep.subr.mxu0 0.0
        %2852 = vmatpush1.msra.mxu0 0.0
        %2853 = vmatprep.mubr.f32.mxu0 0.0
        %2854 = vmatmul.mubr.f32.gmra.mrb[0].mxu0 %v2711
        %v2855 = vpop.f32.mrb[0].mxu0
        %v2856 = vadd.f32 0.0, %v2855
        %v2857 = vpop.f32.mrb[0].mxu0
        %2858 = vdwg.mxu0
        %v2859 = vrot.slane %v2856, 4
        %v2860 = vadd.f32 %v2856, %v2859
        %v2861 = vrot.slane %v2860, 2
        %v2862 = vadd.f32 %v2860, %v2861
        %v2863 = vrot.slane %v2862, 1
        %v2864 = vadd.f32 %v2862, %v2863
        %v2865 = vmul.f32 %v2864, 0.00024414063
        %v2866 = vmul.f32 %v2788, %v2788
        %v2867 = vsub.f32 %v2865, %v2866
        %v2868 = vsub.f32 %v2570, %v2788
        %v2869 = vsub.f32 %v2571, %v2788
        %v2870 = vsub.f32 %v2572, %v2788
        %v2871 = vsub.f32 %v2573, %v2788
        %v2872 = vsub.f32 %v2574, %v2788
        %v2873 = vsub.f32 %v2575, %v2788
        %v2874 = vsub.f32 %v2576, %v2788
        %v2875 = vsub.f32 %v2577, %v2788
        %v2876 = vsub.f32 %v2578, %v2788
        %v2877 = vsub.f32 %v2579, %v2788
        %v2878 = vsub.f32 %v2580, %v2788
        %v2879 = vsub.f32 %v2581, %v2788
        %v2880 = vsub.f32 %v2582, %v2788
        %v2881 = vsub.f32 %v2583, %v2788
        %v2882 = vsub.f32 %v2584, %v2788
        %v2883 = vsub.f32 %v2585, %v2788
        %v2884 = vsub.f32 %v2586, %v2788
        %v2885 = vsub.f32 %v2587, %v2788
        %v2886 = vsub.f32 %v2588, %v2788
        %v2887 = vsub.f32 %v2589, %v2788
        %v2888 = vsub.f32 %v2590, %v2788
        %v2889 = vsub.f32 %v2591, %v2788
        %v2890 = vsub.f32 %v2592, %v2788
        %v2891 = vsub.f32 %v2593, %v2788
        %v2892 = vsub.f32 %v2594, %v2788
        %v2893 = vsub.f32 %v2595, %v2788
        %v2894 = vsub.f32 %v2596, %v2788
        %v2895 = vsub.f32 %v2597, %v2788
        %v2896 = vsub.f32 %v2598, %v2788
        %v2897 = vsub.f32 %v2599, %v2788
        %v2898 = vsub.f32 %v2600, %v2788
        %v2899 = vsub.f32 %v2601, %v2788
        %v2900 = vadd.f32 %v2867, 1e-05
        %v2901 = vrsqrt.pop %v2900
        %v2902 = vmul.f32 %v2868, %v2901
        %v2903 = vmul.f32 %v2869, %v2901
        %v2904 = vmul.f32 %v2870, %v2901
        %v2905 = vmul.f32 %v2871, %v2901
        %v2906 = vmul.f32 %v2872, %v2901
        %v2907 = vmul.f32 %v2873, %v2901
        %v2908 = vmul.f32 %v2874, %v2901
        %v2909 = vmul.f32 %v2875, %v2901
        %v2910 = vmul.f32 %v2876, %v2901
        %v2911 = vmul.f32 %v2877, %v2901
        %v2912 = vmul.f32 %v2878, %v2901
        %v2913 = vmul.f32 %v2879, %v2901
        %v2914 = vmul.f32 %v2880, %v2901
        %v2915 = vmul.f32 %v2881, %v2901
        %v2916 = vmul.f32 %v2882, %v2901
        %v2917 = vmul.f32 %v2883, %v2901
        %v2918 = vmul.f32 %v2884, %v2901
        %v2919 = vmul.f32 %v2885, %v2901
        %v2920 = vmul.f32 %v2886, %v2901
        %v2921 = vmul.f32 %v2887, %v2901
        %v2922 = vmul.f32 %v2888, %v2901
        %v2923 = vmul.f32 %v2889, %v2901
        %v2924 = vmul.f32 %v2890, %v2901
        %v2925 = vmul.f32 %v2891, %v2901
        %v2926 = vmul.f32 %v2892, %v2901
        %v2927 = vmul.f32 %v2893, %v2901
        %v2928 = vmul.f32 %v2894, %v2901
        %v2929 = vmul.f32 %v2895, %v2901
        %v2930 = vmul.f32 %v2896, %v2901
        %v2931 = vmul.f32 %v2897, %v2901
        %v2932 = vmul.f32 %v2898, %v2901
        %v2933 = vmul.f32 %v2899, %v2901
        %v2934 = vmin.f32 %v2902, 20.0
        %v2935 = vmin.f32 %v2903, 20.0
        %v2936 = vmin.f32 %v2904, 20.0
        %v2937 = vmin.f32 %v2905, 20.0
        %v2938 = vmin.f32 %v2906, 20.0
        %v2939 = vmin.f32 %v2907, 20.0
        %v2940 = vmin.f32 %v2908, 20.0
        %v2941 = vmin.f32 %v2909, 20.0
        %v2942 = vmin.f32 %v2910, 20.0
        %v2943 = vmin.f32 %v2911, 20.0
        %v2944 = vmin.f32 %v2912, 20.0
        %v2945 = vmin.f32 %v2913, 20.0
        %v2946 = vmin.f32 %v2914, 20.0
        %v2947 = vmin.f32 %v2915, 20.0
        %v2948 = vmin.f32 %v2916, 20.0
        %v2949 = vmin.f32 %v2917, 20.0
        %v2950 = vmin.f32 %v2918, 20.0
        %v2951 = vmin.f32 %v2919, 20.0
        %v2952 = vmin.f32 %v2920, 20.0
        %v2953 = vmin.f32 %v2921, 20.0
        %v2954 = vmin.f32 %v2922, 20.0
        %v2955 = vmin.f32 %v2923, 20.0
        %v2956 = vmin.f32 %v2924, 20.0
        %v2957 = vmin.f32 %v2925, 20.0
        %v2958 = vmin.f32 %v2926, 20.0
        %v2959 = vmin.f32 %v2927, 20.0
        %v2960 = vmin.f32 %v2928, 20.0
        %v2961 = vmin.f32 %v2929, 20.0
        %v2962 = vmin.f32 %v2930, 20.0
        %v2963 = vmin.f32 %v2931, 20.0
        %v2964 = vmin.f32 %v2932, 20.0
        %v2965 = vmin.f32 %v2933, 20.0
        %v2966 = vmul.f32 %v2934, 1.442695
        %v2967 = vpow.pop %v2966
        %v2968 = vmul.f32 %v2935, 1.442695
        %v2969 = vpow.pop %v2968
        %v2970 = vmul.f32 %v2936, 1.442695
        %v2971 = vpow.pop %v2970
        %v2972 = vmul.f32 %v2937, 1.442695
        %v2973 = vpow.pop %v2972
        %v2974 = vmul.f32 %v2938, 1.442695
        %v2975 = vpow.pop %v2974
        %v2976 = vmul.f32 %v2939, 1.442695
        %v2977 = vpow.pop %v2976
        %v2978 = vmul.f32 %v2940, 1.442695
        %v2979 = vpow.pop %v2978
        %v2980 = vmul.f32 %v2941, 1.442695
        %v2981 = vpow.pop %v2980
        %v2982 = vmul.f32 %v2942, 1.442695
        %v2983 = vpow.pop %v2982
        %v2984 = vmul.f32 %v2943, 1.442695
        %v2985 = vpow.pop %v2984
        %v2986 = vmul.f32 %v2944, 1.442695
        %v2987 = vpow.pop %v2986
        %v2988 = vmul.f32 %v2945, 1.442695
        %v2989 = vpow.pop %v2988
        %v2990 = vmul.f32 %v2946, 1.442695
        %v2991 = vpow.pop %v2990
        %v2992 = vmul.f32 %v2947, 1.442695
        %v2993 = vpow.pop %v2992
        %v2994 = vmul.f32 %v2948, 1.442695
        %v2995 = vpow.pop %v2994
        %v2996 = vmul.f32 %v2949, 1.442695
        %v2997 = vpow.pop %v2996
        %v2998 = vmul.f32 %v2950, 1.442695
        %v2999 = vpow.pop %v2998
        %v3000 = vmul.f32 %v2951, 1.442695
        %v3001 = vpow.pop %v3000
        %v3002 = vmul.f32 %v2952, 1.442695
        %v3003 = vpow.pop %v3002
        %v3004 = vmul.f32 %v2953, 1.442695
        %v3005 = vpow.pop %v3004
        %v3006 = vmul.f32 %v2954, 1.442695
        %v3007 = vpow.pop %v3006
        %v3008 = vmul.f32 %v2955, 1.442695
        %v3009 = vpow.pop %v3008
        %v3010 = vmul.f32 %v2956, 1.442695
        %v3011 = vpow.pop %v3010
        %v3012 = vmul.f32 %v2957, 1.442695
        %v3013 = vpow.pop %v3012
        %v3014 = vmul.f32 %v2958, 1.442695
        %v3015 = vpow.pop %v3014
        %v3016 = vmul.f32 %v2959, 1.442695
        %v3017 = vpow.pop %v3016
        %v3018 = vmul.f32 %v2960, 1.442695
        %v3019 = vpow.pop %v3018
        %v3020 = vmul.f32 %v2961, 1.442695
        %v3021 = vpow.pop %v3020
        %v3022 = vmul.f32 %v2962, 1.442695
        %v3023 = vpow.pop %v3022
        %v3024 = vmul.f32 %v2963, 1.442695
        %v3025 = vpow.pop %v3024
        %v3026 = vmul.f32 %v2964, 1.442695
        %v3027 = vpow.pop %v3026
        %v3028 = vmul.f32 %v2965, 1.442695
        %v3029 = vpow.pop %v3028
        %v3030 = vmul.f32 %v2967, %v2967
        %v3031 = vmul.f32 %v2969, %v2969
        %v3032 = vmul.f32 %v2971, %v2971
        %v3033 = vmul.f32 %v2973, %v2973
        %v3034 = vmul.f32 %v2975, %v2975
        %v3035 = vmul.f32 %v2977, %v2977
        %v3036 = vmul.f32 %v2979, %v2979
        %v3037 = vmul.f32 %v2981, %v2981
        %v3038 = vmul.f32 %v2983, %v2983
        %v3039 = vmul.f32 %v2985, %v2985
        %v3040 = vmul.f32 %v2987, %v2987
        %v3041 = vmul.f32 %v2989, %v2989
        %v3042 = vmul.f32 %v2991, %v2991
        %v3043 = vmul.f32 %v2993, %v2993
        %v3044 = vmul.f32 %v2995, %v2995
        %v3045 = vmul.f32 %v2997, %v2997
        %v3046 = vmul.f32 %v2999, %v2999
        %v3047 = vmul.f32 %v3001, %v3001
        %v3048 = vmul.f32 %v3003, %v3003
        %v3049 = vmul.f32 %v3005, %v3005
        %v3050 = vmul.f32 %v3007, %v3007
        %v3051 = vmul.f32 %v3009, %v3009
        %v3052 = vmul.f32 %v3011, %v3011
        %v3053 = vmul.f32 %v3013, %v3013
        %v3054 = vmul.f32 %v3015, %v3015
        %v3055 = vmul.f32 %v3017, %v3017
        %v3056 = vmul.f32 %v3019, %v3019
        %v3057 = vmul.f32 %v3021, %v3021
        %v3058 = vmul.f32 %v3023, %v3023
        %v3059 = vmul.f32 %v3025, %v3025
        %v3060 = vmul.f32 %v3027, %v3027
        %v3061 = vmul.f32 %v3029, %v3029
        %v3062 = vmul.f32 %v2967, 2.0
        %v3063 = vmul.f32 %v2969, 2.0
        %v3064 = vmul.f32 %v2971, 2.0
        %v3065 = vmul.f32 %v2973, 2.0
        %v3066 = vmul.f32 %v2975, 2.0
        %v3067 = vmul.f32 %v2977, 2.0
        %v3068 = vmul.f32 %v2979, 2.0
        %v3069 = vmul.f32 %v2981, 2.0
        %v3070 = vmul.f32 %v2983, 2.0
        %v3071 = vmul.f32 %v2985, 2.0
        %v3072 = vmul.f32 %v2987, 2.0
        %v3073 = vmul.f32 %v2989, 2.0
        %v3074 = vmul.f32 %v2991, 2.0
        %v3075 = vmul.f32 %v2993, 2.0
        %v3076 = vmul.f32 %v2995, 2.0
        %v3077 = vmul.f32 %v2997, 2.0
        %v3078 = vmul.f32 %v2999, 2.0
        %v3079 = vmul.f32 %v3001, 2.0
        %v3080 = vmul.f32 %v3003, 2.0
        %v3081 = vmul.f32 %v3005, 2.0
        %v3082 = vmul.f32 %v3007, 2.0
        %v3083 = vmul.f32 %v3009, 2.0
        %v3084 = vmul.f32 %v3011, 2.0
        %v3085 = vmul.f32 %v3013, 2.0
        %v3086 = vmul.f32 %v3015, 2.0
        %v3087 = vmul.f32 %v3017, 2.0
        %v3088 = vmul.f32 %v3019, 2.0
        %v3089 = vmul.f32 %v3021, 2.0
        %v3090 = vmul.f32 %v3023, 2.0
        %v3091 = vmul.f32 %v3025, 2.0
        %v3092 = vmul.f32 %v3027, 2.0
        %v3093 = vmul.f32 %v3029, 2.0
        %v3094 = vadd.f32 %v3030, %v3062
        %v3095 = vadd.f32 %v3031, %v3063
        %v3096 = vadd.f32 %v3032, %v3064
        %v3097 = vadd.f32 %v3033, %v3065
        %v3098 = vadd.f32 %v3034, %v3066
        %v3099 = vadd.f32 %v3035, %v3067
        %v3100 = vadd.f32 %v3036, %v3068
        %v3101 = vadd.f32 %v3037, %v3069
        %v3102 = vadd.f32 %v3038, %v3070
        %v3103 = vadd.f32 %v3039, %v3071
        %v3104 = vadd.f32 %v3040, %v3072
        %v3105 = vadd.f32 %v3041, %v3073
        %v3106 = vadd.f32 %v3042, %v3074
        %v3107 = vadd.f32 %v3043, %v3075
        %v3108 = vadd.f32 %v3044, %v3076
        %v3109 = vadd.f32 %v3045, %v3077
        %v3110 = vadd.f32 %v3046, %v3078
        %v3111 = vadd.f32 %v3047, %v3079
        %v3112 = vadd.f32 %v3048, %v3080
        %v3113 = vadd.f32 %v3049, %v3081
        %v3114 = vadd.f32 %v3050, %v3082
        %v3115 = vadd.f32 %v3051, %v3083
        %v3116 = vadd.f32 %v3052, %v3084
        %v3117 = vadd.f32 %v3053, %v3085
        %v3118 = vadd.f32 %v3054, %v3086
        %v3119 = vadd.f32 %v3055, %v3087
        %v3120 = vadd.f32 %v3056, %v3088
        %v3121 = vadd.f32 %v3057, %v3089
        %v3122 = vadd.f32 %v3058, %v3090
        %v3123 = vadd.f32 %v3059, %v3091
        %v3124 = vadd.f32 %v3060, %v3092
        %v3125 = vadd.f32 %v3061, %v3093
        %v3126 = vadd.f32 %v3094, 2.0
        %v3127 = vadd.f32 %v3095, 2.0
        %v3128 = vadd.f32 %v3096, 2.0
        %v3129 = vadd.f32 %v3097, 2.0
        %v3130 = vadd.f32 %v3098, 2.0
        %v3131 = vadd.f32 %v3099, 2.0
        %v3132 = vadd.f32 %v3100, 2.0
        %v3133 = vadd.f32 %v3101, 2.0
        %v3134 = vadd.f32 %v3102, 2.0
        %v3135 = vadd.f32 %v3103, 2.0
        %v3136 = vadd.f32 %v3104, 2.0
        %v3137 = vadd.f32 %v3105, 2.0
        %v3138 = vadd.f32 %v3106, 2.0
        %v3139 = vadd.f32 %v3107, 2.0
        %v3140 = vadd.f32 %v3108, 2.0
        %v3141 = vadd.f32 %v3109, 2.0
        %v3142 = vadd.f32 %v3110, 2.0
        %v3143 = vadd.f32 %v3111, 2.0
        %v3144 = vadd.f32 %v3112, 2.0
        %v3145 = vadd.f32 %v3113, 2.0
        %v3146 = vadd.f32 %v3114, 2.0
        %v3147 = vadd.f32 %v3115, 2.0
        %v3148 = vadd.f32 %v3116, 2.0
        %v3149 = vadd.f32 %v3117, 2.0
        %v3150 = vadd.f32 %v3118, 2.0
        %v3151 = vadd.f32 %v3119, 2.0
        %v3152 = vadd.f32 %v3120, 2.0
        %v3153 = vadd.f32 %v3121, 2.0
        %v3154 = vadd.f32 %v3122, 2.0
        %v3155 = vadd.f32 %v3123, 2.0
        %v3156 = vadd.f32 %v3124, 2.0
        %v3157 = vadd.f32 %v3125, 2.0
        %v3158 = vrcp.pop %v3126
        %v3159 = vmul.f32 %v3094, %v3158
        %v3160 = vrcp.pop %v3127
        %v3161 = vmul.f32 %v3095, %v3160
        %v3162 = vrcp.pop %v3128
        %v3163 = vmul.f32 %v3096, %v3162
        %v3164 = vrcp.pop %v3129
        %v3165 = vmul.f32 %v3097, %v3164
        %v3166 = vrcp.pop %v3130
        %v3167 = vmul.f32 %v3098, %v3166
        %v3168 = vrcp.pop %v3131
        %v3169 = vmul.f32 %v3099, %v3168
        %v3170 = vrcp.pop %v3132
        %v3171 = vmul.f32 %v3100, %v3170
        %v3172 = vrcp.pop %v3133
        %v3173 = vmul.f32 %v3101, %v3172
        %v3174 = vrcp.pop %v3134
        %v3175 = vmul.f32 %v3102, %v3174
        %v3176 = vrcp.pop %v3135
        %v3177 = vmul.f32 %v3103, %v3176
        %v3178 = vrcp.pop %v3136
        %v3179 = vmul.f32 %v3104, %v3178
        %v3180 = vrcp.pop %v3137
        %v3181 = vmul.f32 %v3105, %v3180
        %v3182 = vrcp.pop %v3138
        %v3183 = vmul.f32 %v3106, %v3182
        %v3184 = vrcp.pop %v3139
        %v3185 = vmul.f32 %v3107, %v3184
        %v3186 = vrcp.pop %v3140
        %v3187 = vmul.f32 %v3108, %v3186
        %v3188 = vrcp.pop %v3141
        %v3189 = vmul.f32 %v3109, %v3188
        %v3190 = vrcp.pop %v3142
        %v3191 = vmul.f32 %v3110, %v3190
        %v3192 = vrcp.pop %v3143
        %v3193 = vmul.f32 %v3111, %v3192
        %v3194 = vrcp.pop %v3144
        %v3195 = vmul.f32 %v3112, %v3194
        %v3196 = vrcp.pop %v3145
        %v3197 = vmul.f32 %v3113, %v3196
        %v3198 = vrcp.pop %v3146
        %v3199 = vmul.f32 %v3114, %v3198
        %v3200 = vrcp.pop %v3147
        %v3201 = vmul.f32 %v3115, %v3200
        %v3202 = vrcp.pop %v3148
        %v3203 = vmul.f32 %v3116, %v3202
        %v3204 = vrcp.pop %v3149
        %v3205 = vmul.f32 %v3117, %v3204
        %v3206 = vrcp.pop %v3150
        %v3207 = vmul.f32 %v3118, %v3206
        %v3208 = vrcp.pop %v3151
        %v3209 = vmul.f32 %v3119, %v3208
        %v3210 = vrcp.pop %v3152
        %v3211 = vmul.f32 %v3120, %v3210
        %v3212 = vrcp.pop %v3153
        %v3213 = vmul.f32 %v3121, %v3212
        %v3214 = vrcp.pop %v3154
        %v3215 = vmul.f32 %v3122, %v3214
        %v3216 = vrcp.pop %v3155
        %v3217 = vmul.f32 %v3123, %v3216
        %v3218 = vrcp.pop %v3156
        %v3219 = vmul.f32 %v3124, %v3218
        %v3220 = vrcp.pop %v3157
        %v3221 = vmul.f32 %v3125, %v3220
        %v3222 = vmul.f32 %v2902, %v3159
        %v3223 = vmul.f32 %v2903, %v3161
        %v3224 = vmul.f32 %v2904, %v3163
        %v3225 = vmul.f32 %v2905, %v3165
        %v3226 = vmul.f32 %v2906, %v3167
        %v3227 = vmul.f32 %v2907, %v3169
        %v3228 = vmul.f32 %v2908, %v3171
        %v3229 = vmul.f32 %v2909, %v3173
        %v3230 = vmul.f32 %v2910, %v3175
        %v3231 = vmul.f32 %v2911, %v3177
        %v3232 = vmul.f32 %v2912, %v3179
        %v3233 = vmul.f32 %v2913, %v3181
        %v3234 = vmul.f32 %v2914, %v3183
        %v3235 = vmul.f32 %v2915, %v3185
        %v3236 = vmul.f32 %v2916, %v3187
        %v3237 = vmul.f32 %v2917, %v3189
        %v3238 = vmul.f32 %v2918, %v3191
        %v3239 = vmul.f32 %v2919, %v3193
        %v3240 = vmul.f32 %v2920, %v3195
        %v3241 = vmul.f32 %v2921, %v3197
        %v3242 = vmul.f32 %v2922, %v3199
        %v3243 = vmul.f32 %v2923, %v3201
        %v3244 = vmul.f32 %v2924, %v3203
        %v3245 = vmul.f32 %v2925, %v3205
        %v3246 = vmul.f32 %v2926, %v3207
        %v3247 = vmul.f32 %v2927, %v3209
        %v3248 = vmul.f32 %v2928, %v3211
        %v3249 = vmul.f32 %v2929, %v3213
        %v3250 = vmul.f32 %v2930, %v3215
        %v3251 = vmul.f32 %v2931, %v3217
        %v3252 = vmul.f32 %v2932, %v3219
        %v3253 = vmul.f32 %v2933, %v3221
        %3254 = vst [vmem:[%s266] sm:$0xff] %v3222
        %3255 = vst [vmem:[%s266 + $0x8] sm:$0xff] %v3223
        %3256 = vst [vmem:[%s266 + $0x10] sm:$0xff] %v3224
        %3257 = vst [vmem:[%s266 + $0x18] sm:$0xff] %v3225
        %3258 = vst [vmem:[%s266 + $0x20] sm:$0xff] %v3226
        %3259 = vst [vmem:[%s266 + $0x28] sm:$0xff] %v3227
        %3260 = vst [vmem:[%s266 + $0x30] sm:$0xff] %v3228
        %3261 = vst [vmem:[%s266 + $0x38] sm:$0xff] %v3229
        %3262 = vst [vmem:[%s266 + $0x40] sm:$0xff] %v3230
        %3263 = vst [vmem:[%s266 + $0x48] sm:$0xff] %v3231
        %3264 = vst [vmem:[%s266 + $0x50] sm:$0xff] %v3232
        %3265 = vst [vmem:[%s266 + $0x58] sm:$0xff] %v3233
        %3266 = vst [vmem:[%s266 + $0x60] sm:$0xff] %v3234
        %3267 = vst [vmem:[%s266 + $0x68] sm:$0xff] %v3235
        %3268 = vst [vmem:[%s266 + $0x70] sm:$0xff] %v3236
        %3269 = vst [vmem:[%s266 + $0x78] sm:$0xff] %v3237
        %3270 = vst [vmem:[%s266 + $0x80] sm:$0xff] %v3238
        %3271 = vst [vmem:[%s266 + $0x88] sm:$0xff] %v3239
        %3272 = vst [vmem:[%s266 + $0x90] sm:$0xff] %v3240
        %3273 = vst [vmem:[%s266 + $0x98] sm:$0xff] %v3241
        %3274 = vst [vmem:[%s266 + $0xa0] sm:$0xff] %v3242
        %3275 = vst [vmem:[%s266 + $0xa8] sm:$0xff] %v3243
        %3276 = vst [vmem:[%s266 + $0xb0] sm:$0xff] %v3244
        %3277 = vst [vmem:[%s266 + $0xb8] sm:$0xff] %v3245
        %3278 = vst [vmem:[%s266 + $0xc0] sm:$0xff] %v3246
        %3279 = vst [vmem:[%s266 + $0xc8] sm:$0xff] %v3247
        %3280 = vst [vmem:[%s266 + $0xd0] sm:$0xff] %v3248
        %3281 = vst [vmem:[%s266 + $0xd8] sm:$0xff] %v3249
        %3282 = vst [vmem:[%s266 + $0xe0] sm:$0xff] %v3250
        %3283 = vst [vmem:[%s266 + $0xe8] sm:$0xff] %v3251
        %3284 = vst [vmem:[%s266 + $0xf0] sm:$0xff] %v3252
        %3285 = vst [vmem:[%s266 + $0xf8] sm:$0xff] %v3253
        %3286 = vst [vmem:[%s273] sm:$0xff] %v2314
        %3287 = vst [vmem:[%s273 + $0x8] sm:$0xff] %v2315
        %3288 = vst [vmem:[%s273 + $0x10] sm:$0xff] %v2316
        %3289 = vst [vmem:[%s273 + $0x18] sm:$0xff] %v2317
        %3290 = vst [vmem:[%s273 + $0x20] sm:$0xff] %v2318
        %3291 = vst [vmem:[%s273 + $0x28] sm:$0xff] %v2319
        %3292 = vst [vmem:[%s273 + $0x30] sm:$0xff] %v2320
        %3293 = vst [vmem:[%s273 + $0x38] sm:$0xff] %v2321
        %3294 = vst [vmem:[%s273 + $0x40] sm:$0xff] %v2322
        %3295 = vst [vmem:[%s273 + $0x48] sm:$0xff] %v2323
        %3296 = vst [vmem:[%s273 + $0x50] sm:$0xff] %v2324
        %3297 = vst [vmem:[%s273 + $0x58] sm:$0xff] %v2325
        %3298 = vst [vmem:[%s273 + $0x60] sm:$0xff] %v2326
        %3299 = vst [vmem:[%s273 + $0x68] sm:$0xff] %v2327
        %3300 = vst [vmem:[%s273 + $0x70] sm:$0xff] %v2328
        %3301 = vst [vmem:[%s273 + $0x78] sm:$0xff] %v2329
        %3302 = vst [vmem:[%s273 + $0x80] sm:$0xff] %v2330
        %3303 = vst [vmem:[%s273 + $0x88] sm:$0xff] %v2331
        %3304 = vst [vmem:[%s273 + $0x90] sm:$0xff] %v2332
        %3305 = vst [vmem:[%s273 + $0x98] sm:$0xff] %v2333
        %3306 = vst [vmem:[%s273 + $0xa0] sm:$0xff] %v2334
        %3307 = vst [vmem:[%s273 + $0xa8] sm:$0xff] %v2335
        %3308 = vst [vmem:[%s273 + $0xb0] sm:$0xff] %v2336
        %3309 = vst [vmem:[%s273 + $0xb8] sm:$0xff] %v2337
        %3310 = vst [vmem:[%s273 + $0xc0] sm:$0xff] %v2338
        %3311 = vst [vmem:[%s273 + $0xc8] sm:$0xff] %v2339
        %3312 = vst [vmem:[%s273 + $0xd0] sm:$0xff] %v2340
        %3313 = vst [vmem:[%s273 + $0xd8] sm:$0xff] %v2341
        %3314 = vst [vmem:[%s273 + $0xe0] sm:$0xff] %v2342
        %3315 = vst [vmem:[%s273 + $0xe8] sm:$0xff] %v2343
        %3316 = vst [vmem:[%s273 + $0xf0] sm:$0xff] %v2344
        %3317 = vst [vmem:[%s273 + $0xf8] sm:$0xff] %v2345
        %s3318 = sand.u32 %s147, 1
        %s3319 = scalar_lea.sflag [#allocation3], %s3318
        %s3320 = sand.u32 %s147, 1
        %s3321 = smul.addr %s3320, 256
        %s3322 = scalar_lea.vmem [#allocation2], %s3321
        %s3323 = sand.u32 %s173, 1
        %s3324 = scalar_lea.sflag [#allocation5], %s3323
        %s3325 = sand.u32 %s173, 1
        %s3326 = smul.addr %s3325, 256
        %s3327 = scalar_lea.vmem [#allocation4], %s3326
        // Predicated region
        $region41: #{tpu_custom_call.1} parent=39 // pred_check
          %p3328 = pneg %p157
        $region42: #{tpu_custom_call.1} parent=39 // pred_check_branch
          %3330 = sbr.rel (%p3328) target = $region44
        $region43: #{tpu_custom_call.1} parent=39 // pred_region
          %s3331 = smul.u32 32, %s24
          %s3333 = ssub.s32 4096, 4096
          %3334 = vsyncadd %s3319, %s3333
          %s3335 = smul.addr %s3331, 128
          %s3336 = scalar_lea.hbm %s5, %s3335
          %s3337 = sshll.u32 %s3322, 4
          %s3338 = int_to_ptr.vmem [resolvable:$true] %s3337
          %3343 = dma.vmem_to_hbm [thread:$0]  %s3338, 4096, %s3336, %s3319, 128, 128, 8
        $region44: #{tpu_custom_call.1} parent=39 // pred_fallthru
          _
        // Predicated region
        $region45: #{tpu_custom_call.1} parent=39 // pred_check
          %p3344 = pneg %p183
        $region46: #{tpu_custom_call.1} parent=39 // pred_check_branch
          %3346 = sbr.rel (%p3344) target = $region48
        $region47: #{tpu_custom_call.1} parent=39 // pred_region
          %s3347 = smul.u32 32, %s24
          %s3349 = ssub.s32 4096, 4096
          %3350 = vsyncadd %s3324, %s3349
          %s3351 = smul.addr %s3347, 128
          %s3352 = scalar_lea.hbm %s6, %s3351
          %s3353 = sshll.u32 %s3327, 4
          %s3354 = int_to_ptr.vmem [resolvable:$true] %s3353
          %3359 = dma.vmem_to_hbm [thread:$0]  %s3354, 4096, %s3352, %s3324, 128, 128, 8
        $region48: #{tpu_custom_call.1} parent=39 // pred_fallthru
          _
      $region40: #{tpu_custom_call.1} parent=5 // pred_fallthru
        _
      %p3360 = scmp.le.s32.totalorder 2, %s19
      // Predicated region
      $region49: #{tpu_custom_call.1} parent=5 // pred_check
        %p3361 = pneg %p3360
      $region50: #{tpu_custom_call.1} parent=5 // pred_check_branch
        %3363 = sbr.rel (%p3361) target = $region52
      $region51: #{tpu_custom_call.1} parent=5 // pred_region
        %s3364 = ssub.s32 %s19, 2
        // Predicated region
        $region53: #{tpu_custom_call.1} parent=51 // pred_check
          %p3365 = pneg %p163
        $region54: #{tpu_custom_call.1} parent=51 // pred_check_branch
          %3367 = sbr.rel (%p3365) target = $region56
        $region55: #{tpu_custom_call.1} parent=51 // pred_region
          %s3368 = sand.u32 %s148, 1
          %s3369 = scalar_lea.sflag [#allocation3], %s3368
          %s3370 = sand.u32 %s148, 1
          %s3371 = smul.addr %s3370, 256
          %s3372 = scalar_lea.vmem [#allocation2], %s3371
          %3373 = dma.done %s3369, 4096
        $region56: #{tpu_custom_call.1} parent=51 // pred_fallthru
          _
        // Predicated region
        $region57: #{tpu_custom_call.1} parent=51 // pred_check
          %p3374 = pneg %p189
        $region58: #{tpu_custom_call.1} parent=51 // pred_check_branch
          %3376 = sbr.rel (%p3374) target = $region60
        $region59: #{tpu_custom_call.1} parent=51 // pred_region
          %s3377 = sand.u32 %s174, 1
          %s3378 = scalar_lea.sflag [#allocation5], %s3377
          %s3379 = sand.u32 %s174, 1
          %s3380 = smul.addr %s3379, 256
          %s3381 = scalar_lea.vmem [#allocation4], %s3380
          %3382 = dma.done %s3378, 4096
        $region60: #{tpu_custom_call.1} parent=51 // pred_fallthru
          _
      $region52: #{tpu_custom_call.1} parent=5 // pred_fallthru
        _
    $region6: #{tpu_custom_call.1} parent=1 // loop_footer
      %s23 = sadd.s32 1, %s19
    $region7: #{tpu_custom_call.1} parent=1 // loop_footer_branch
      %18 = sbr.rel target = $region3
    $region8: #{tpu_custom_call.1} parent=1 // loop_exit
      _
    %3383 = vsyncpa [#allocation3], 1
    %s3384 = scalar_lea.sflag [#allocation3], 1
    %3385 = vsyncpa %s3384, 1
    %3386 = vsyncpa [#allocation5], 1
    %s3387 = scalar_lea.sflag [#allocation5], 1
    %3388 = vsyncpa %s3387, 1

</llo_original>
